<compile_context>
chip_gen: v7x
topology: tpu7x:2x2x1
jax: 0.10.0
libtpu: 0.0.40
codegen_flags: <defaults>
</compile_context>

<pallas_src>
import jax
import jax.numpy as jnp
import numpy as np
from jax.experimental import pallas as pl
from jax.experimental.pallas import tpu as pltpu

# ------------------------------ configuration -------------------------------
IN_DIM = 32      # in_dim (256 in the original; scaled for the demo)
HIDDEN = 8       # hidden_dim (10 in the original; multiple-of-8 friendly)
CLS_P = 7
CLS_H = 3
CLS_F = 2
N, H, W = 2, 8, 8
M = N * H * W                  # tokens (pixels)
TM = 64                        # token tile -> grid=(2,), both TCs get work
BN_EPS = 1e-5

# packed input slab channel offsets: [ xp(7H) | xh(3H) | xf(2H) | p | h | f ]
OXP = 0
OXH = CLS_P * HIDDEN
OXF = OXH + CLS_H * HIDDEN
OPF = OXF + CLS_F * HIDDEN
OHF = OPF + IN_DIM
OFF = OHF + IN_DIM
C_IN = OFF + IN_DIM                                   # 192 at demo scale
# packed output slab: [ xp_new(7H) | xh_new(3H) | xf_new(2H) | xfh(3H) | xhp(7H) ]
C_OUT = (2 * CLS_P + 2 * CLS_H + CLS_F) * HIDDEN      # 176 at demo scale


# ----------------------------- fused Pallas kernel ---------------------------
def _gnn_kernel(x_ref,
                w_fi1, b_fi1, w_fi2, b_fi2,
                w_fu_f, w_fu_x, b_fu,
                w_fd1_h, w_fd1_x, b_fd1, w_fd2, b_fd2,
                w_hu1, b_hu1, w_hu2, b_hu2,
                w_hl1, b_hl1, w_hl2, b_hl2,
                w_hm_h, w_hm_u, w_hm_l, b_hm,
                w_hd1_p, w_hd1_h, b_hd1, w_hd2, b_hd2,
                w_pu_p, w_pu_x, b_pu,
                o_ref):
    hdn = HIDDEN
    x = x_ref[...]                                    # (TM, C_IN) f32

    def fused(shift_ref, *pairs):
        """relu( sum_i a_i @ w_i + shift ) == conv1x1 (over a concat) + folded BN + ReLU."""
        acc = None
        for a, w_r in pairs:
            d = jnp.dot(a, w_r[...], preferred_element_type=jnp.float32)
            acc = d if acc is None else acc + d
        return jnp.maximum(acc + shift_ref[...], 0.0)

    # static channel views of the packed input slab (sum-of-dots -> no concats)
    xp_all = x[:, OXP + hdn:OXP + CLS_P * hdn]        # xp[1..6]      (6H)
    xp_u = x[:, OXP + 1 * hdn:OXP + 5 * hdn]          # xp[1..4]      (4H)
    xp_l = x[:, OXP + 5 * hdn:OXP + 7 * hdn]          # xp[5..6]      (2H)
    xh1 = x[:, OXH + 1 * hdn:OXH + 2 * hdn]
    xh2 = x[:, OXH + 2 * hdn:OXH + 3 * hdn]
    xh12 = x[:, OXH + 1 * hdn:OXH + 3 * hdn]          # cat(xh1,xh2)  (2H)
    xf1 = x[:, OXF + 1 * hdn:OXF + 2 * hdn]
    p_fea = x[:, OPF:OPF + IN_DIM]
    h_fea = x[:, OHF:OHF + IN_DIM]
    f_fea = x[:, OFF:OFF + IN_DIM]

    # --- Full_Graph: xf_new = conv_hf(cat(xh1, xh2)) + xf1 ---
    xhf = fused(b_fi2, (fused(b_fi1, (xh12, w_fi1)), w_fi2))
    xf_new = xhf + xf1

    # --- full_update(cat(f_fea, xf_new)) -> (TM, 2H) ---
    fu = fused(b_fu, (f_fea, w_fu_f), (xf_new, w_fu_x))

    # --- full_decomp(cat(h_fea, xf1)) -> (TM, 3H) ---
    fd = fused(b_fd2, (fused(b_fd1, (h_fea, w_fd1_h), (xf1, w_fd1_x)), w_fd2))
    xfh1 = fd[:, 1 * hdn:2 * hdn]
    xfh2 = fd[:, 2 * hdn:3 * hdn]

    # --- Half_upper_Graph / Half_lower_Graph (conv + fused residual adds) ---
    xph_u = fused(b_hu2, (fused(b_hu1, (xp_u, w_hu1)), w_hu2))
    xhu_new = xh1 + xph_u + xfh1
    xph_l = fused(b_hl2, (fused(b_hl1, (xp_l, w_hl1)), w_hl2))
    xhl_new = xh2 + xph_l + xfh2

    # --- half_update(cat(h_fea, xhu_new, xhl_new)) -> (TM, 3H) ---
    hu = fused(b_hm, (h_fea, w_hm_h), (xhu_new, w_hm_u), (xhl_new, w_hm_l))

    # --- half_decomp(cat(p_fea, xh1, xh2)) -> (TM, 7H) ---
    hdc = fused(b_hd2, (fused(b_hd1, (p_fea, w_hd1_p), (xh12, w_hd1_h)), w_hd2))

    # --- Part_Graph residual + part_update -> (TM, 7H) ---
    xp_new = xp_all + hdc[:, hdn:CLS_P * hdn]
    pu = fused(b_pu, (p_fea, w_pu_p), (xp_new, w_pu_x))

    # one lane-dense store of all outputs
    o_ref[...] = jnp.concatenate([pu, hu, fu, fd, hdc], axis=1).astype(o_ref.dtype)


# ----------------------------- parameters ------------------------------------
def _fold_conv_bn(key, cin, cout):
    """Deterministic Conv2d(1x1,bias=False)+BN(inference). Returns the (cin,cout)
    weight with the BN scale folded in, plus a (1,cout) shift."""
    kw, kg, kb, km, kv = jax.random.split(key, 5)
    w = jax.random.normal(kw, (cout, cin), jnp.float32) / jnp.sqrt(float(cin))
    gamma = jax.random.uniform(kg, (cout,), jnp.float32, 0.5, 1.5)
    beta = jax.random.normal(kb, (cout,), jnp.float32) * 0.1
    mean = jax.random.normal(km, (cout,), jnp.float32) * 0.1
    var = jax.random.uniform(kv, (cout,), jnp.float32, 0.5, 1.5)
    scale = gamma / jnp.sqrt(var + BN_EPS)
    shift = beta - mean * scale
    return (w * scale[:, None]).T, shift.reshape(1, cout)   # scale folded into W


def _layer_defs():
    """(name, [cin piece sizes matching the torch.cat pieces], cout), in the exact
    order the kernel arguments expect."""
    h, d = HIDDEN, IN_DIM
    return [
        ("full_infer_1", [2 * h], 2 * h),
        ("full_infer_2", [2 * h], h),
        ("full_update", [d, h], CLS_F * h),
        ("full_decomp_1", [d, h], CLS_H * h),
        ("full_decomp_2", [CLS_H * h], CLS_H * h),
        ("half_upper_1", [4 * h], 2 * h),
        ("half_upper_2", [2 * h], h),
        ("half_lower_1", [2 * h], 2 * h),
        ("half_lower_2", [2 * h], h),
        ("half_update", [d, h, h], CLS_H * h),
        ("half_decomp_1", [d, 2 * h], CLS_P * h),
        ("half_decomp_2", [CLS_P * h], CLS_P * h),
        ("part_update", [d, (CLS_P - 1) * h], CLS_P * h),
    ]


def init_params(key):
    """Flat ordered list: for every layer, its cin-split weight pieces, then its shift."""
    defs = _layer_defs()
    keys = jax.random.split(key, len(defs))
    flat = []
    for k, (_, cin_pieces, cout) in zip(keys, defs):
        w, b = _fold_conv_bn(k, sum(cin_pieces), cout)
        offs = np.cumsum([0] + list(cin_pieces))
        flat.extend(w[int(offs[i]):int(offs[i + 1])] for i in range(len(cin_pieces)))
        flat.append(b)
    return flat


# ----------------------------- wrappers ---------------------------------------
def _fused_gnn_call(x_tok, flat_params, tm=TM):
    m = x_tok.shape[0]
    assert m % tm == 0, (m, tm)
    param_specs = [pl.BlockSpec(p.shape, lambda i: (0, 0)) for p in flat_params]
    return pl.pallas_call(
        _gnn_kernel,
        out_shape=jax.ShapeDtypeStruct((m, C_OUT), jnp.float32),
        grid_spec=pl.GridSpec(
            grid=(m // tm,),
            in_specs=[pl.BlockSpec((tm, C_IN), lambda i: (i, 0))] + param_specs,
            out_specs=pl.BlockSpec((tm, C_OUT), lambda i: (i, 0)),
        ),
        compiler_params=pltpu.CompilerParams(
            dimension_semantics=("parallel",)),
    )(x_tok, *flat_params)


@jax.jit
def gnn_forward_packed(flat_params, xp_list, xh_list, xf_list, p_fea, h_fea, f_fea):
    """Pack all NCHW inputs with ONE concat + ONE transpose, run the fused kernel,
    return the packed token-major (M, C_OUT) output slab."""
    packed = jnp.concatenate(
        list(xp_list) + list(xh_list) + list(xf_list) + [p_fea, h_fea, f_fea],
        axis=1)                                            # (N, C_IN, H, W)
    x_tok = jnp.transpose(packed, (0, 2, 3, 1)).reshape(-1, C_IN)
    return _fused_gnn_call(x_tok, flat_params)


def gnn_forward(flat_params, xp_list, xh_list, xf_list, p_fea, h_fea, f_fea):
    """Full forward returning the same structure as the PyTorch module."""
    out_tok = gnn_forward_packed(flat_params, xp_list, xh_list, xf_list,
                                 p_fea, h_fea, f_fea)
    n, hh, ww = p_fea.shape[0], p_fea.shape[2], p_fea.shape[3]
    out_nchw = jnp.transpose(out_tok.reshape(n, hh, ww, C_OUT), (0, 3, 1, 2))
    chunks = [out_nchw[:, i * HIDDEN:(i + 1) * HIDDEN]
              for i in range(C_OUT // HIDDEN)]
    xp_new = tuple(chunks[0:CLS_P])
    xh_new = tuple(chunks[CLS_P:CLS_P + CLS_H])
    xf_new = tuple(chunks[CLS_P + CLS_H:CLS_P + CLS_H + CLS_F])
    base = CLS_P + CLS_H + CLS_F
    xfh = tuple(chunks[base:base + CLS_H])
    xhp = tuple(chunks[base + CLS_H:base + CLS_H + CLS_P])
    return xp_new, xh_new, xf_new, xfh, xhp


# ----------------------------- pure-jnp reference -----------------------------
def gnn_reference_packed(flat_params, xp_list, xh_list, xf_list, p_fea, h_fea, f_fea):
    """Pure-jnp reference mirroring the PyTorch graph (explicit concats + full
    weights), used only to validate the fused kernel."""
    tok = lambda t: jnp.transpose(t, (0, 2, 3, 1)).reshape(-1, t.shape[1])
    xp = [tok(t) for t in xp_list]
    xh = [tok(t) for t in xh_list]
    xf = [tok(t) for t in xf_list]
    pf, hf, ff = tok(p_fea), tok(h_fea), tok(f_fea)

    it = iter(flat_params)
    L = {}
    for name, cin_pieces, _ in _layer_defs():
        ws = [next(it) for _ in range(len(cin_pieces))]
        b = next(it)
        w = jnp.concatenate(ws, axis=0)
        L[name] = lambda *xs, w=w, b=b: jnp.maximum(
            jnp.dot(jnp.concatenate(xs, axis=1), w,
                    precision=jax.lax.Precision.HIGHEST) + b, 0.0)

    xf_new = L["full_infer_2"](L["full_infer_1"](xh[1], xh[2])) + xf[1]
    fu = L["full_update"](ff, xf_new)
    fd = L["full_decomp_2"](L["full_decomp_1"](hf, xf[1]))
    xfh = [fd[:, i * HIDDEN:(i + 1) * HIDDEN] for i in range(CLS_H)]
    xhu_new = (xh[1]
               + L["half_upper_2"](L["half_upper_1"](xp[1], xp[2], xp[3], xp[4]))
               + xfh[1])
    xhl_new = xh[2] + L["half_lower_2"](L["half_lower_1"](xp[5], xp[6])) + xfh[2]
    hu = L["half_update"](hf, xhu_new, xhl_new)
    hd = L["half_decomp_2"](L["half_decomp_1"](pf, xh[1], xh[2]))
    xhp = [hd[:, i * HIDDEN:(i + 1) * HIDDEN] for i in range(CLS_P)]
    xp_new = [xp[j + 1] + xhp[j + 1] for j in range(CLS_P - 1)]
    pu = L["part_update"](pf, *xp_new)
    return jnp.concatenate([pu, hu, fu, fd, hd], axis=1)


# --------------------------------- main ----------------------------------------
if __name__ == "__main__":
    key = jax.random.PRNGKey(0)
    k_par, k_in = jax.random.split(key)
    flat_params = init_params(k_par)

    ks = iter(jax.random.split(k_in, CLS_P + CLS_H + CLS_F + 3))
    xp_list = [jax.random.normal(next(ks), (N, HIDDEN, H, W), jnp.float32)
               for _ in range(CLS_P)]
    xh_list = [jax.random.normal(next(ks), (N, HIDDEN, H, W), jnp.float32)
               for _ in range(CLS_H)]
    xf_list = [jax.random.normal(next(ks), (N, HIDDEN, H, W), jnp.float32)
               for _ in range(CLS_F)]
    p_fea = jax.random.normal(next(ks), (N, IN_DIM, H, W), jnp.float32)
    h_fea = jax.random.normal(next(ks), (N, IN_DIM, H, W), jnp.float32)
    f_fea = jax.random.normal(next(ks), (N, IN_DIM, H, W), jnp.float32)

    out_tok = jax.block_until_ready(gnn_forward_packed(
        flat_params, xp_list, xh_list, xf_list, p_fea, h_fea, f_fea))

    # structured (PyTorch-shaped) outputs + structural checks
    xp_new, xh_new, xf_new, xfh_l, xhp_l = gnn_forward(
        flat_params, xp_list, xh_list, xf_list, p_fea, h_fea, f_fea)
    assert len(xp_new) == CLS_P and xp_new[0].shape == (N, HIDDEN, H, W)
    assert len(xh_new) == CLS_H and len(xf_new) == CLS_F
    assert len(xfh_l) == CLS_H and len(xhp_l) == CLS_P

    # numerical check against a pure-jnp reference of the original graph
    ref = gnn_reference_packed(flat_params, xp_list, xh_list, xf_list,
                               p_fea, h_fea, f_fea)
    err = float(jnp.max(jnp.abs(out_tok - ref)))
    assert err < 1e-1, f"max abs err {err}"

    print("KERNEL_OK")
</pallas_src>

<mosaic_0001>
module attributes {stable_mosaic.version = 11 : i64} {
  func.func @_gnn_kernel(%arg0: i32, %arg1: memref<64x192xf32, #tpu.memory_space<vmem>>, %arg2: memref<16x16xf32, #tpu.memory_space<vmem>>, %arg3: memref<1x16xf32, #tpu.memory_space<vmem>>, %arg4: memref<16x8xf32, #tpu.memory_space<vmem>>, %arg5: memref<1x8xf32, #tpu.memory_space<vmem>>, %arg6: memref<32x16xf32, #tpu.memory_space<vmem>>, %arg7: memref<8x16xf32, #tpu.memory_space<vmem>>, %arg8: memref<1x16xf32, #tpu.memory_space<vmem>>, %arg9: memref<32x24xf32, #tpu.memory_space<vmem>>, %arg10: memref<8x24xf32, #tpu.memory_space<vmem>>, %arg11: memref<1x24xf32, #tpu.memory_space<vmem>>, %arg12: memref<24x24xf32, #tpu.memory_space<vmem>>, %arg13: memref<1x24xf32, #tpu.memory_space<vmem>>, %arg14: memref<32x16xf32, #tpu.memory_space<vmem>>, %arg15: memref<1x16xf32, #tpu.memory_space<vmem>>, %arg16: memref<16x8xf32, #tpu.memory_space<vmem>>, %arg17: memref<1x8xf32, #tpu.memory_space<vmem>>, %arg18: memref<16x16xf32, #tpu.memory_space<vmem>>, %arg19: memref<1x16xf32, #tpu.memory_space<vmem>>, %arg20: memref<16x8xf32, #tpu.memory_space<vmem>>, %arg21: memref<1x8xf32, #tpu.memory_space<vmem>>, %arg22: memref<32x24xf32, #tpu.memory_space<vmem>>, %arg23: memref<8x24xf32, #tpu.memory_space<vmem>>, %arg24: memref<8x24xf32, #tpu.memory_space<vmem>>, %arg25: memref<1x24xf32, #tpu.memory_space<vmem>>, %arg26: memref<32x56xf32, #tpu.memory_space<vmem>>, %arg27: memref<16x56xf32, #tpu.memory_space<vmem>>, %arg28: memref<1x56xf32, #tpu.memory_space<vmem>>, %arg29: memref<56x56xf32, #tpu.memory_space<vmem>>, %arg30: memref<1x56xf32, #tpu.memory_space<vmem>>, %arg31: memref<32x56xf32, #tpu.memory_space<vmem>>, %arg32: memref<48x56xf32, #tpu.memory_space<vmem>>, %arg33: memref<1x56xf32, #tpu.memory_space<vmem>>, %arg34: memref<64x176xf32, #tpu.memory_space<vmem>>) attributes {dimension_semantics = [#tpu.dimension_semantics<parallel>], iteration_bounds = array<i64: 2>, scalar_prefetch = 0 : i64, scratch_operands = 0 : i64, tpu.core_type = #tpu.core_type<tc>, window_params = [{transform_indices = @transform_0, window_bounds = array<i64: 64, 192>}, {pipeline_mode = #tpu.pipeline_mode<synchronous>, transform_indices = @transform_1, window_bounds = array<i64: 16, 16>}, {pipeline_mode = #tpu.pipeline_mode<synchronous>, transform_indices = @transform_2, window_bounds = array<i64: 1, 16>}, {pipeline_mode = #tpu.pipeline_mode<synchronous>, transform_indices = @transform_3, window_bounds = array<i64: 16, 8>}, {pipeline_mode = #tpu.pipeline_mode<synchronous>, transform_indices = @transform_4, window_bounds = array<i64: 1, 8>}, {pipeline_mode = #tpu.pipeline_mode<synchronous>, transform_indices = @transform_5, window_bounds = array<i64: 32, 16>}, {pipeline_mode = #tpu.pipeline_mode<synchronous>, transform_indices = @transform_6, window_bounds = array<i64: 8, 16>}, {pipeline_mode = #tpu.pipeline_mode<synchronous>, transform_indices = @transform_7, window_bounds = array<i64: 1, 16>}, {pipeline_mode = #tpu.pipeline_mode<synchronous>, transform_indices = @transform_8, window_bounds = array<i64: 32, 24>}, {pipeline_mode = #tpu.pipeline_mode<synchronous>, transform_indices = @transform_9, window_bounds = array<i64: 8, 24>}, {pipeline_mode = #tpu.pipeline_mode<synchronous>, transform_indices = @transform_10, window_bounds = array<i64: 1, 24>}, {pipeline_mode = #tpu.pipeline_mode<synchronous>, transform_indices = @transform_11, window_bounds = array<i64: 24, 24>}, {pipeline_mode = #tpu.pipeline_mode<synchronous>, transform_indices = @transform_12, window_bounds = array<i64: 1, 24>}, {pipeline_mode = #tpu.pipeline_mode<synchronous>, transform_indices = @transform_13, window_bounds = array<i64: 32, 16>}, {pipeline_mode = #tpu.pipeline_mode<synchronous>, transform_indices = @transform_14, window_bounds = array<i64: 1, 16>}, {pipeline_mode = #tpu.pipeline_mode<synchronous>, transform_indices = @transform_15, window_bounds = array<i64: 16, 8>}, {pipeline_mode = #tpu.pipeline_mode<synchronous>, transform_indices = @transform_16, window_bounds = array<i64: 1, 8>}, {pipeline_mode = #tpu.pipeline_mode<synchronous>, transform_indices = @transform_17, window_bounds = array<i64: 16, 16>}, {pipeline_mode = #tpu.pipeline_mode<synchronous>, transform_indices = @transform_18, window_bounds = array<i64: 1, 16>}, {pipeline_mode = #tpu.pipeline_mode<synchronous>, transform_indices = @transform_19, window_bounds = array<i64: 16, 8>}, {pipeline_mode = #tpu.pipeline_mode<synchronous>, transform_indices = @transform_20, window_bounds = array<i64: 1, 8>}, {pipeline_mode = #tpu.pipeline_mode<synchronous>, transform_indices = @transform_21, window_bounds = array<i64: 32, 24>}, {pipeline_mode = #tpu.pipeline_mode<synchronous>, transform_indices = @transform_22, window_bounds = array<i64: 8, 24>}, {pipeline_mode = #tpu.pipeline_mode<synchronous>, transform_indices = @transform_23, window_bounds = array<i64: 8, 24>}, {pipeline_mode = #tpu.pipeline_mode<synchronous>, transform_indices = @transform_24, window_bounds = array<i64: 1, 24>}, {pipeline_mode = #tpu.pipeline_mode<synchronous>, transform_indices = @transform_25, window_bounds = array<i64: 32, 56>}, {pipeline_mode = #tpu.pipeline_mode<synchronous>, transform_indices = @transform_26, window_bounds = array<i64: 16, 56>}, {pipeline_mode = #tpu.pipeline_mode<synchronous>, transform_indices = @transform_27, window_bounds = array<i64: 1, 56>}, {pipeline_mode = #tpu.pipeline_mode<synchronous>, transform_indices = @transform_28, window_bounds = array<i64: 56, 56>}, {pipeline_mode = #tpu.pipeline_mode<synchronous>, transform_indices = @transform_29, window_bounds = array<i64: 1, 56>}, {pipeline_mode = #tpu.pipeline_mode<synchronous>, transform_indices = @transform_30, window_bounds = array<i64: 32, 56>}, {pipeline_mode = #tpu.pipeline_mode<synchronous>, transform_indices = @transform_31, window_bounds = array<i64: 48, 56>}, {pipeline_mode = #tpu.pipeline_mode<synchronous>, transform_indices = @transform_32, window_bounds = array<i64: 1, 56>}, {transform_indices = @transform_33, window_bounds = array<i64: 64, 176>}]} {
    %c0 = arith.constant 0 : index
    %c0_0 = arith.constant 0 : index
    %0 = vector.load %arg1[%c0, %c0_0] : memref<64x192xf32, #tpu.memory_space<vmem>>, vector<64x192xf32>
    %1 = vector.extract_strided_slice %0 {offsets = [0, 8], sizes = [64, 48], strides = [1, 1]} : vector<64x192xf32> to vector<64x48xf32>
    %2 = vector.extract_strided_slice %0 {offsets = [0, 8], sizes = [64, 32], strides = [1, 1]} : vector<64x192xf32> to vector<64x32xf32>
    %3 = vector.extract_strided_slice %0 {offsets = [0, 40], sizes = [64, 16], strides = [1, 1]} : vector<64x192xf32> to vector<64x16xf32>
    %4 = vector.extract_strided_slice %0 {offsets = [0, 64], sizes = [64, 8], strides = [1, 1]} : vector<64x192xf32> to vector<64x8xf32>
    %5 = vector.extract_strided_slice %0 {offsets = [0, 72], sizes = [64, 8], strides = [1, 1]} : vector<64x192xf32> to vector<64x8xf32>
    %6 = vector.extract_strided_slice %0 {offsets = [0, 64], sizes = [64, 16], strides = [1, 1]} : vector<64x192xf32> to vector<64x16xf32>
    %7 = vector.extract_strided_slice %0 {offsets = [0, 88], sizes = [64, 8], strides = [1, 1]} : vector<64x192xf32> to vector<64x8xf32>
    %8 = vector.extract_strided_slice %0 {offsets = [0, 96], sizes = [64, 32], strides = [1, 1]} : vector<64x192xf32> to vector<64x32xf32>
    %9 = vector.extract_strided_slice %0 {offsets = [0, 128], sizes = [64, 32], strides = [1, 1]} : vector<64x192xf32> to vector<64x32xf32>
    %10 = vector.extract_strided_slice %0 {offsets = [0, 160], sizes = [64, 32], strides = [1, 1]} : vector<64x192xf32> to vector<64x32xf32>
    %c0_1 = arith.constant 0 : index
    %c0_2 = arith.constant 0 : index
    %11 = vector.load %arg2[%c0_1, %c0_2] : memref<16x16xf32, #tpu.memory_space<vmem>>, vector<16x16xf32>
    %cst = arith.constant dense<0.000000e+00> : vector<64x16xf32>
    %12 = tpu.matmul %6, %11, %cst {dimension_numbers = #tpu.dot_dimension_numbers<[1], [0], [0], [1], [0, 0, 1, 1], [], []>} : vector<64x16xf32>, vector<16x16xf32>, vector<64x16xf32> -> vector<64x16xf32>
    %c0_3 = arith.constant 0 : index
    %c0_4 = arith.constant 0 : index
    %13 = vector.load %arg3[%c0_3, %c0_4] : memref<1x16xf32, #tpu.memory_space<vmem>>, vector<1x16xf32>
    %14 = vector.broadcast %13 : vector<1x16xf32> to vector<64x16xf32>
    %15 = arith.addf %12, %14 : vector<64x16xf32>
    %cst_5 = arith.constant 0.000000e+00 : f32
    %16 = vector.broadcast %cst_5 : f32 to vector<64x16xf32>
    %17 = arith.maximumf %15, %16 : vector<64x16xf32>
    %c0_6 = arith.constant 0 : index
    %c0_7 = arith.constant 0 : index
    %18 = vector.load %arg4[%c0_6, %c0_7] : memref<16x8xf32, #tpu.memory_space<vmem>>, vector<16x8xf32>
    %cst_8 = arith.constant dense<0.000000e+00> : vector<64x8xf32>
    %19 = tpu.matmul %17, %18, %cst_8 {dimension_numbers = #tpu.dot_dimension_numbers<[1], [0], [0], [1], [0, 0, 1, 1], [], []>} : vector<64x16xf32>, vector<16x8xf32>, vector<64x8xf32> -> vector<64x8xf32>
    %c0_9 = arith.constant 0 : index
    %c0_10 = arith.constant 0 : index
    %20 = vector.load %arg5[%c0_9, %c0_10] : memref<1x8xf32, #tpu.memory_space<vmem>>, vector<1x8xf32>
    %21 = vector.broadcast %20 : vector<1x8xf32> to vector<64x8xf32>
    %22 = arith.addf %19, %21 : vector<64x8xf32>
    %cst_11 = arith.constant 0.000000e+00 : f32
    %23 = vector.broadcast %cst_11 : f32 to vector<64x8xf32>
    %24 = arith.maximumf %22, %23 : vector<64x8xf32>
    %25 = arith.addf %24, %7 : vector<64x8xf32>
    %c0_12 = arith.constant 0 : index
    %c0_13 = arith.constant 0 : index
    %26 = vector.load %arg6[%c0_12, %c0_13] : memref<32x16xf32, #tpu.memory_space<vmem>>, vector<32x16xf32>
    %cst_14 = arith.constant dense<0.000000e+00> : vector<64x16xf32>
    %27 = tpu.matmul %10, %26, %cst_14 {dimension_numbers = #tpu.dot_dimension_numbers<[1], [0], [0], [1], [0, 0, 1, 1], [], []>} : vector<64x32xf32>, vector<32x16xf32>, vector<64x16xf32> -> vector<64x16xf32>
    %c0_15 = arith.constant 0 : index
    %c0_16 = arith.constant 0 : index
    %28 = vector.load %arg7[%c0_15, %c0_16] : memref<8x16xf32, #tpu.memory_space<vmem>>, vector<8x16xf32>
    %cst_17 = arith.constant dense<0.000000e+00> : vector<64x16xf32>
    %29 = tpu.matmul %25, %28, %cst_17 {dimension_numbers = #tpu.dot_dimension_numbers<[1], [0], [0], [1], [0, 0, 1, 1], [], []>} : vector<64x8xf32>, vector<8x16xf32>, vector<64x16xf32> -> vector<64x16xf32>
    %30 = arith.addf %27, %29 : vector<64x16xf32>
    %c0_18 = arith.constant 0 : index
    %c0_19 = arith.constant 0 : index
    %31 = vector.load %arg8[%c0_18, %c0_19] : memref<1x16xf32, #tpu.memory_space<vmem>>, vector<1x16xf32>
    %32 = vector.broadcast %31 : vector<1x16xf32> to vector<64x16xf32>
    %33 = arith.addf %30, %32 : vector<64x16xf32>
    %cst_20 = arith.constant 0.000000e+00 : f32
    %34 = vector.broadcast %cst_20 : f32 to vector<64x16xf32>
    %35 = arith.maximumf %33, %34 : vector<64x16xf32>
    %c0_21 = arith.constant 0 : index
    %c0_22 = arith.constant 0 : index
    %36 = vector.load %arg9[%c0_21, %c0_22] : memref<32x24xf32, #tpu.memory_space<vmem>>, vector<32x24xf32>
    %cst_23 = arith.constant dense<0.000000e+00> : vector<64x24xf32>
    %37 = tpu.matmul %9, %36, %cst_23 {dimension_numbers = #tpu.dot_dimension_numbers<[1], [0], [0], [1], [0, 0, 1, 1], [], []>} : vector<64x32xf32>, vector<32x24xf32>, vector<64x24xf32> -> vector<64x24xf32>
    %c0_24 = arith.constant 0 : index
    %c0_25 = arith.constant 0 : index
    %38 = vector.load %arg10[%c0_24, %c0_25] : memref<8x24xf32, #tpu.memory_space<vmem>>, vector<8x24xf32>
    %cst_26 = arith.constant dense<0.000000e+00> : vector<64x24xf32>
    %39 = tpu.matmul %7, %38, %cst_26 {dimension_numbers = #tpu.dot_dimension_numbers<[1], [0], [0], [1], [0, 0, 1, 1], [], []>} : vector<64x8xf32>, vector<8x24xf32>, vector<64x24xf32> -> vector<64x24xf32>
    %40 = arith.addf %37, %39 : vector<64x24xf32>
    %c0_27 = arith.constant 0 : index
    %c0_28 = arith.constant 0 : index
    %41 = vector.load %arg11[%c0_27, %c0_28] : memref<1x24xf32, #tpu.memory_space<vmem>>, vector<1x24xf32>
    %42 = vector.broadcast %41 : vector<1x24xf32> to vector<64x24xf32>
    %43 = arith.addf %40, %42 : vector<64x24xf32>
    %cst_29 = arith.constant 0.000000e+00 : f32
    %44 = vector.broadcast %cst_29 : f32 to vector<64x24xf32>
    %45 = arith.maximumf %43, %44 : vector<64x24xf32>
    %c0_30 = arith.constant 0 : index
    %c0_31 = arith.constant 0 : index
    %46 = vector.load %arg12[%c0_30, %c0_31] : memref<24x24xf32, #tpu.memory_space<vmem>>, vector<24x24xf32>
    %cst_32 = arith.constant dense<0.000000e+00> : vector<64x24xf32>
    %47 = tpu.matmul %45, %46, %cst_32 {dimension_numbers = #tpu.dot_dimension_numbers<[1], [0], [0], [1], [0, 0, 1, 1], [], []>} : vector<64x24xf32>, vector<24x24xf32>, vector<64x24xf32> -> vector<64x24xf32>
    %c0_33 = arith.constant 0 : index
    %c0_34 = arith.constant 0 : index
    %48 = vector.load %arg13[%c0_33, %c0_34] : memref<1x24xf32, #tpu.memory_space<vmem>>, vector<1x24xf32>
    %49 = vector.broadcast %48 : vector<1x24xf32> to vector<64x24xf32>
    %50 = arith.addf %47, %49 : vector<64x24xf32>
    %cst_35 = arith.constant 0.000000e+00 : f32
    %51 = vector.broadcast %cst_35 : f32 to vector<64x24xf32>
    %52 = arith.maximumf %50, %51 : vector<64x24xf32>
    %53 = vector.extract_strided_slice %52 {offsets = [0, 8], sizes = [64, 8], strides = [1, 1]} : vector<64x24xf32> to vector<64x8xf32>
    %54 = vector.extract_strided_slice %52 {offsets = [0, 16], sizes = [64, 8], strides = [1, 1]} : vector<64x24xf32> to vector<64x8xf32>
    %c0_36 = arith.constant 0 : index
    %c0_37 = arith.constant 0 : index
    %55 = vector.load %arg14[%c0_36, %c0_37] : memref<32x16xf32, #tpu.memory_space<vmem>>, vector<32x16xf32>
    %cst_38 = arith.constant dense<0.000000e+00> : vector<64x16xf32>
    %56 = tpu.matmul %2, %55, %cst_38 {dimension_numbers = #tpu.dot_dimension_numbers<[1], [0], [0], [1], [0, 0, 1, 1], [], []>} : vector<64x32xf32>, vector<32x16xf32>, vector<64x16xf32> -> vector<64x16xf32>
    %c0_39 = arith.constant 0 : index
    %c0_40 = arith.constant 0 : index
    %57 = vector.load %arg15[%c0_39, %c0_40] : memref<1x16xf32, #tpu.memory_space<vmem>>, vector<1x16xf32>
    %58 = vector.broadcast %57 : vector<1x16xf32> to vector<64x16xf32>
    %59 = arith.addf %56, %58 : vector<64x16xf32>
    %cst_41 = arith.constant 0.000000e+00 : f32
    %60 = vector.broadcast %cst_41 : f32 to vector<64x16xf32>
    %61 = arith.maximumf %59, %60 : vector<64x16xf32>
    %c0_42 = arith.constant 0 : index
    %c0_43 = arith.constant 0 : index
    %62 = vector.load %arg16[%c0_42, %c0_43] : memref<16x8xf32, #tpu.memory_space<vmem>>, vector<16x8xf32>
    %cst_44 = arith.constant dense<0.000000e+00> : vector<64x8xf32>
    %63 = tpu.matmul %61, %62, %cst_44 {dimension_numbers = #tpu.dot_dimension_numbers<[1], [0], [0], [1], [0, 0, 1, 1], [], []>} : vector<64x16xf32>, vector<16x8xf32>, vector<64x8xf32> -> vector<64x8xf32>
    %c0_45 = arith.constant 0 : index
    %c0_46 = arith.constant 0 : index
    %64 = vector.load %arg17[%c0_45, %c0_46] : memref<1x8xf32, #tpu.memory_space<vmem>>, vector<1x8xf32>
    %65 = vector.broadcast %64 : vector<1x8xf32> to vector<64x8xf32>
    %66 = arith.addf %63, %65 : vector<64x8xf32>
    %cst_47 = arith.constant 0.000000e+00 : f32
    %67 = vector.broadcast %cst_47 : f32 to vector<64x8xf32>
    %68 = arith.maximumf %66, %67 : vector<64x8xf32>
    %69 = arith.addf %4, %68 : vector<64x8xf32>
    %70 = arith.addf %69, %53 : vector<64x8xf32>
    %c0_48 = arith.constant 0 : index
    %c0_49 = arith.constant 0 : index
    %71 = vector.load %arg18[%c0_48, %c0_49] : memref<16x16xf32, #tpu.memory_space<vmem>>, vector<16x16xf32>
    %cst_50 = arith.constant dense<0.000000e+00> : vector<64x16xf32>
    %72 = tpu.matmul %3, %71, %cst_50 {dimension_numbers = #tpu.dot_dimension_numbers<[1], [0], [0], [1], [0, 0, 1, 1], [], []>} : vector<64x16xf32>, vector<16x16xf32>, vector<64x16xf32> -> vector<64x16xf32>
    %c0_51 = arith.constant 0 : index
    %c0_52 = arith.constant 0 : index
    %73 = vector.load %arg19[%c0_51, %c0_52] : memref<1x16xf32, #tpu.memory_space<vmem>>, vector<1x16xf32>
    %74 = vector.broadcast %73 : vector<1x16xf32> to vector<64x16xf32>
    %75 = arith.addf %72, %74 : vector<64x16xf32>
    %cst_53 = arith.constant 0.000000e+00 : f32
    %76 = vector.broadcast %cst_53 : f32 to vector<64x16xf32>
    %77 = arith.maximumf %75, %76 : vector<64x16xf32>
    %c0_54 = arith.constant 0 : index
    %c0_55 = arith.constant 0 : index
    %78 = vector.load %arg20[%c0_54, %c0_55] : memref<16x8xf32, #tpu.memory_space<vmem>>, vector<16x8xf32>
    %cst_56 = arith.constant dense<0.000000e+00> : vector<64x8xf32>
    %79 = tpu.matmul %77, %78, %cst_56 {dimension_numbers = #tpu.dot_dimension_numbers<[1], [0], [0], [1], [0, 0, 1, 1], [], []>} : vector<64x16xf32>, vector<16x8xf32>, vector<64x8xf32> -> vector<64x8xf32>
    %c0_57 = arith.constant 0 : index
    %c0_58 = arith.constant 0 : index
    %80 = vector.load %arg21[%c0_57, %c0_58] : memref<1x8xf32, #tpu.memory_space<vmem>>, vector<1x8xf32>
    %81 = vector.broadcast %80 : vector<1x8xf32> to vector<64x8xf32>
    %82 = arith.addf %79, %81 : vector<64x8xf32>
    %cst_59 = arith.constant 0.000000e+00 : f32
    %83 = vector.broadcast %cst_59 : f32 to vector<64x8xf32>
    %84 = arith.maximumf %82, %83 : vector<64x8xf32>
    %85 = arith.addf %5, %84 : vector<64x8xf32>
    %86 = arith.addf %85, %54 : vector<64x8xf32>
    %c0_60 = arith.constant 0 : index
    %c0_61 = arith.constant 0 : index
    %87 = vector.load %arg22[%c0_60, %c0_61] : memref<32x24xf32, #tpu.memory_space<vmem>>, vector<32x24xf32>
    %cst_62 = arith.constant dense<0.000000e+00> : vector<64x24xf32>
    %88 = tpu.matmul %9, %87, %cst_62 {dimension_numbers = #tpu.dot_dimension_numbers<[1], [0], [0], [1], [0, 0, 1, 1], [], []>} : vector<64x32xf32>, vector<32x24xf32>, vector<64x24xf32> -> vector<64x24xf32>
    %c0_63 = arith.constant 0 : index
    %c0_64 = arith.constant 0 : index
    %89 = vector.load %arg23[%c0_63, %c0_64] : memref<8x24xf32, #tpu.memory_space<vmem>>, vector<8x24xf32>
    %cst_65 = arith.constant dense<0.000000e+00> : vector<64x24xf32>
    %90 = tpu.matmul %70, %89, %cst_65 {dimension_numbers = #tpu.dot_dimension_numbers<[1], [0], [0], [1], [0, 0, 1, 1], [], []>} : vector<64x8xf32>, vector<8x24xf32>, vector<64x24xf32> -> vector<64x24xf32>
    %91 = arith.addf %88, %90 : vector<64x24xf32>
    %c0_66 = arith.constant 0 : index
    %c0_67 = arith.constant 0 : index
    %92 = vector.load %arg24[%c0_66, %c0_67] : memref<8x24xf32, #tpu.memory_space<vmem>>, vector<8x24xf32>
    %cst_68 = arith.constant dense<0.000000e+00> : vector<64x24xf32>
    %93 = tpu.matmul %86, %92, %cst_68 {dimension_numbers = #tpu.dot_dimension_numbers<[1], [0], [0], [1], [0, 0, 1, 1], [], []>} : vector<64x8xf32>, vector<8x24xf32>, vector<64x24xf32> -> vector<64x24xf32>
    %94 = arith.addf %91, %93 : vector<64x24xf32>
    %c0_69 = arith.constant 0 : index
    %c0_70 = arith.constant 0 : index
    %95 = vector.load %arg25[%c0_69, %c0_70] : memref<1x24xf32, #tpu.memory_space<vmem>>, vector<1x24xf32>
    %96 = vector.broadcast %95 : vector<1x24xf32> to vector<64x24xf32>
    %97 = arith.addf %94, %96 : vector<64x24xf32>
    %cst_71 = arith.constant 0.000000e+00 : f32
    %98 = vector.broadcast %cst_71 : f32 to vector<64x24xf32>
    %99 = arith.maximumf %97, %98 : vector<64x24xf32>
    %c0_72 = arith.constant 0 : index
    %c0_73 = arith.constant 0 : index
    %100 = vector.load %arg26[%c0_72, %c0_73] : memref<32x56xf32, #tpu.memory_space<vmem>>, vector<32x56xf32>
    %cst_74 = arith.constant dense<0.000000e+00> : vector<64x56xf32>
    %101 = tpu.matmul %8, %100, %cst_74 {dimension_numbers = #tpu.dot_dimension_numbers<[1], [0], [0], [1], [0, 0, 1, 1], [], []>} : vector<64x32xf32>, vector<32x56xf32>, vector<64x56xf32> -> vector<64x56xf32>
    %c0_75 = arith.constant 0 : index
    %c0_76 = arith.constant 0 : index
    %102 = vector.load %arg27[%c0_75, %c0_76] : memref<16x56xf32, #tpu.memory_space<vmem>>, vector<16x56xf32>
    %cst_77 = arith.constant dense<0.000000e+00> : vector<64x56xf32>
    %103 = tpu.matmul %6, %102, %cst_77 {dimension_numbers = #tpu.dot_dimension_numbers<[1], [0], [0], [1], [0, 0, 1, 1], [], []>} : vector<64x16xf32>, vector<16x56xf32>, vector<64x56xf32> -> vector<64x56xf32>
    %104 = arith.addf %101, %103 : vector<64x56xf32>
    %c0_78 = arith.constant 0 : index
    %c0_79 = arith.constant 0 : index
    %105 = vector.load %arg28[%c0_78, %c0_79] : memref<1x56xf32, #tpu.memory_space<vmem>>, vector<1x56xf32>
    %106 = vector.broadcast %105 : vector<1x56xf32> to vector<64x56xf32>
    %107 = arith.addf %104, %106 : vector<64x56xf32>
    %cst_80 = arith.constant 0.000000e+00 : f32
    %108 = vector.broadcast %cst_80 : f32 to vector<64x56xf32>
    %109 = arith.maximumf %107, %108 : vector<64x56xf32>
    %c0_81 = arith.constant 0 : index
    %c0_82 = arith.constant 0 : index
    %110 = vector.load %arg29[%c0_81, %c0_82] : memref<56x56xf32, #tpu.memory_space<vmem>>, vector<56x56xf32>
    %cst_83 = arith.constant dense<0.000000e+00> : vector<64x56xf32>
    %111 = tpu.matmul %109, %110, %cst_83 {dimension_numbers = #tpu.dot_dimension_numbers<[1], [0], [0], [1], [0, 0, 1, 1], [], []>} : vector<64x56xf32>, vector<56x56xf32>, vector<64x56xf32> -> vector<64x56xf32>
    %c0_84 = arith.constant 0 : index
    %c0_85 = arith.constant 0 : index
    %112 = vector.load %arg30[%c0_84, %c0_85] : memref<1x56xf32, #tpu.memory_space<vmem>>, vector<1x56xf32>
    %113 = vector.broadcast %112 : vector<1x56xf32> to vector<64x56xf32>
    %114 = arith.addf %111, %113 : vector<64x56xf32>
    %cst_86 = arith.constant 0.000000e+00 : f32
    %115 = vector.broadcast %cst_86 : f32 to vector<64x56xf32>
    %116 = arith.maximumf %114, %115 : vector<64x56xf32>
    %117 = vector.extract_strided_slice %116 {offsets = [0, 8], sizes = [64, 48], strides = [1, 1]} : vector<64x56xf32> to vector<64x48xf32>
    %118 = arith.addf %1, %117 : vector<64x48xf32>
    %c0_87 = arith.constant 0 : index
    %c0_88 = arith.constant 0 : index
    %119 = vector.load %arg31[%c0_87, %c0_88] : memref<32x56xf32, #tpu.memory_space<vmem>>, vector<32x56xf32>
    %cst_89 = arith.constant dense<0.000000e+00> : vector<64x56xf32>
    %120 = tpu.matmul %8, %119, %cst_89 {dimension_numbers = #tpu.dot_dimension_numbers<[1], [0], [0], [1], [0, 0, 1, 1], [], []>} : vector<64x32xf32>, vector<32x56xf32>, vector<64x56xf32> -> vector<64x56xf32>
    %c0_90 = arith.constant 0 : index
    %c0_91 = arith.constant 0 : index
    %121 = vector.load %arg32[%c0_90, %c0_91] : memref<48x56xf32, #tpu.memory_space<vmem>>, vector<48x56xf32>
    %cst_92 = arith.constant dense<0.000000e+00> : vector<64x56xf32>
    %122 = tpu.matmul %118, %121, %cst_92 {dimension_numbers = #tpu.dot_dimension_numbers<[1], [0], [0], [1], [0, 0, 1, 1], [], []>} : vector<64x48xf32>, vector<48x56xf32>, vector<64x56xf32> -> vector<64x56xf32>
    %123 = arith.addf %120, %122 : vector<64x56xf32>
    %c0_93 = arith.constant 0 : index
    %c0_94 = arith.constant 0 : index
    %124 = vector.load %arg33[%c0_93, %c0_94] : memref<1x56xf32, #tpu.memory_space<vmem>>, vector<1x56xf32>
    %125 = vector.broadcast %124 : vector<1x56xf32> to vector<64x56xf32>
    %126 = arith.addf %123, %125 : vector<64x56xf32>
    %cst_95 = arith.constant 0.000000e+00 : f32
    %127 = vector.broadcast %cst_95 : f32 to vector<64x56xf32>
    %128 = arith.maximumf %126, %127 : vector<64x56xf32>
    %129 = tpu.concatenate %128, %99, %35, %52, %116 in 1 : vector<64x56xf32>, vector<64x24xf32>, vector<64x16xf32>, vector<64x24xf32>, vector<64x56xf32> -> vector<64x176xf32>
    %c0_96 = arith.constant 0 : index
    %c0_97 = arith.constant 0 : index
    %130 = vector.load %arg34[%c0_96, %c0_97] : memref<64x176xf32, #tpu.memory_space<vmem>>, vector<64x176xf32>
    tpu.vector_store %arg34[%c0_96, %c0_97], %129 {strides = array<i32>} : memref<64x176xf32, #tpu.memory_space<vmem>>, vector<64x176xf32>,
    return
  }
  func.func @transform_0(%arg0: i32) -> (i32, i32) {
    %c0_i32 = arith.constant 0 : i32
    %c0_i32_0 = arith.constant 0 : i32
    return %arg0, %c0_i32 : i32, i32
  }
  func.func @transform_1(%arg0: i32) -> (i32, i32) {
    %c0_i32 = arith.constant 0 : i32
    %c0_i32_0 = arith.constant 0 : i32
    %c0_i32_1 = arith.constant 0 : i32
    return %c0_i32, %c0_i32_0 : i32, i32
  }
  func.func @transform_2(%arg0: i32) -> (i32, i32) {
    %c0_i32 = arith.constant 0 : i32
    %c0_i32_0 = arith.constant 0 : i32
    %c0_i32_1 = arith.constant 0 : i32
    return %c0_i32, %c0_i32_0 : i32, i32
  }
  func.func @transform_3(%arg0: i32) -> (i32, i32) {
    %c0_i32 = arith.constant 0 : i32
    %c0_i32_0 = arith.constant 0 : i32
    %c0_i32_1 = arith.constant 0 : i32
    return %c0_i32, %c0_i32_0 : i32, i32
  }
  func.func @transform_4(%arg0: i32) -> (i32, i32) {
    %c0_i32 = arith.constant 0 : i32
    %c0_i32_0 = arith.constant 0 : i32
    %c0_i32_1 = arith.constant 0 : i32
    return %c0_i32, %c0_i32_0 : i32, i32
  }
  func.func @transform_5(%arg0: i32) -> (i32, i32) {
    %c0_i32 = arith.constant 0 : i32
    %c0_i32_0 = arith.constant 0 : i32
    %c0_i32_1 = arith.constant 0 : i32
    return %c0_i32, %c0_i32_0 : i32, i32
  }
  func.func @transform_6(%arg0: i32) -> (i32, i32) {
    %c0_i32 = arith.constant 0 : i32
    %c0_i32_0 = arith.constant 0 : i32
    %c0_i32_1 = arith.constant 0 : i32
    return %c0_i32, %c0_i32_0 : i32, i32
  }
  func.func @transform_7(%arg0: i32) -> (i32, i32) {
    %c0_i32 = arith.constant 0 : i32
    %c0_i32_0 = arith.constant 0 : i32
    %c0_i32_1 = arith.constant 0 : i32
    return %c0_i32, %c0_i32_0 : i32, i32
  }
  func.func @transform_8(%arg0: i32) -> (i32, i32) {
    %c0_i32 = arith.constant 0 : i32
    %c0_i32_0 = arith.constant 0 : i32
    %c0_i32_1 = arith.constant 0 : i32
    return %c0_i32, %c0_i32_0 : i32, i32
  }
  func.func @transform_9(%arg0: i32) -> (i32, i32) {
    %c0_i32 = arith.constant 0 : i32
    %c0_i32_0 = arith.constant 0 : i32
    %c0_i32_1 = arith.constant 0 : i32
    return %c0_i32, %c0_i32_0 : i32, i32
  }
  func.func @transform_10(%arg0: i32) -> (i32, i32) {
    %c0_i32 = arith.constant 0 : i32
    %c0_i32_0 = arith.constant 0 : i32
    %c0_i32_1 = arith.constant 0 : i32
    return %c0_i32, %c0_i32_0 : i32, i32
  }
  func.func @transform_11(%arg0: i32) -> (i32, i32) {
    %c0_i32 = arith.constant 0 : i32
    %c0_i32_0 = arith.constant 0 : i32
    %c0_i32_1 = arith.constant 0 : i32
    return %c0_i32, %c0_i32_0 : i32, i32
  }
  func.func @transform_12(%arg0: i32) -> (i32, i32) {
    %c0_i32 = arith.constant 0 : i32
    %c0_i32_0 = arith.constant 0 : i32
    %c0_i32_1 = arith.constant 0 : i32
    return %c0_i32, %c0_i32_0 : i32, i32
  }
  func.func @transform_13(%arg0: i32) -> (i32, i32) {
    %c0_i32 = arith.constant 0 : i32
    %c0_i32_0 = arith.constant 0 : i32
    %c0_i32_1 = arith.constant 0 : i32
    return %c0_i32, %c0_i32_0 : i32, i32
  }
  func.func @transform_14(%arg0: i32) -> (i32, i32) {
    %c0_i32 = arith.constant 0 : i32
    %c0_i32_0 = arith.constant 0 : i32
    %c0_i32_1 = arith.constant 0 : i32
    return %c0_i32, %c0_i32_0 : i32, i32
  }
  func.func @transform_15(%arg0: i32) -> (i32, i32) {
    %c0_i32 = arith.constant 0 : i32
    %c0_i32_0 = arith.constant 0 : i32
    %c0_i32_1 = arith.constant 0 : i32
    return %c0_i32, %c0_i32_0 : i32, i32
  }
  func.func @transform_16(%arg0: i32) -> (i32, i32) {
    %c0_i32 = arith.constant 0 : i32
    %c0_i32_0 = arith.constant 0 : i32
    %c0_i32_1 = arith.constant 0 : i32
    return %c0_i32, %c0_i32_0 : i32, i32
  }
  func.func @transform_17(%arg0: i32) -> (i32, i32) {
    %c0_i32 = arith.constant 0 : i32
    %c0_i32_0 = arith.constant 0 : i32
    %c0_i32_1 = arith.constant 0 : i32
    return %c0_i32, %c0_i32_0 : i32, i32
  }
  func.func @transform_18(%arg0: i32) -> (i32, i32) {
    %c0_i32 = arith.constant 0 : i32
    %c0_i32_0 = arith.constant 0 : i32
    %c0_i32_1 = arith.constant 0 : i32
    return %c0_i32, %c0_i32_0 : i32, i32
  }
  func.func @transform_19(%arg0: i32) -> (i32, i32) {
    %c0_i32 = arith.constant 0 : i32
    %c0_i32_0 = arith.constant 0 : i32
    %c0_i32_1 = arith.constant 0 : i32
    return %c0_i32, %c0_i32_0 : i32, i32
  }
  func.func @transform_20(%arg0: i32) -> (i32, i32) {
    %c0_i32 = arith.constant 0 : i32
    %c0_i32_0 = arith.constant 0 : i32
    %c0_i32_1 = arith.constant 0 : i32
    return %c0_i32, %c0_i32_0 : i32, i32
  }
  func.func @transform_21(%arg0: i32) -> (i32, i32) {
    %c0_i32 = arith.constant 0 : i32
    %c0_i32_0 = arith.constant 0 : i32
    %c0_i32_1 = arith.constant 0 : i32
    return %c0_i32, %c0_i32_0 : i32, i32
  }
  func.func @transform_22(%arg0: i32) -> (i32, i32) {
    %c0_i32 = arith.constant 0 : i32
    %c0_i32_0 = arith.constant 0 : i32
    %c0_i32_1 = arith.constant 0 : i32
    return %c0_i32, %c0_i32_0 : i32, i32
  }
  func.func @transform_23(%arg0: i32) -> (i32, i32) {
    %c0_i32 = arith.constant 0 : i32
    %c0_i32_0 = arith.constant 0 : i32
    %c0_i32_1 = arith.constant 0 : i32
    return %c0_i32, %c0_i32_0 : i32, i32
  }
  func.func @transform_24(%arg0: i32) -> (i32, i32) {
    %c0_i32 = arith.constant 0 : i32
    %c0_i32_0 = arith.constant 0 : i32
    %c0_i32_1 = arith.constant 0 : i32
    return %c0_i32, %c0_i32_0 : i32, i32
  }
  func.func @transform_25(%arg0: i32) -> (i32, i32) {
    %c0_i32 = arith.constant 0 : i32
    %c0_i32_0 = arith.constant 0 : i32
    %c0_i32_1 = arith.constant 0 : i32
    return %c0_i32, %c0_i32_0 : i32, i32
  }
  func.func @transform_26(%arg0: i32) -> (i32, i32) {
    %c0_i32 = arith.constant 0 : i32
    %c0_i32_0 = arith.constant 0 : i32
    %c0_i32_1 = arith.constant 0 : i32
    return %c0_i32, %c0_i32_0 : i32, i32
  }
  func.func @transform_27(%arg0: i32) -> (i32, i32) {
    %c0_i32 = arith.constant 0 : i32
    %c0_i32_0 = arith.constant 0 : i32
    %c0_i32_1 = arith.constant 0 : i32
    return %c0_i32, %c0_i32_0 : i32, i32
  }
  func.func @transform_28(%arg0: i32) -> (i32, i32) {
    %c0_i32 = arith.constant 0 : i32
    %c0_i32_0 = arith.constant 0 : i32
    %c0_i32_1 = arith.constant 0 : i32
    return %c0_i32, %c0_i32_0 : i32, i32
  }
  func.func @transform_29(%arg0: i32) -> (i32, i32) {
    %c0_i32 = arith.constant 0 : i32
    %c0_i32_0 = arith.constant 0 : i32
    %c0_i32_1 = arith.constant 0 : i32
    return %c0_i32, %c0_i32_0 : i32, i32
  }
  func.func @transform_30(%arg0: i32) -> (i32, i32) {
    %c0_i32 = arith.constant 0 : i32
    %c0_i32_0 = arith.constant 0 : i32
    %c0_i32_1 = arith.constant 0 : i32
    return %c0_i32, %c0_i32_0 : i32, i32
  }
  func.func @transform_31(%arg0: i32) -> (i32, i32) {
    %c0_i32 = arith.constant 0 : i32
    %c0_i32_0 = arith.constant 0 : i32
    %c0_i32_1 = arith.constant 0 : i32
    return %c0_i32, %c0_i32_0 : i32, i32
  }
  func.func @transform_32(%arg0: i32) -> (i32, i32) {
    %c0_i32 = arith.constant 0 : i32
    %c0_i32_0 = arith.constant 0 : i32
    %c0_i32_1 = arith.constant 0 : i32
    return %c0_i32, %c0_i32_0 : i32, i32
  }
  func.func @transform_33(%arg0: i32) -> (i32, i32) {
    %c0_i32 = arith.constant 0 : i32
    %c0_i32_0 = arith.constant 0 : i32
    return %arg0, %c0_i32 : i32, i32
  }
}

</mosaic_0001>

<llo_original>
// kernel: gnn_forward_packed.1
$region0: #{gnn_forward_packed.1}
  #allocation0 [shape = 'u32[]', space=smem, size = 0x4, offset = 0x4, fixed_abs, tag = 'smem constant byte address 0x4 - core index']
  #allocation1 [shape = 'u32[144,128]{1,0:T(1,128)}', space=vmem, size = 0x12000, scoped, tag = 'internal scratch']
  %s0 = inlined_call_operand.smem [shape: u32[34], index: -1, kind: input, shape index: {}]
  %s1 = sld [smem:[%s0]]
  %s2 = scalar_lea.smem %s0, 1
  %s3 = sld [smem:[%s2]]
  %s4 = scalar_lea.smem %s0, 2
  %s5 = sld [smem:[%s4]]
  %s6 = scalar_lea.smem %s0, 3
  %s7 = sld [smem:[%s6]]
  %s8 = scalar_lea.smem %s0, 4
  %s9 = sld [smem:[%s8]]
  %s10 = scalar_lea.smem %s0, 5
  %s11 = sld [smem:[%s10]]
  %s12 = scalar_lea.smem %s0, 6
  %s13 = sld [smem:[%s12]]
  %s14 = scalar_lea.smem %s0, 7
  %s15 = sld [smem:[%s14]]
  %s16 = scalar_lea.smem %s0, 8
  %s17 = sld [smem:[%s16]]
  %s18 = scalar_lea.smem %s0, 9
  %s19 = sld [smem:[%s18]]
  %s20 = scalar_lea.smem %s0, 10
  %s21 = sld [smem:[%s20]]
  %s22 = scalar_lea.smem %s0, 11
  %s23 = sld [smem:[%s22]]
  %s24 = scalar_lea.smem %s0, 12
  %s25 = sld [smem:[%s24]]
  %s26 = scalar_lea.smem %s0, 13
  %s27 = sld [smem:[%s26]]
  %s28 = scalar_lea.smem %s0, 14
  %s29 = sld [smem:[%s28]]
  %s30 = scalar_lea.smem %s0, 15
  %s31 = sld [smem:[%s30]]
  %s32 = scalar_lea.smem %s0, 16
  %s33 = sld [smem:[%s32]]
  %s34 = scalar_lea.smem %s0, 17
  %s35 = sld [smem:[%s34]]
  %s36 = scalar_lea.smem %s0, 18
  %s37 = sld [smem:[%s36]]
  %s38 = scalar_lea.smem %s0, 19
  %s39 = sld [smem:[%s38]]
  %s40 = scalar_lea.smem %s0, 20
  %s41 = sld [smem:[%s40]]
  %s42 = scalar_lea.smem %s0, 21
  %s43 = sld [smem:[%s42]]
  %s44 = scalar_lea.smem %s0, 22
  %s45 = sld [smem:[%s44]]
  %s46 = scalar_lea.smem %s0, 23
  %s47 = sld [smem:[%s46]]
  %s48 = scalar_lea.smem %s0, 24
  %s49 = sld [smem:[%s48]]
  %s50 = scalar_lea.smem %s0, 25
  %s51 = sld [smem:[%s50]]
  %s52 = scalar_lea.smem %s0, 26
  %s53 = sld [smem:[%s52]]
  %s54 = scalar_lea.smem %s0, 27
  %s55 = sld [smem:[%s54]]
  %s56 = scalar_lea.smem %s0, 28
  %s57 = sld [smem:[%s56]]
  %s58 = scalar_lea.smem %s0, 29
  %s59 = sld [smem:[%s58]]
  %s60 = scalar_lea.smem %s0, 30
  %s61 = sld [smem:[%s60]]
  %s62 = scalar_lea.smem %s0, 31
  %s63 = sld [smem:[%s62]]
  %s64 = scalar_lea.smem %s0, 32
  %s65 = sld [smem:[%s64]]
  %s66 = scalar_lea.smem %s0, 33
  %s67 = sld [smem:[%s66]]
  %s68 = sld [smem:[#allocation0]]
  $region165: #{gnn_forward_packed.1} parent=0
    _
  %s70 = ssub.s32 1, %s68
  %s71 = scalar_select 0, %s70, %s68
  loop: start=0, step=1, limit=4
  $region2: #{gnn_forward_packed.1} parent=0 // loop_pre_header
    _
  $region3: #{gnn_forward_packed.1} parent=0 // loop_header
    %s73 = sphi 0, %s77
    %p74 = scmp.ge.s32.totalorder %s73, 4
    %s83 = sphi 0, %s85
    %s86 = sphi 0, %s83
    %s87 = sphi 0, %s86
    %s103 = sphi 0, %s87
    %s107 = sphi 0, %s107
    %s109 = sphi 0, %s107
    %s110 = sphi 0, %s109
    %s124 = sphi 0, %s110
    %s128 = sphi 0, %s128
    %s130 = sphi 0, %s128
    %s131 = sphi 0, %s130
    %s145 = sphi 0, %s131
    %s149 = sphi 0, %s149
    %s151 = sphi 0, %s149
    %s152 = sphi 0, %s151
    %s166 = sphi 0, %s152
    %s170 = sphi 0, %s170
    %s172 = sphi 0, %s170
    %s173 = sphi 0, %s172
    %s187 = sphi 0, %s173
    %s191 = sphi 0, %s191
    %s193 = sphi 0, %s191
    %s194 = sphi 0, %s193
    %s208 = sphi 0, %s194
    %s212 = sphi 0, %s212
    %s214 = sphi 0, %s212
    %s215 = sphi 0, %s214
    %s229 = sphi 0, %s215
    %s233 = sphi 0, %s233
    %s235 = sphi 0, %s233
    %s236 = sphi 0, %s235
    %s250 = sphi 0, %s236
    %s254 = sphi 0, %s254
    %s256 = sphi 0, %s254
    %s257 = sphi 0, %s256
    %s271 = sphi 0, %s257
    %s275 = sphi 0, %s275
    %s277 = sphi 0, %s275
    %s278 = sphi 0, %s277
    %s292 = sphi 0, %s278
    %s296 = sphi 0, %s296
    %s298 = sphi 0, %s296
    %s299 = sphi 0, %s298
    %s313 = sphi 0, %s299
    %s317 = sphi 0, %s317
    %s319 = sphi 0, %s317
    %s320 = sphi 0, %s319
    %s334 = sphi 0, %s320
    %s338 = sphi 0, %s338
    %s340 = sphi 0, %s338
    %s341 = sphi 0, %s340
    %s355 = sphi 0, %s341
    %s359 = sphi 0, %s359
    %s361 = sphi 0, %s359
    %s362 = sphi 0, %s361
    %s376 = sphi 0, %s362
    %s380 = sphi 0, %s380
    %s382 = sphi 0, %s380
    %s383 = sphi 0, %s382
    %s397 = sphi 0, %s383
    %s401 = sphi 0, %s401
    %s403 = sphi 0, %s401
    %s404 = sphi 0, %s403
    %s418 = sphi 0, %s404
    %s422 = sphi 0, %s422
    %s424 = sphi 0, %s422
    %s425 = sphi 0, %s424
    %s439 = sphi 0, %s425
    %s443 = sphi 0, %s443
    %s445 = sphi 0, %s443
    %s446 = sphi 0, %s445
    %s460 = sphi 0, %s446
    %s464 = sphi 0, %s464
    %s466 = sphi 0, %s464
    %s467 = sphi 0, %s466
    %s481 = sphi 0, %s467
    %s485 = sphi 0, %s485
    %s487 = sphi 0, %s485
    %s488 = sphi 0, %s487
    %s502 = sphi 0, %s488
    %s506 = sphi 0, %s506
    %s508 = sphi 0, %s506
    %s509 = sphi 0, %s508
    %s523 = sphi 0, %s509
    %s527 = sphi 0, %s527
    %s529 = sphi 0, %s527
    %s530 = sphi 0, %s529
    %s544 = sphi 0, %s530
    %s548 = sphi 0, %s548
    %s550 = sphi 0, %s548
    %s551 = sphi 0, %s550
    %s565 = sphi 0, %s551
    %s569 = sphi 0, %s569
    %s571 = sphi 0, %s569
    %s572 = sphi 0, %s571
    %s586 = sphi 0, %s572
    %s590 = sphi 0, %s590
    %s592 = sphi 0, %s590
    %s593 = sphi 0, %s592
    %s607 = sphi 0, %s593
    %s611 = sphi 0, %s611
    %s613 = sphi 0, %s611
    %s614 = sphi 0, %s613
    %s628 = sphi 0, %s614
    %s632 = sphi 0, %s632
    %s634 = sphi 0, %s632
    %s635 = sphi 0, %s634
    %s649 = sphi 0, %s635
    %s653 = sphi 0, %s653
    %s655 = sphi 0, %s653
    %s656 = sphi 0, %s655
    %s670 = sphi 0, %s656
    %s674 = sphi 0, %s674
    %s676 = sphi 0, %s674
    %s677 = sphi 0, %s676
    %s691 = sphi 0, %s677
    %s695 = sphi 0, %s695
    %s697 = sphi 0, %s695
    %s698 = sphi 0, %s697
    %s712 = sphi 0, %s698
    %s716 = sphi 0, %s716
    %s718 = sphi 0, %s716
    %s719 = sphi 0, %s718
    %s733 = sphi 0, %s719
    %s737 = sphi 0, %s737
    %s739 = sphi 0, %s737
    %s740 = sphi 0, %s739
    %s754 = sphi 0, %s740
    %s758 = sphi 0, %s758
    %s760 = sphi 0, %s758
    %s761 = sphi 0, %s760
    %s775 = sphi 0, %s761
    %s781 = sphi 0, %s783
    %s784 = sphi 0, %s781
    %s785 = sphi 0, %s784
    %s801 = sphi 0, %s785
  $region4: #{gnn_forward_packed.1} parent=0 // loop_header_branch
    %76 = sbr.rel (%p74) target = $region8
  $region5: #{gnn_forward_packed.1} parent=0 // loop_body
    %s78 = ssub.s32 %s73, 1
    %s79 = ssub.s32 %s73, 2
    %s80 = sadd.s32 %s73, 1
    %s81 = ssub.s32 %s73, %s80
    %p82 = scmp.eq.s32.totalorder %s81, 0
    %s84 = sadd.s32 %s83, 1
    %s85 = scalar_select %p82, %s83, %s84
    %p88 = pneg %p82
    %p89 = scmp.eq.s32.totalorder %s73, 1
    %p90 = por %p88, %p89
    %p91 = scmp.ne.s32.totalorder %s83, %s86
    %p92 = scmp.eq.s32.totalorder %s73, 0
    %p93 = por %p91, %p92
    %p94 = scmp.ne.s32.totalorder %s83, %s86
    %p95 = scmp.eq.s32.totalorder %s78, 1
    %p96 = por %p94, %p95
    %p97 = scmp.ne.s32.totalorder %s86, %s87
    %p98 = scmp.eq.s32.totalorder %s78, 0
    %p99 = por %p97, %p98
    %p100 = scmp.ne.s32.totalorder %s86, %s87
    %p101 = scmp.eq.s32.totalorder %s79, 1
    %p102 = por %p100, %p101
    %p104 = scmp.ne.s32.totalorder %s87, %s103
    %p105 = scmp.eq.s32.totalorder %s79, 0
    %p106 = por %p104, %p105
    %s108 = sadd.s32 %s107, 1
    %p111 = scmp.eq.s32.totalorder %s73, 1
    %p112 = scmp.ne.s32.totalorder %s107, %s109
    %p113 = scmp.eq.s32.totalorder %s73, 0
    %p114 = por %p112, %p113
    %p115 = scmp.ne.s32.totalorder %s107, %s109
    %p116 = scmp.eq.s32.totalorder %s78, 1
    %p117 = por %p115, %p116
    %p118 = scmp.ne.s32.totalorder %s109, %s110
    %p119 = scmp.eq.s32.totalorder %s78, 0
    %p120 = por %p118, %p119
    %p121 = scmp.ne.s32.totalorder %s109, %s110
    %p122 = scmp.eq.s32.totalorder %s79, 1
    %p123 = por %p121, %p122
    %p125 = scmp.ne.s32.totalorder %s110, %s124
    %p126 = scmp.eq.s32.totalorder %s79, 0
    %p127 = por %p125, %p126
    %s129 = sadd.s32 %s128, 1
    %p132 = scmp.eq.s32.totalorder %s73, 1
    %p133 = scmp.ne.s32.totalorder %s128, %s130
    %p134 = scmp.eq.s32.totalorder %s73, 0
    %p135 = por %p133, %p134
    %p136 = scmp.ne.s32.totalorder %s128, %s130
    %p137 = scmp.eq.s32.totalorder %s78, 1
    %p138 = por %p136, %p137
    %p139 = scmp.ne.s32.totalorder %s130, %s131
    %p140 = scmp.eq.s32.totalorder %s78, 0
    %p141 = por %p139, %p140
    %p142 = scmp.ne.s32.totalorder %s130, %s131
    %p143 = scmp.eq.s32.totalorder %s79, 1
    %p144 = por %p142, %p143
    %p146 = scmp.ne.s32.totalorder %s131, %s145
    %p147 = scmp.eq.s32.totalorder %s79, 0
    %p148 = por %p146, %p147
    %s150 = sadd.s32 %s149, 1
    %p153 = scmp.eq.s32.totalorder %s73, 1
    %p154 = scmp.ne.s32.totalorder %s149, %s151
    %p155 = scmp.eq.s32.totalorder %s73, 0
    %p156 = por %p154, %p155
    %p157 = scmp.ne.s32.totalorder %s149, %s151
    %p158 = scmp.eq.s32.totalorder %s78, 1
    %p159 = por %p157, %p158
    %p160 = scmp.ne.s32.totalorder %s151, %s152
    %p161 = scmp.eq.s32.totalorder %s78, 0
    %p162 = por %p160, %p161
    %p163 = scmp.ne.s32.totalorder %s151, %s152
    %p164 = scmp.eq.s32.totalorder %s79, 1
    %p165 = por %p163, %p164
    %p167 = scmp.ne.s32.totalorder %s152, %s166
    %p168 = scmp.eq.s32.totalorder %s79, 0
    %p169 = por %p167, %p168
    %s171 = sadd.s32 %s170, 1
    %p174 = scmp.eq.s32.totalorder %s73, 1
    %p175 = scmp.ne.s32.totalorder %s170, %s172
    %p176 = scmp.eq.s32.totalorder %s73, 0
    %p177 = por %p175, %p176
    %p178 = scmp.ne.s32.totalorder %s170, %s172
    %p179 = scmp.eq.s32.totalorder %s78, 1
    %p180 = por %p178, %p179
    %p181 = scmp.ne.s32.totalorder %s172, %s173
    %p182 = scmp.eq.s32.totalorder %s78, 0
    %p183 = por %p181, %p182
    %p184 = scmp.ne.s32.totalorder %s172, %s173
    %p185 = scmp.eq.s32.totalorder %s79, 1
    %p186 = por %p184, %p185
    %p188 = scmp.ne.s32.totalorder %s173, %s187
    %p189 = scmp.eq.s32.totalorder %s79, 0
    %p190 = por %p188, %p189
    %s192 = sadd.s32 %s191, 1
    %p195 = scmp.eq.s32.totalorder %s73, 1
    %p196 = scmp.ne.s32.totalorder %s191, %s193
    %p197 = scmp.eq.s32.totalorder %s73, 0
    %p198 = por %p196, %p197
    %p199 = scmp.ne.s32.totalorder %s191, %s193
    %p200 = scmp.eq.s32.totalorder %s78, 1
    %p201 = por %p199, %p200
    %p202 = scmp.ne.s32.totalorder %s193, %s194
    %p203 = scmp.eq.s32.totalorder %s78, 0
    %p204 = por %p202, %p203
    %p205 = scmp.ne.s32.totalorder %s193, %s194
    %p206 = scmp.eq.s32.totalorder %s79, 1
    %p207 = por %p205, %p206
    %p209 = scmp.ne.s32.totalorder %s194, %s208
    %p210 = scmp.eq.s32.totalorder %s79, 0
    %p211 = por %p209, %p210
    %s213 = sadd.s32 %s212, 1
    %p216 = scmp.eq.s32.totalorder %s73, 1
    %p217 = scmp.ne.s32.totalorder %s212, %s214
    %p218 = scmp.eq.s32.totalorder %s73, 0
    %p219 = por %p217, %p218
    %p220 = scmp.ne.s32.totalorder %s212, %s214
    %p221 = scmp.eq.s32.totalorder %s78, 1
    %p222 = por %p220, %p221
    %p223 = scmp.ne.s32.totalorder %s214, %s215
    %p224 = scmp.eq.s32.totalorder %s78, 0
    %p225 = por %p223, %p224
    %p226 = scmp.ne.s32.totalorder %s214, %s215
    %p227 = scmp.eq.s32.totalorder %s79, 1
    %p228 = por %p226, %p227
    %p230 = scmp.ne.s32.totalorder %s215, %s229
    %p231 = scmp.eq.s32.totalorder %s79, 0
    %p232 = por %p230, %p231
    %s234 = sadd.s32 %s233, 1
    %p237 = scmp.eq.s32.totalorder %s73, 1
    %p238 = scmp.ne.s32.totalorder %s233, %s235
    %p239 = scmp.eq.s32.totalorder %s73, 0
    %p240 = por %p238, %p239
    %p241 = scmp.ne.s32.totalorder %s233, %s235
    %p242 = scmp.eq.s32.totalorder %s78, 1
    %p243 = por %p241, %p242
    %p244 = scmp.ne.s32.totalorder %s235, %s236
    %p245 = scmp.eq.s32.totalorder %s78, 0
    %p246 = por %p244, %p245
    %p247 = scmp.ne.s32.totalorder %s235, %s236
    %p248 = scmp.eq.s32.totalorder %s79, 1
    %p249 = por %p247, %p248
    %p251 = scmp.ne.s32.totalorder %s236, %s250
    %p252 = scmp.eq.s32.totalorder %s79, 0
    %p253 = por %p251, %p252
    %s255 = sadd.s32 %s254, 1
    %p258 = scmp.eq.s32.totalorder %s73, 1
    %p259 = scmp.ne.s32.totalorder %s254, %s256
    %p260 = scmp.eq.s32.totalorder %s73, 0
    %p261 = por %p259, %p260
    %p262 = scmp.ne.s32.totalorder %s254, %s256
    %p263 = scmp.eq.s32.totalorder %s78, 1
    %p264 = por %p262, %p263
    %p265 = scmp.ne.s32.totalorder %s256, %s257
    %p266 = scmp.eq.s32.totalorder %s78, 0
    %p267 = por %p265, %p266
    %p268 = scmp.ne.s32.totalorder %s256, %s257
    %p269 = scmp.eq.s32.totalorder %s79, 1
    %p270 = por %p268, %p269
    %p272 = scmp.ne.s32.totalorder %s257, %s271
    %p273 = scmp.eq.s32.totalorder %s79, 0
    %p274 = por %p272, %p273
    %s276 = sadd.s32 %s275, 1
    %p279 = scmp.eq.s32.totalorder %s73, 1
    %p280 = scmp.ne.s32.totalorder %s275, %s277
    %p281 = scmp.eq.s32.totalorder %s73, 0
    %p282 = por %p280, %p281
    %p283 = scmp.ne.s32.totalorder %s275, %s277
    %p284 = scmp.eq.s32.totalorder %s78, 1
    %p285 = por %p283, %p284
    %p286 = scmp.ne.s32.totalorder %s277, %s278
    %p287 = scmp.eq.s32.totalorder %s78, 0
    %p288 = por %p286, %p287
    %p289 = scmp.ne.s32.totalorder %s277, %s278
    %p290 = scmp.eq.s32.totalorder %s79, 1
    %p291 = por %p289, %p290
    %p293 = scmp.ne.s32.totalorder %s278, %s292
    %p294 = scmp.eq.s32.totalorder %s79, 0
    %p295 = por %p293, %p294
    %s297 = sadd.s32 %s296, 1
    %p300 = scmp.eq.s32.totalorder %s73, 1
    %p301 = scmp.ne.s32.totalorder %s296, %s298
    %p302 = scmp.eq.s32.totalorder %s73, 0
    %p303 = por %p301, %p302
    %p304 = scmp.ne.s32.totalorder %s296, %s298
    %p305 = scmp.eq.s32.totalorder %s78, 1
    %p306 = por %p304, %p305
    %p307 = scmp.ne.s32.totalorder %s298, %s299
    %p308 = scmp.eq.s32.totalorder %s78, 0
    %p309 = por %p307, %p308
    %p310 = scmp.ne.s32.totalorder %s298, %s299
    %p311 = scmp.eq.s32.totalorder %s79, 1
    %p312 = por %p310, %p311
    %p314 = scmp.ne.s32.totalorder %s299, %s313
    %p315 = scmp.eq.s32.totalorder %s79, 0
    %p316 = por %p314, %p315
    %s318 = sadd.s32 %s317, 1
    %p321 = scmp.eq.s32.totalorder %s73, 1
    %p322 = scmp.ne.s32.totalorder %s317, %s319
    %p323 = scmp.eq.s32.totalorder %s73, 0
    %p324 = por %p322, %p323
    %p325 = scmp.ne.s32.totalorder %s317, %s319
    %p326 = scmp.eq.s32.totalorder %s78, 1
    %p327 = por %p325, %p326
    %p328 = scmp.ne.s32.totalorder %s319, %s320
    %p329 = scmp.eq.s32.totalorder %s78, 0
    %p330 = por %p328, %p329
    %p331 = scmp.ne.s32.totalorder %s319, %s320
    %p332 = scmp.eq.s32.totalorder %s79, 1
    %p333 = por %p331, %p332
    %p335 = scmp.ne.s32.totalorder %s320, %s334
    %p336 = scmp.eq.s32.totalorder %s79, 0
    %p337 = por %p335, %p336
    %s339 = sadd.s32 %s338, 1
    %p342 = scmp.eq.s32.totalorder %s73, 1
    %p343 = scmp.ne.s32.totalorder %s338, %s340
    %p344 = scmp.eq.s32.totalorder %s73, 0
    %p345 = por %p343, %p344
    %p346 = scmp.ne.s32.totalorder %s338, %s340
    %p347 = scmp.eq.s32.totalorder %s78, 1
    %p348 = por %p346, %p347
    %p349 = scmp.ne.s32.totalorder %s340, %s341
    %p350 = scmp.eq.s32.totalorder %s78, 0
    %p351 = por %p349, %p350
    %p352 = scmp.ne.s32.totalorder %s340, %s341
    %p353 = scmp.eq.s32.totalorder %s79, 1
    %p354 = por %p352, %p353
    %p356 = scmp.ne.s32.totalorder %s341, %s355
    %p357 = scmp.eq.s32.totalorder %s79, 0
    %p358 = por %p356, %p357
    %s360 = sadd.s32 %s359, 1
    %p363 = scmp.eq.s32.totalorder %s73, 1
    %p364 = scmp.ne.s32.totalorder %s359, %s361
    %p365 = scmp.eq.s32.totalorder %s73, 0
    %p366 = por %p364, %p365
    %p367 = scmp.ne.s32.totalorder %s359, %s361
    %p368 = scmp.eq.s32.totalorder %s78, 1
    %p369 = por %p367, %p368
    %p370 = scmp.ne.s32.totalorder %s361, %s362
    %p371 = scmp.eq.s32.totalorder %s78, 0
    %p372 = por %p370, %p371
    %p373 = scmp.ne.s32.totalorder %s361, %s362
    %p374 = scmp.eq.s32.totalorder %s79, 1
    %p375 = por %p373, %p374
    %p377 = scmp.ne.s32.totalorder %s362, %s376
    %p378 = scmp.eq.s32.totalorder %s79, 0
    %p379 = por %p377, %p378
    %s381 = sadd.s32 %s380, 1
    %p384 = scmp.eq.s32.totalorder %s73, 1
    %p385 = scmp.ne.s32.totalorder %s380, %s382
    %p386 = scmp.eq.s32.totalorder %s73, 0
    %p387 = por %p385, %p386
    %p388 = scmp.ne.s32.totalorder %s380, %s382
    %p389 = scmp.eq.s32.totalorder %s78, 1
    %p390 = por %p388, %p389
    %p391 = scmp.ne.s32.totalorder %s382, %s383
    %p392 = scmp.eq.s32.totalorder %s78, 0
    %p393 = por %p391, %p392
    %p394 = scmp.ne.s32.totalorder %s382, %s383
    %p395 = scmp.eq.s32.totalorder %s79, 1
    %p396 = por %p394, %p395
    %p398 = scmp.ne.s32.totalorder %s383, %s397
    %p399 = scmp.eq.s32.totalorder %s79, 0
    %p400 = por %p398, %p399
    %s402 = sadd.s32 %s401, 1
    %p405 = scmp.eq.s32.totalorder %s73, 1
    %p406 = scmp.ne.s32.totalorder %s401, %s403
    %p407 = scmp.eq.s32.totalorder %s73, 0
    %p408 = por %p406, %p407
    %p409 = scmp.ne.s32.totalorder %s401, %s403
    %p410 = scmp.eq.s32.totalorder %s78, 1
    %p411 = por %p409, %p410
    %p412 = scmp.ne.s32.totalorder %s403, %s404
    %p413 = scmp.eq.s32.totalorder %s78, 0
    %p414 = por %p412, %p413
    %p415 = scmp.ne.s32.totalorder %s403, %s404
    %p416 = scmp.eq.s32.totalorder %s79, 1
    %p417 = por %p415, %p416
    %p419 = scmp.ne.s32.totalorder %s404, %s418
    %p420 = scmp.eq.s32.totalorder %s79, 0
    %p421 = por %p419, %p420
    %s423 = sadd.s32 %s422, 1
    %p426 = scmp.eq.s32.totalorder %s73, 1
    %p427 = scmp.ne.s32.totalorder %s422, %s424
    %p428 = scmp.eq.s32.totalorder %s73, 0
    %p429 = por %p427, %p428
    %p430 = scmp.ne.s32.totalorder %s422, %s424
    %p431 = scmp.eq.s32.totalorder %s78, 1
    %p432 = por %p430, %p431
    %p433 = scmp.ne.s32.totalorder %s424, %s425
    %p434 = scmp.eq.s32.totalorder %s78, 0
    %p435 = por %p433, %p434
    %p436 = scmp.ne.s32.totalorder %s424, %s425
    %p437 = scmp.eq.s32.totalorder %s79, 1
    %p438 = por %p436, %p437
    %p440 = scmp.ne.s32.totalorder %s425, %s439
    %p441 = scmp.eq.s32.totalorder %s79, 0
    %p442 = por %p440, %p441
    %s444 = sadd.s32 %s443, 1
    %p447 = scmp.eq.s32.totalorder %s73, 1
    %p448 = scmp.ne.s32.totalorder %s443, %s445
    %p449 = scmp.eq.s32.totalorder %s73, 0
    %p450 = por %p448, %p449
    %p451 = scmp.ne.s32.totalorder %s443, %s445
    %p452 = scmp.eq.s32.totalorder %s78, 1
    %p453 = por %p451, %p452
    %p454 = scmp.ne.s32.totalorder %s445, %s446
    %p455 = scmp.eq.s32.totalorder %s78, 0
    %p456 = por %p454, %p455
    %p457 = scmp.ne.s32.totalorder %s445, %s446
    %p458 = scmp.eq.s32.totalorder %s79, 1
    %p459 = por %p457, %p458
    %p461 = scmp.ne.s32.totalorder %s446, %s460
    %p462 = scmp.eq.s32.totalorder %s79, 0
    %p463 = por %p461, %p462
    %s465 = sadd.s32 %s464, 1
    %p468 = scmp.eq.s32.totalorder %s73, 1
    %p469 = scmp.ne.s32.totalorder %s464, %s466
    %p470 = scmp.eq.s32.totalorder %s73, 0
    %p471 = por %p469, %p470
    %p472 = scmp.ne.s32.totalorder %s464, %s466
    %p473 = scmp.eq.s32.totalorder %s78, 1
    %p474 = por %p472, %p473
    %p475 = scmp.ne.s32.totalorder %s466, %s467
    %p476 = scmp.eq.s32.totalorder %s78, 0
    %p477 = por %p475, %p476
    %p478 = scmp.ne.s32.totalorder %s466, %s467
    %p479 = scmp.eq.s32.totalorder %s79, 1
    %p480 = por %p478, %p479
    %p482 = scmp.ne.s32.totalorder %s467, %s481
    %p483 = scmp.eq.s32.totalorder %s79, 0
    %p484 = por %p482, %p483
    %s486 = sadd.s32 %s485, 1
    %p489 = scmp.eq.s32.totalorder %s73, 1
    %p490 = scmp.ne.s32.totalorder %s485, %s487
    %p491 = scmp.eq.s32.totalorder %s73, 0
    %p492 = por %p490, %p491
    %p493 = scmp.ne.s32.totalorder %s485, %s487
    %p494 = scmp.eq.s32.totalorder %s78, 1
    %p495 = por %p493, %p494
    %p496 = scmp.ne.s32.totalorder %s487, %s488
    %p497 = scmp.eq.s32.totalorder %s78, 0
    %p498 = por %p496, %p497
    %p499 = scmp.ne.s32.totalorder %s487, %s488
    %p500 = scmp.eq.s32.totalorder %s79, 1
    %p501 = por %p499, %p500
    %p503 = scmp.ne.s32.totalorder %s488, %s502
    %p504 = scmp.eq.s32.totalorder %s79, 0
    %p505 = por %p503, %p504
    %s507 = sadd.s32 %s506, 1
    %p510 = scmp.eq.s32.totalorder %s73, 1
    %p511 = scmp.ne.s32.totalorder %s506, %s508
    %p512 = scmp.eq.s32.totalorder %s73, 0
    %p513 = por %p511, %p512
    %p514 = scmp.ne.s32.totalorder %s506, %s508
    %p515 = scmp.eq.s32.totalorder %s78, 1
    %p516 = por %p514, %p515
    %p517 = scmp.ne.s32.totalorder %s508, %s509
    %p518 = scmp.eq.s32.totalorder %s78, 0
    %p519 = por %p517, %p518
    %p520 = scmp.ne.s32.totalorder %s508, %s509
    %p521 = scmp.eq.s32.totalorder %s79, 1
    %p522 = por %p520, %p521
    %p524 = scmp.ne.s32.totalorder %s509, %s523
    %p525 = scmp.eq.s32.totalorder %s79, 0
    %p526 = por %p524, %p525
    %s528 = sadd.s32 %s527, 1
    %p531 = scmp.eq.s32.totalorder %s73, 1
    %p532 = scmp.ne.s32.totalorder %s527, %s529
    %p533 = scmp.eq.s32.totalorder %s73, 0
    %p534 = por %p532, %p533
    %p535 = scmp.ne.s32.totalorder %s527, %s529
    %p536 = scmp.eq.s32.totalorder %s78, 1
    %p537 = por %p535, %p536
    %p538 = scmp.ne.s32.totalorder %s529, %s530
    %p539 = scmp.eq.s32.totalorder %s78, 0
    %p540 = por %p538, %p539
    %p541 = scmp.ne.s32.totalorder %s529, %s530
    %p542 = scmp.eq.s32.totalorder %s79, 1
    %p543 = por %p541, %p542
    %p545 = scmp.ne.s32.totalorder %s530, %s544
    %p546 = scmp.eq.s32.totalorder %s79, 0
    %p547 = por %p545, %p546
    %s549 = sadd.s32 %s548, 1
    %p552 = scmp.eq.s32.totalorder %s73, 1
    %p553 = scmp.ne.s32.totalorder %s548, %s550
    %p554 = scmp.eq.s32.totalorder %s73, 0
    %p555 = por %p553, %p554
    %p556 = scmp.ne.s32.totalorder %s548, %s550
    %p557 = scmp.eq.s32.totalorder %s78, 1
    %p558 = por %p556, %p557
    %p559 = scmp.ne.s32.totalorder %s550, %s551
    %p560 = scmp.eq.s32.totalorder %s78, 0
    %p561 = por %p559, %p560
    %p562 = scmp.ne.s32.totalorder %s550, %s551
    %p563 = scmp.eq.s32.totalorder %s79, 1
    %p564 = por %p562, %p563
    %p566 = scmp.ne.s32.totalorder %s551, %s565
    %p567 = scmp.eq.s32.totalorder %s79, 0
    %p568 = por %p566, %p567
    %s570 = sadd.s32 %s569, 1
    %p573 = scmp.eq.s32.totalorder %s73, 1
    %p574 = scmp.ne.s32.totalorder %s569, %s571
    %p575 = scmp.eq.s32.totalorder %s73, 0
    %p576 = por %p574, %p575
    %p577 = scmp.ne.s32.totalorder %s569, %s571
    %p578 = scmp.eq.s32.totalorder %s78, 1
    %p579 = por %p577, %p578
    %p580 = scmp.ne.s32.totalorder %s571, %s572
    %p581 = scmp.eq.s32.totalorder %s78, 0
    %p582 = por %p580, %p581
    %p583 = scmp.ne.s32.totalorder %s571, %s572
    %p584 = scmp.eq.s32.totalorder %s79, 1
    %p585 = por %p583, %p584
    %p587 = scmp.ne.s32.totalorder %s572, %s586
    %p588 = scmp.eq.s32.totalorder %s79, 0
    %p589 = por %p587, %p588
    %s591 = sadd.s32 %s590, 1
    %p594 = scmp.eq.s32.totalorder %s73, 1
    %p595 = scmp.ne.s32.totalorder %s590, %s592
    %p596 = scmp.eq.s32.totalorder %s73, 0
    %p597 = por %p595, %p596
    %p598 = scmp.ne.s32.totalorder %s590, %s592
    %p599 = scmp.eq.s32.totalorder %s78, 1
    %p600 = por %p598, %p599
    %p601 = scmp.ne.s32.totalorder %s592, %s593
    %p602 = scmp.eq.s32.totalorder %s78, 0
    %p603 = por %p601, %p602
    %p604 = scmp.ne.s32.totalorder %s592, %s593
    %p605 = scmp.eq.s32.totalorder %s79, 1
    %p606 = por %p604, %p605
    %p608 = scmp.ne.s32.totalorder %s593, %s607
    %p609 = scmp.eq.s32.totalorder %s79, 0
    %p610 = por %p608, %p609
    %s612 = sadd.s32 %s611, 1
    %p615 = scmp.eq.s32.totalorder %s73, 1
    %p616 = scmp.ne.s32.totalorder %s611, %s613
    %p617 = scmp.eq.s32.totalorder %s73, 0
    %p618 = por %p616, %p617
    %p619 = scmp.ne.s32.totalorder %s611, %s613
    %p620 = scmp.eq.s32.totalorder %s78, 1
    %p621 = por %p619, %p620
    %p622 = scmp.ne.s32.totalorder %s613, %s614
    %p623 = scmp.eq.s32.totalorder %s78, 0
    %p624 = por %p622, %p623
    %p625 = scmp.ne.s32.totalorder %s613, %s614
    %p626 = scmp.eq.s32.totalorder %s79, 1
    %p627 = por %p625, %p626
    %p629 = scmp.ne.s32.totalorder %s614, %s628
    %p630 = scmp.eq.s32.totalorder %s79, 0
    %p631 = por %p629, %p630
    %s633 = sadd.s32 %s632, 1
    %p636 = scmp.eq.s32.totalorder %s73, 1
    %p637 = scmp.ne.s32.totalorder %s632, %s634
    %p638 = scmp.eq.s32.totalorder %s73, 0
    %p639 = por %p637, %p638
    %p640 = scmp.ne.s32.totalorder %s632, %s634
    %p641 = scmp.eq.s32.totalorder %s78, 1
    %p642 = por %p640, %p641
    %p643 = scmp.ne.s32.totalorder %s634, %s635
    %p644 = scmp.eq.s32.totalorder %s78, 0
    %p645 = por %p643, %p644
    %p646 = scmp.ne.s32.totalorder %s634, %s635
    %p647 = scmp.eq.s32.totalorder %s79, 1
    %p648 = por %p646, %p647
    %p650 = scmp.ne.s32.totalorder %s635, %s649
    %p651 = scmp.eq.s32.totalorder %s79, 0
    %p652 = por %p650, %p651
    %s654 = sadd.s32 %s653, 1
    %p657 = scmp.eq.s32.totalorder %s73, 1
    %p658 = scmp.ne.s32.totalorder %s653, %s655
    %p659 = scmp.eq.s32.totalorder %s73, 0
    %p660 = por %p658, %p659
    %p661 = scmp.ne.s32.totalorder %s653, %s655
    %p662 = scmp.eq.s32.totalorder %s78, 1
    %p663 = por %p661, %p662
    %p664 = scmp.ne.s32.totalorder %s655, %s656
    %p665 = scmp.eq.s32.totalorder %s78, 0
    %p666 = por %p664, %p665
    %p667 = scmp.ne.s32.totalorder %s655, %s656
    %p668 = scmp.eq.s32.totalorder %s79, 1
    %p669 = por %p667, %p668
    %p671 = scmp.ne.s32.totalorder %s656, %s670
    %p672 = scmp.eq.s32.totalorder %s79, 0
    %p673 = por %p671, %p672
    %s675 = sadd.s32 %s674, 1
    %p678 = scmp.eq.s32.totalorder %s73, 1
    %p679 = scmp.ne.s32.totalorder %s674, %s676
    %p680 = scmp.eq.s32.totalorder %s73, 0
    %p681 = por %p679, %p680
    %p682 = scmp.ne.s32.totalorder %s674, %s676
    %p683 = scmp.eq.s32.totalorder %s78, 1
    %p684 = por %p682, %p683
    %p685 = scmp.ne.s32.totalorder %s676, %s677
    %p686 = scmp.eq.s32.totalorder %s78, 0
    %p687 = por %p685, %p686
    %p688 = scmp.ne.s32.totalorder %s676, %s677
    %p689 = scmp.eq.s32.totalorder %s79, 1
    %p690 = por %p688, %p689
    %p692 = scmp.ne.s32.totalorder %s677, %s691
    %p693 = scmp.eq.s32.totalorder %s79, 0
    %p694 = por %p692, %p693
    %s696 = sadd.s32 %s695, 1
    %p699 = scmp.eq.s32.totalorder %s73, 1
    %p700 = scmp.ne.s32.totalorder %s695, %s697
    %p701 = scmp.eq.s32.totalorder %s73, 0
    %p702 = por %p700, %p701
    %p703 = scmp.ne.s32.totalorder %s695, %s697
    %p704 = scmp.eq.s32.totalorder %s78, 1
    %p705 = por %p703, %p704
    %p706 = scmp.ne.s32.totalorder %s697, %s698
    %p707 = scmp.eq.s32.totalorder %s78, 0
    %p708 = por %p706, %p707
    %p709 = scmp.ne.s32.totalorder %s697, %s698
    %p710 = scmp.eq.s32.totalorder %s79, 1
    %p711 = por %p709, %p710
    %p713 = scmp.ne.s32.totalorder %s698, %s712
    %p714 = scmp.eq.s32.totalorder %s79, 0
    %p715 = por %p713, %p714
    %s717 = sadd.s32 %s716, 1
    %p720 = scmp.eq.s32.totalorder %s73, 1
    %p721 = scmp.ne.s32.totalorder %s716, %s718
    %p722 = scmp.eq.s32.totalorder %s73, 0
    %p723 = por %p721, %p722
    %p724 = scmp.ne.s32.totalorder %s716, %s718
    %p725 = scmp.eq.s32.totalorder %s78, 1
    %p726 = por %p724, %p725
    %p727 = scmp.ne.s32.totalorder %s718, %s719
    %p728 = scmp.eq.s32.totalorder %s78, 0
    %p729 = por %p727, %p728
    %p730 = scmp.ne.s32.totalorder %s718, %s719
    %p731 = scmp.eq.s32.totalorder %s79, 1
    %p732 = por %p730, %p731
    %p734 = scmp.ne.s32.totalorder %s719, %s733
    %p735 = scmp.eq.s32.totalorder %s79, 0
    %p736 = por %p734, %p735
    %s738 = sadd.s32 %s737, 1
    %p741 = scmp.eq.s32.totalorder %s73, 1
    %p742 = scmp.ne.s32.totalorder %s737, %s739
    %p743 = scmp.eq.s32.totalorder %s73, 0
    %p744 = por %p742, %p743
    %p745 = scmp.ne.s32.totalorder %s737, %s739
    %p746 = scmp.eq.s32.totalorder %s78, 1
    %p747 = por %p745, %p746
    %p748 = scmp.ne.s32.totalorder %s739, %s740
    %p749 = scmp.eq.s32.totalorder %s78, 0
    %p750 = por %p748, %p749
    %p751 = scmp.ne.s32.totalorder %s739, %s740
    %p752 = scmp.eq.s32.totalorder %s79, 1
    %p753 = por %p751, %p752
    %p755 = scmp.ne.s32.totalorder %s740, %s754
    %p756 = scmp.eq.s32.totalorder %s79, 0
    %p757 = por %p755, %p756
    %s759 = sadd.s32 %s758, 1
    %p762 = scmp.eq.s32.totalorder %s73, 1
    %p763 = scmp.ne.s32.totalorder %s758, %s760
    %p764 = scmp.eq.s32.totalorder %s73, 0
    %p765 = por %p763, %p764
    %p766 = scmp.ne.s32.totalorder %s758, %s760
    %p767 = scmp.eq.s32.totalorder %s78, 1
    %p768 = por %p766, %p767
    %p769 = scmp.ne.s32.totalorder %s760, %s761
    %p770 = scmp.eq.s32.totalorder %s78, 0
    %p771 = por %p769, %p770
    %p772 = scmp.ne.s32.totalorder %s760, %s761
    %p773 = scmp.eq.s32.totalorder %s79, 1
    %p774 = por %p772, %p773
    %p776 = scmp.ne.s32.totalorder %s761, %s775
    %p777 = scmp.eq.s32.totalorder %s79, 0
    %p778 = por %p776, %p777
    %s779 = ssub.s32 %s73, %s80
    %p780 = scmp.eq.s32.totalorder %s779, 0
    %s782 = sadd.s32 %s781, 1
    %s783 = scalar_select %p780, %s781, %s782
    %p786 = pneg %p780
    %p787 = scmp.eq.s32.totalorder %s73, 1
    %p788 = por %p786, %p787
    %p789 = scmp.ne.s32.totalorder %s781, %s784
    %p790 = scmp.eq.s32.totalorder %s73, 0
    %p791 = por %p789, %p790
    %p792 = scmp.ne.s32.totalorder %s781, %s784
    %p793 = scmp.eq.s32.totalorder %s78, 1
    %p794 = por %p792, %p793
    %p795 = scmp.ne.s32.totalorder %s784, %s785
    %p796 = scmp.eq.s32.totalorder %s78, 0
    %p797 = por %p795, %p796
    %p798 = scmp.ne.s32.totalorder %s784, %s785
    %p799 = scmp.eq.s32.totalorder %s79, 1
    %p800 = por %p798, %p799
    %p802 = scmp.ne.s32.totalorder %s785, %s801
    %p803 = scmp.eq.s32.totalorder %s79, 0
    %p804 = por %p802, %p803
    %p805 = scmp.le.s32.totalorder 1, %s73
    %p806 = scmp.lt.s32.totalorder %s73, 3
    %p807 = pnand %p805, %p806
    %p808 = pneg %p807
    // Predicated region
    $region9: #{gnn_forward_packed.1} parent=5 // pred_check
      _
    $region10: #{gnn_forward_packed.1} parent=5 // pred_check_branch
      %810 = sbr.rel (%p807) target = $region12
    $region11: #{gnn_forward_packed.1} parent=5 // pred_region
      %s811 = ssub.s32 %s73, 1
      // Predicated region
      $region13: #{gnn_forward_packed.1} parent=11 // pred_check
        %p812 = pneg %p120
      $region14: #{gnn_forward_packed.1} parent=11 // pred_check_branch
        %814 = sbr.rel (%p812) target = $region16
      $region15: #{gnn_forward_packed.1} parent=11 // pred_region
        _
      $region16: #{gnn_forward_packed.1} parent=11 // pred_fallthru
        _
      // Predicated region
      $region17: #{gnn_forward_packed.1} parent=11 // pred_check
        %p815 = pneg %p141
      $region18: #{gnn_forward_packed.1} parent=11 // pred_check_branch
        %817 = sbr.rel (%p815) target = $region20
      $region19: #{gnn_forward_packed.1} parent=11 // pred_region
        _
      $region20: #{gnn_forward_packed.1} parent=11 // pred_fallthru
        _
      // Predicated region
      $region21: #{gnn_forward_packed.1} parent=11 // pred_check
        %p818 = pneg %p162
      $region22: #{gnn_forward_packed.1} parent=11 // pred_check_branch
        %820 = sbr.rel (%p818) target = $region24
      $region23: #{gnn_forward_packed.1} parent=11 // pred_region
        _
      $region24: #{gnn_forward_packed.1} parent=11 // pred_fallthru
        _
      // Predicated region
      $region25: #{gnn_forward_packed.1} parent=11 // pred_check
        %p821 = pneg %p183
      $region26: #{gnn_forward_packed.1} parent=11 // pred_check_branch
        %823 = sbr.rel (%p821) target = $region28
      $region27: #{gnn_forward_packed.1} parent=11 // pred_region
        _
      $region28: #{gnn_forward_packed.1} parent=11 // pred_fallthru
        _
      // Predicated region
      $region29: #{gnn_forward_packed.1} parent=11 // pred_check
        %p824 = pneg %p204
      $region30: #{gnn_forward_packed.1} parent=11 // pred_check_branch
        %826 = sbr.rel (%p824) target = $region32
      $region31: #{gnn_forward_packed.1} parent=11 // pred_region
        _
      $region32: #{gnn_forward_packed.1} parent=11 // pred_fallthru
        _
      // Predicated region
      $region33: #{gnn_forward_packed.1} parent=11 // pred_check
        %p827 = pneg %p225
      $region34: #{gnn_forward_packed.1} parent=11 // pred_check_branch
        %829 = sbr.rel (%p827) target = $region36
      $region35: #{gnn_forward_packed.1} parent=11 // pred_region
        _
      $region36: #{gnn_forward_packed.1} parent=11 // pred_fallthru
        _
      // Predicated region
      $region37: #{gnn_forward_packed.1} parent=11 // pred_check
        %p830 = pneg %p246
      $region38: #{gnn_forward_packed.1} parent=11 // pred_check_branch
        %832 = sbr.rel (%p830) target = $region40
      $region39: #{gnn_forward_packed.1} parent=11 // pred_region
        _
      $region40: #{gnn_forward_packed.1} parent=11 // pred_fallthru
        _
      // Predicated region
      $region41: #{gnn_forward_packed.1} parent=11 // pred_check
        %p833 = pneg %p267
      $region42: #{gnn_forward_packed.1} parent=11 // pred_check_branch
        %835 = sbr.rel (%p833) target = $region44
      $region43: #{gnn_forward_packed.1} parent=11 // pred_region
        _
      $region44: #{gnn_forward_packed.1} parent=11 // pred_fallthru
        _
      // Predicated region
      $region45: #{gnn_forward_packed.1} parent=11 // pred_check
        %p836 = pneg %p288
      $region46: #{gnn_forward_packed.1} parent=11 // pred_check_branch
        %838 = sbr.rel (%p836) target = $region48
      $region47: #{gnn_forward_packed.1} parent=11 // pred_region
        _
      $region48: #{gnn_forward_packed.1} parent=11 // pred_fallthru
        _
      // Predicated region
      $region49: #{gnn_forward_packed.1} parent=11 // pred_check
        %p839 = pneg %p309
      $region50: #{gnn_forward_packed.1} parent=11 // pred_check_branch
        %841 = sbr.rel (%p839) target = $region52
      $region51: #{gnn_forward_packed.1} parent=11 // pred_region
        _
      $region52: #{gnn_forward_packed.1} parent=11 // pred_fallthru
        _
      // Predicated region
      $region53: #{gnn_forward_packed.1} parent=11 // pred_check
        %p842 = pneg %p330
      $region54: #{gnn_forward_packed.1} parent=11 // pred_check_branch
        %844 = sbr.rel (%p842) target = $region56
      $region55: #{gnn_forward_packed.1} parent=11 // pred_region
        _
      $region56: #{gnn_forward_packed.1} parent=11 // pred_fallthru
        _
      // Predicated region
      $region57: #{gnn_forward_packed.1} parent=11 // pred_check
        %p845 = pneg %p351
      $region58: #{gnn_forward_packed.1} parent=11 // pred_check_branch
        %847 = sbr.rel (%p845) target = $region60
      $region59: #{gnn_forward_packed.1} parent=11 // pred_region
        _
      $region60: #{gnn_forward_packed.1} parent=11 // pred_fallthru
        _
      // Predicated region
      $region61: #{gnn_forward_packed.1} parent=11 // pred_check
        %p848 = pneg %p372
      $region62: #{gnn_forward_packed.1} parent=11 // pred_check_branch
        %850 = sbr.rel (%p848) target = $region64
      $region63: #{gnn_forward_packed.1} parent=11 // pred_region
        _
      $region64: #{gnn_forward_packed.1} parent=11 // pred_fallthru
        _
      // Predicated region
      $region65: #{gnn_forward_packed.1} parent=11 // pred_check
        %p851 = pneg %p393
      $region66: #{gnn_forward_packed.1} parent=11 // pred_check_branch
        %853 = sbr.rel (%p851) target = $region68
      $region67: #{gnn_forward_packed.1} parent=11 // pred_region
        _
      $region68: #{gnn_forward_packed.1} parent=11 // pred_fallthru
        _
      // Predicated region
      $region69: #{gnn_forward_packed.1} parent=11 // pred_check
        %p854 = pneg %p414
      $region70: #{gnn_forward_packed.1} parent=11 // pred_check_branch
        %856 = sbr.rel (%p854) target = $region72
      $region71: #{gnn_forward_packed.1} parent=11 // pred_region
        _
      $region72: #{gnn_forward_packed.1} parent=11 // pred_fallthru
        _
      // Predicated region
      $region73: #{gnn_forward_packed.1} parent=11 // pred_check
        %p857 = pneg %p435
      $region74: #{gnn_forward_packed.1} parent=11 // pred_check_branch
        %859 = sbr.rel (%p857) target = $region76
      $region75: #{gnn_forward_packed.1} parent=11 // pred_region
        _
      $region76: #{gnn_forward_packed.1} parent=11 // pred_fallthru
        _
      // Predicated region
      $region77: #{gnn_forward_packed.1} parent=11 // pred_check
        %p860 = pneg %p456
      $region78: #{gnn_forward_packed.1} parent=11 // pred_check_branch
        %862 = sbr.rel (%p860) target = $region80
      $region79: #{gnn_forward_packed.1} parent=11 // pred_region
        _
      $region80: #{gnn_forward_packed.1} parent=11 // pred_fallthru
        _
      // Predicated region
      $region81: #{gnn_forward_packed.1} parent=11 // pred_check
        %p863 = pneg %p477
      $region82: #{gnn_forward_packed.1} parent=11 // pred_check_branch
        %865 = sbr.rel (%p863) target = $region84
      $region83: #{gnn_forward_packed.1} parent=11 // pred_region
        _
      $region84: #{gnn_forward_packed.1} parent=11 // pred_fallthru
        _
      // Predicated region
      $region85: #{gnn_forward_packed.1} parent=11 // pred_check
        %p866 = pneg %p498
      $region86: #{gnn_forward_packed.1} parent=11 // pred_check_branch
        %868 = sbr.rel (%p866) target = $region88
      $region87: #{gnn_forward_packed.1} parent=11 // pred_region
        _
      $region88: #{gnn_forward_packed.1} parent=11 // pred_fallthru
        _
      // Predicated region
      $region89: #{gnn_forward_packed.1} parent=11 // pred_check
        %p869 = pneg %p519
      $region90: #{gnn_forward_packed.1} parent=11 // pred_check_branch
        %871 = sbr.rel (%p869) target = $region92
      $region91: #{gnn_forward_packed.1} parent=11 // pred_region
        _
      $region92: #{gnn_forward_packed.1} parent=11 // pred_fallthru
        _
      // Predicated region
      $region93: #{gnn_forward_packed.1} parent=11 // pred_check
        %p872 = pneg %p540
      $region94: #{gnn_forward_packed.1} parent=11 // pred_check_branch
        %874 = sbr.rel (%p872) target = $region96
      $region95: #{gnn_forward_packed.1} parent=11 // pred_region
        _
      $region96: #{gnn_forward_packed.1} parent=11 // pred_fallthru
        _
      // Predicated region
      $region97: #{gnn_forward_packed.1} parent=11 // pred_check
        %p875 = pneg %p561
      $region98: #{gnn_forward_packed.1} parent=11 // pred_check_branch
        %877 = sbr.rel (%p875) target = $region100
      $region99: #{gnn_forward_packed.1} parent=11 // pred_region
        _
      $region100: #{gnn_forward_packed.1} parent=11 // pred_fallthru
        _
      // Predicated region
      $region101: #{gnn_forward_packed.1} parent=11 // pred_check
        %p878 = pneg %p582
      $region102: #{gnn_forward_packed.1} parent=11 // pred_check_branch
        %880 = sbr.rel (%p878) target = $region104
      $region103: #{gnn_forward_packed.1} parent=11 // pred_region
        _
      $region104: #{gnn_forward_packed.1} parent=11 // pred_fallthru
        _
      // Predicated region
      $region105: #{gnn_forward_packed.1} parent=11 // pred_check
        %p881 = pneg %p603
      $region106: #{gnn_forward_packed.1} parent=11 // pred_check_branch
        %883 = sbr.rel (%p881) target = $region108
      $region107: #{gnn_forward_packed.1} parent=11 // pred_region
        _
      $region108: #{gnn_forward_packed.1} parent=11 // pred_fallthru
        _
      // Predicated region
      $region109: #{gnn_forward_packed.1} parent=11 // pred_check
        %p884 = pneg %p624
      $region110: #{gnn_forward_packed.1} parent=11 // pred_check_branch
        %886 = sbr.rel (%p884) target = $region112
      $region111: #{gnn_forward_packed.1} parent=11 // pred_region
        _
      $region112: #{gnn_forward_packed.1} parent=11 // pred_fallthru
        _
      // Predicated region
      $region113: #{gnn_forward_packed.1} parent=11 // pred_check
        %p887 = pneg %p645
      $region114: #{gnn_forward_packed.1} parent=11 // pred_check_branch
        %889 = sbr.rel (%p887) target = $region116
      $region115: #{gnn_forward_packed.1} parent=11 // pred_region
        _
      $region116: #{gnn_forward_packed.1} parent=11 // pred_fallthru
        _
      // Predicated region
      $region117: #{gnn_forward_packed.1} parent=11 // pred_check
        %p890 = pneg %p666
      $region118: #{gnn_forward_packed.1} parent=11 // pred_check_branch
        %892 = sbr.rel (%p890) target = $region120
      $region119: #{gnn_forward_packed.1} parent=11 // pred_region
        _
      $region120: #{gnn_forward_packed.1} parent=11 // pred_fallthru
        _
      // Predicated region
      $region121: #{gnn_forward_packed.1} parent=11 // pred_check
        %p893 = pneg %p687
      $region122: #{gnn_forward_packed.1} parent=11 // pred_check_branch
        %895 = sbr.rel (%p893) target = $region124
      $region123: #{gnn_forward_packed.1} parent=11 // pred_region
        _
      $region124: #{gnn_forward_packed.1} parent=11 // pred_fallthru
        _
      // Predicated region
      $region125: #{gnn_forward_packed.1} parent=11 // pred_check
        %p896 = pneg %p708
      $region126: #{gnn_forward_packed.1} parent=11 // pred_check_branch
        %898 = sbr.rel (%p896) target = $region128
      $region127: #{gnn_forward_packed.1} parent=11 // pred_region
        _
      $region128: #{gnn_forward_packed.1} parent=11 // pred_fallthru
        _
      // Predicated region
      $region129: #{gnn_forward_packed.1} parent=11 // pred_check
        %p899 = pneg %p729
      $region130: #{gnn_forward_packed.1} parent=11 // pred_check_branch
        %901 = sbr.rel (%p899) target = $region132
      $region131: #{gnn_forward_packed.1} parent=11 // pred_region
        _
      $region132: #{gnn_forward_packed.1} parent=11 // pred_fallthru
        _
      // Predicated region
      $region133: #{gnn_forward_packed.1} parent=11 // pred_check
        %p902 = pneg %p750
      $region134: #{gnn_forward_packed.1} parent=11 // pred_check_branch
        %904 = sbr.rel (%p902) target = $region136
      $region135: #{gnn_forward_packed.1} parent=11 // pred_region
        _
      $region136: #{gnn_forward_packed.1} parent=11 // pred_fallthru
        _
      // Predicated region
      $region137: #{gnn_forward_packed.1} parent=11 // pred_check
        %p905 = pneg %p771
      $region138: #{gnn_forward_packed.1} parent=11 // pred_check_branch
        %907 = sbr.rel (%p905) target = $region140
      $region139: #{gnn_forward_packed.1} parent=11 // pred_region
        _
      $region140: #{gnn_forward_packed.1} parent=11 // pred_fallthru
        _
    $region12: #{gnn_forward_packed.1} parent=5 // pred_fallthru
      _
    %p908 = scmp.lt.s32.totalorder %s73, 2
    // Predicated region
    $region141: #{gnn_forward_packed.1} parent=5 // pred_check
      %p909 = pneg %p908
    $region142: #{gnn_forward_packed.1} parent=5 // pred_check_branch
      %911 = sbr.rel (%p909) target = $region144
    $region143: #{gnn_forward_packed.1} parent=5 // pred_region
      // Predicated region
      $region145: #{gnn_forward_packed.1} parent=143 // pred_check
        %p912 = pneg %p93
      $region146: #{gnn_forward_packed.1} parent=143 // pred_check_branch
        %914 = sbr.rel (%p912) target = $region148
      $region147: #{gnn_forward_packed.1} parent=143 // pred_region
        %s915 = smul.u32 8, %s73
        %p916 = scmp.lt.s32.totalorder %s915, 15
        %s917 = scalar_select %p916, %s915, 15
        %s918 = smul.addr %s917, 2
        %s919 = smul.addr %s918, 8
        %s920 = scalar_lea.vmem %s1, %s919
        %s921 = smul.u32 8, %s73
      $region148: #{gnn_forward_packed.1} parent=143 // pred_fallthru
        _
    $region144: #{gnn_forward_packed.1} parent=5 // pred_fallthru
      _
    %p922 = scmp.le.s32.totalorder 1, %s73
    %p923 = scmp.lt.s32.totalorder %s73, 3
    %p924 = pnand %p922, %p923
    %p925 = pneg %p924
    // Predicated region
    $region149: #{gnn_forward_packed.1} parent=5 // pred_check
      _
    $region150: #{gnn_forward_packed.1} parent=5 // pred_check_branch
      %927 = sbr.rel (%p924) target = $region152
    $region151: #{gnn_forward_packed.1} parent=5 // pred_region
      %s928 = ssub.s32 %s73, 1
      %s929 = smul.u32 8, %s78
      %p930 = scmp.lt.s32.totalorder %s929, 15
      %s931 = scalar_select %p930, %s929, 15
      %s932 = smul.addr %s931, 2
      %s933 = smul.addr %s932, 8
      %s934 = scalar_lea.vmem %s1, %s933
      %p935 = pneg %p99
      %p936 = pneg %p96
      %p937 = pneg %p120
      %p938 = pneg %p117
      %p939 = pneg %p141
      %p940 = pneg %p138
      %p941 = pneg %p162
      %p942 = pneg %p159
      %p943 = pneg %p183
      %p944 = pneg %p180
      %p945 = pneg %p204
      %p946 = pneg %p201
      %p947 = pneg %p225
      %p948 = pneg %p222
      %p949 = pneg %p246
      %p950 = pneg %p243
      %p951 = pneg %p267
      %p952 = pneg %p264
      %p953 = pneg %p288
      %p954 = pneg %p285
      %p955 = pneg %p309
      %p956 = pneg %p306
      %p957 = pneg %p330
      %p958 = pneg %p327
      %p959 = pneg %p351
      %p960 = pneg %p348
      %p961 = pneg %p372
      %p962 = pneg %p369
      %p963 = pneg %p393
      %p964 = pneg %p390
      %p965 = pneg %p414
      %p966 = pneg %p411
      %p967 = pneg %p435
      %p968 = pneg %p432
      %p969 = pneg %p456
      %p970 = pneg %p453
      %p971 = pneg %p477
      %p972 = pneg %p474
      %p973 = pneg %p498
      %p974 = pneg %p495
      %p975 = pneg %p519
      %p976 = pneg %p516
      %p977 = pneg %p540
      %p978 = pneg %p537
      %p979 = pneg %p561
      %p980 = pneg %p558
      %p981 = pneg %p582
      %p982 = pneg %p579
      %p983 = pneg %p603
      %p984 = pneg %p600
      %p985 = pneg %p624
      %p986 = pneg %p621
      %p987 = pneg %p645
      %p988 = pneg %p642
      %p989 = pneg %p666
      %p990 = pneg %p663
      %p991 = pneg %p687
      %p992 = pneg %p684
      %p993 = pneg %p708
      %p994 = pneg %p705
      %p995 = pneg %p729
      %p996 = pneg %p726
      %p997 = pneg %p750
      %p998 = pneg %p747
      %p999 = pneg %p771
      %p1000 = pneg %p768
      %p1001 = pneg %p797
      %p1002 = pneg %p794
      %s1003 = smul.u32 8, %s78
      %p1004 = scmp.lt.s32.totalorder %s1003, 15
      %s1005 = scalar_select %p1004, %s1003, 15
      %s1006 = smul.addr %s1005, 2
      %s1007 = smul.addr %s1006, 8
      %s1008 = scalar_lea.vmem %s67, %s1007
      %s1009 = smul.u32 8, %s78
      %p1010 = scmp.lt.s32.totalorder %s1009, 15
      %s1011 = scalar_select %p1010, %s1009, 15
      %s1012 = smul.addr %s1011, 2
      %s1013 = smul.addr %s1012, 8
      %s1014 = scalar_lea.vmem %s1, %s1013
      %s1015 = smul.u32 8, %s78
      %s1016 = smul.u32 8, %s78
      %p1017 = scmp.lt.s32.totalorder %s1016, 15
      %s1018 = scalar_select %p1017, %s1016, 15
      %s1019 = smul.addr %s1018, 2
      %s1020 = smul.addr %s1019, 8
      %s1021 = scalar_lea.vmem %s67, %s1020
      %s1022 = smul.u32 8, %s78
      %v1023 = vld [vmem:[%s1014] sm:$0xff]
      %v1024 = vld [vmem:[%s1014 + $0x8] sm:$0xff]
      %v1025 = vld [vmem:[%s1014 + $0x10] sm:$0xff]
      %v1026 = vld [vmem:[%s1014 + $0x18] sm:$0xff]
      %v1027 = vld [vmem:[%s1014 + $0x20] sm:$0xff]
      %v1028 = vld [vmem:[%s1014 + $0x28] sm:$0xff]
      %v1029 = vld [vmem:[%s1014 + $0x30] sm:$0xff]
      %v1030 = vld [vmem:[%s1014 + $0x38] sm:$0xff]
      %v1031 = vld [vmem:[%s1014 + $0x40] sm:$0xff]
      %v1032 = vld [vmem:[%s1014 + $0x48] sm:$0xff]
      %v1033 = vld [vmem:[%s1014 + $0x50] sm:$0xff]
      %v1034 = vld [vmem:[%s1014 + $0x58] sm:$0xff]
      %v1035 = vld [vmem:[%s1014 + $0x60] sm:$0xff]
      %v1036 = vld [vmem:[%s1014 + $0x68] sm:$0xff]
      %v1037 = vld [vmem:[%s1014 + $0x70] sm:$0xff]
      %v1038 = vld [vmem:[%s1014 + $0x78] sm:$0xff]
      %v1039 = vld [vmem:[%s3] sm:$0xff]
      %v1040 = vld [vmem:[%s3 + $0x8] sm:$0xff]
      %v1041 = vld [vmem:[%s5] sm:$0x1]
      %v1043 = vlaneseq
      %v1044 = vshrl.u32 %v1043, 7
      %v1045 = vsub.s32 0, %v1044
      %v1046 = vrot.slane %v1041, %v1045
      %1056 = vrot.lane.b32.xlu0 %v1023, 64
      %v1057 = vpop.permute.xlu0 %1056
      %1058 = vrot.lane.b32.xlu0 %v1025, 64
      %v1059 = vpop.permute.xlu0 %1058
      %1060 = vrot.lane.b32.xlu0 %v1027, 64
      %v1061 = vpop.permute.xlu0 %1060
      %1062 = vrot.lane.b32.xlu0 %v1029, 64
      %v1063 = vpop.permute.xlu0 %1062
      %1064 = vrot.lane.b32.xlu0 %v1031, 64
      %v1065 = vpop.permute.xlu0 %1064
      %1066 = vrot.lane.b32.xlu0 %v1033, 64
      %v1067 = vpop.permute.xlu0 %1066
      %1068 = vrot.lane.b32.xlu0 %v1035, 64
      %v1069 = vpop.permute.xlu0 %1068
      %1070 = vrot.lane.b32.xlu0 %v1037, 64
      %v1071 = vpop.permute.xlu0 %1070
      %vm1072 = vcmask 130048
      %v1073 = vsel %vm1072, %v1057, 0
      %v1075 = vsel %vm1072, %v1059, 0
      %v1077 = vsel %vm1072, %v1061, 0
      %v1079 = vsel %vm1072, %v1063, 0
      %v1081 = vsel %vm1072, %v1065, 0
      %v1083 = vsel %vm1072, %v1067, 0
      %v1085 = vsel %vm1072, %v1069, 0
      %v1087 = vsel %vm1072, %v1071, 0
      %1089 = vmatprep.subr.mxu0 0.0
      %1090 = vmatpush1.msra.mxu0 %v1039
      %1091 = vmatprep.subr.mxu0 0.0
      %1092 = vmatpush1.msra.mxu0 %v1040
      %1093 = vmatprep.subr.mxu0 0.0
      %1094 = vmatpush1.msra.mxu0 0.0
      %1095 = vmatprep.subr.mxu0 0.0
      %1096 = vmatpush1.msra.mxu0 0.0
      %1097 = vmatprep.subr.mxu0 0.0
      %1098 = vmatpush1.msra.mxu0 0.0
      %1099 = vmatprep.subr.mxu0 0.0
      %1100 = vmatpush1.msra.mxu0 0.0
      %1101 = vmatprep.subr.mxu0 0.0
      %1102 = vmatpush1.msra.mxu0 0.0
      %1103 = vmatprep.subr.mxu0 0.0
      %1104 = vmatpush1.msra.mxu0 0.0
      %1105 = vmatprep.subr.mxu0 0.0
      %1106 = vmatpush1.msra.mxu0 0.0
      %1107 = vmatprep.subr.mxu0 0.0
      %1108 = vmatpush1.msra.mxu0 0.0
      %1109 = vmatprep.subr.mxu0 0.0
      %1110 = vmatpush1.msra.mxu0 0.0
      %1111 = vmatprep.subr.mxu0 0.0
      %1112 = vmatpush1.msra.mxu0 0.0
      %1113 = vmatprep.subr.mxu0 0.0
      %1114 = vmatpush1.msra.mxu0 0.0
      %1115 = vmatprep.subr.mxu0 0.0
      %1116 = vmatpush1.msra.mxu0 0.0
      %1117 = vmatprep.subr.mxu0 0.0
      %1118 = vmatpush1.msra.mxu0 0.0
      %1119 = vmatprep.subr.mxu0 0.0
      %1120 = vmatpush1.msra.mxu0 0.0
      %1121 = vmatprep.subr.mxu0 0.0
      %1122 = vmatpush1.msra.mxu0 0.0
      %1123 = vmatprep.subr.mxu0 0.0
      %1124 = vmatpush1.msra.mxu0 0.0
      %1125 = vmatprep.subr.mxu0 0.0
      %1126 = vmatpush1.msra.mxu0 0.0
      %1127 = vmatprep.subr.mxu0 0.0
      %1128 = vmatpush1.msra.mxu0 0.0
      %1129 = vmatprep.subr.mxu0 0.0
      %1130 = vmatpush1.msra.mxu0 0.0
      %1131 = vmatprep.subr.mxu0 0.0
      %1132 = vmatpush1.msra.mxu0 0.0
      %1133 = vmatprep.subr.mxu0 0.0
      %1134 = vmatpush1.msra.mxu0 0.0
      %1135 = vmatprep.subr.mxu0 0.0
      %1136 = vmatpush1.msra.mxu0 0.0
      %1137 = vmatprep.subr.mxu0 0.0
      %1138 = vmatpush1.msra.mxu0 0.0
      %1139 = vmatprep.subr.mxu0 0.0
      %1140 = vmatpush1.msra.mxu0 0.0
      %1141 = vmatprep.subr.mxu0 0.0
      %1142 = vmatpush1.msra.mxu0 0.0
      %1143 = vmatprep.subr.mxu0 0.0
      %1144 = vmatpush1.msra.mxu0 0.0
      %1145 = vmatprep.subr.mxu0 0.0
      %1146 = vmatpush1.msra.mxu0 0.0
      %1147 = vmatprep.subr.mxu0 0.0
      %1148 = vmatpush1.msra.mxu0 0.0
      %1149 = vmatprep.subr.mxu0 0.0
      %1150 = vmatpush1.msra.mxu0 0.0
      %1151 = vmatprep.subr.mxu0 0.0
      %1152 = vmatpush1.msra.mxu0 0.0
      %1153 = vmatprep.mubr.f32.mxu0 0.0
      %1154 = vmatmul.mubr.f32.gmra.mrb[0].mxu0 %v1073
      %v1155 = vpop.f32.mrb[0].mxu0
      %v1156 = vadd.f32 %v1046, %v1155
      %v1157 = vpop.f32.mrb[0].mxu0
      %1158 = vmatprep.mubr.f32.mxu0 0.0
      %1159 = vmatmul.mubr.f32.gmra.mrb[0].mxu0 %v1075
      %v1160 = vpop.f32.mrb[0].mxu0
      %v1161 = vadd.f32 %v1046, %v1160
      %v1162 = vpop.f32.mrb[0].mxu0
      %1163 = vmatprep.mubr.f32.mxu0 0.0
      %1164 = vmatmul.mubr.f32.gmra.mrb[0].mxu0 %v1077
      %v1165 = vpop.f32.mrb[0].mxu0
      %v1166 = vadd.f32 %v1046, %v1165
      %v1167 = vpop.f32.mrb[0].mxu0
      %1168 = vmatprep.mubr.f32.mxu0 0.0
      %1169 = vmatmul.mubr.f32.gmra.mrb[0].mxu0 %v1079
      %v1170 = vpop.f32.mrb[0].mxu0
      %v1171 = vadd.f32 %v1046, %v1170
      %v1172 = vpop.f32.mrb[0].mxu0
      %1173 = vmatprep.mubr.f32.mxu0 0.0
      %1174 = vmatmul.mubr.f32.gmra.mrb[0].mxu0 %v1081
      %v1175 = vpop.f32.mrb[0].mxu0
      %v1176 = vadd.f32 %v1046, %v1175
      %v1177 = vpop.f32.mrb[0].mxu0
      %1178 = vmatprep.mubr.f32.mxu0 0.0
      %1179 = vmatmul.mubr.f32.gmra.mrb[0].mxu0 %v1083
      %v1180 = vpop.f32.mrb[0].mxu0
      %v1181 = vadd.f32 %v1046, %v1180
      %v1182 = vpop.f32.mrb[0].mxu0
      %1183 = vmatprep.mubr.f32.mxu0 0.0
      %1184 = vmatmul.mubr.f32.gmra.mrb[0].mxu0 %v1085
      %v1185 = vpop.f32.mrb[0].mxu0
      %v1186 = vadd.f32 %v1046, %v1185
      %v1187 = vpop.f32.mrb[0].mxu0
      %1188 = vmatprep.mubr.f32.mxu0 0.0
      %1189 = vmatmul.mubr.f32.gmra.mrb[0].mxu0 %v1087
      %v1190 = vpop.f32.mrb[0].mxu0
      %v1191 = vadd.f32 %v1046, %v1190
      %v1192 = vpop.f32.mrb[0].mxu0
      %1193 = vdwg.mxu0
      %v1194 = vmax.f32 %v1156, 0.0
      %v1195 = vmax.f32 %v1161, 0.0
      %v1196 = vmax.f32 %v1166, 0.0
      %v1197 = vmax.f32 %v1171, 0.0
      %v1198 = vmax.f32 %v1176, 0.0
      %v1199 = vmax.f32 %v1181, 0.0
      %v1200 = vmax.f32 %v1186, 0.0
      %v1201 = vmax.f32 %v1191, 0.0
      %v1202 = vld [vmem:[%s7] sm:$0xff]
      %v1203 = vld [vmem:[%s7 + $0x8] sm:$0xff]
      %v1204 = vld [vmem:[%s9] sm:$0x1]
      %v1206 = vlaneseq
      %v1207 = vshrl.u32 %v1206, 7
      %v1208 = vsub.s32 0, %v1207
      %v1209 = vrot.slane %v1204, %v1208
      %v1212 = vsel %vm1072, %v1194, 0
      %v1215 = vsel %vm1072, %v1195, 0
      %v1218 = vsel %vm1072, %v1196, 0
      %v1221 = vsel %vm1072, %v1197, 0
      %v1224 = vsel %vm1072, %v1198, 0
      %v1227 = vsel %vm1072, %v1199, 0
      %v1230 = vsel %vm1072, %v1200, 0
      %v1233 = vsel %vm1072, %v1201, 0
      %1235 = vmatprep.subr.mxu0 0.0
      %1236 = vmatpush1.msra.mxu0 %v1202
      %1237 = vmatprep.subr.mxu0 0.0
      %1238 = vmatpush1.msra.mxu0 %v1203
      %1239 = vmatprep.subr.mxu0 0.0
      %1240 = vmatpush1.msra.mxu0 0.0
      %1241 = vmatprep.subr.mxu0 0.0
      %1242 = vmatpush1.msra.mxu0 0.0
      %1243 = vmatprep.subr.mxu0 0.0
      %1244 = vmatpush1.msra.mxu0 0.0
      %1245 = vmatprep.subr.mxu0 0.0
      %1246 = vmatpush1.msra.mxu0 0.0
      %1247 = vmatprep.subr.mxu0 0.0
      %1248 = vmatpush1.msra.mxu0 0.0
      %1249 = vmatprep.subr.mxu0 0.0
      %1250 = vmatpush1.msra.mxu0 0.0
      %1251 = vmatprep.subr.mxu0 0.0
      %1252 = vmatpush1.msra.mxu0 0.0
      %1253 = vmatprep.subr.mxu0 0.0
      %1254 = vmatpush1.msra.mxu0 0.0
      %1255 = vmatprep.subr.mxu0 0.0
      %1256 = vmatpush1.msra.mxu0 0.0
      %1257 = vmatprep.subr.mxu0 0.0
      %1258 = vmatpush1.msra.mxu0 0.0
      %1259 = vmatprep.subr.mxu0 0.0
      %1260 = vmatpush1.msra.mxu0 0.0
      %1261 = vmatprep.subr.mxu0 0.0
      %1262 = vmatpush1.msra.mxu0 0.0
      %1263 = vmatprep.subr.mxu0 0.0
      %1264 = vmatpush1.msra.mxu0 0.0
      %1265 = vmatprep.subr.mxu0 0.0
      %1266 = vmatpush1.msra.mxu0 0.0
      %1267 = vmatprep.subr.mxu0 0.0
      %1268 = vmatpush1.msra.mxu0 0.0
      %1269 = vmatprep.subr.mxu0 0.0
      %1270 = vmatpush1.msra.mxu0 0.0
      %1271 = vmatprep.subr.mxu0 0.0
      %1272 = vmatpush1.msra.mxu0 0.0
      %1273 = vmatprep.subr.mxu0 0.0
      %1274 = vmatpush1.msra.mxu0 0.0
      %1275 = vmatprep.subr.mxu0 0.0
      %1276 = vmatpush1.msra.mxu0 0.0
      %1277 = vmatprep.subr.mxu0 0.0
      %1278 = vmatpush1.msra.mxu0 0.0
      %1279 = vmatprep.subr.mxu0 0.0
      %1280 = vmatpush1.msra.mxu0 0.0
      %1281 = vmatprep.subr.mxu0 0.0
      %1282 = vmatpush1.msra.mxu0 0.0
      %1283 = vmatprep.subr.mxu0 0.0
      %1284 = vmatpush1.msra.mxu0 0.0
      %1285 = vmatprep.subr.mxu0 0.0
      %1286 = vmatpush1.msra.mxu0 0.0
      %1287 = vmatprep.subr.mxu0 0.0
      %1288 = vmatpush1.msra.mxu0 0.0
      %1289 = vmatprep.subr.mxu0 0.0
      %1290 = vmatpush1.msra.mxu0 0.0
      %1291 = vmatprep.subr.mxu0 0.0
      %1292 = vmatpush1.msra.mxu0 0.0
      %1293 = vmatprep.subr.mxu0 0.0
      %1294 = vmatpush1.msra.mxu0 0.0
      %1295 = vmatprep.subr.mxu0 0.0
      %1296 = vmatpush1.msra.mxu0 0.0
      %1297 = vmatprep.subr.mxu0 0.0
      %1298 = vmatpush1.msra.mxu0 0.0
      %1299 = vmatprep.mubr.f32.mxu0 0.0
      %1300 = vmatmul.mubr.f32.gmra.mrb[0].mxu0 %v1212
      %v1301 = vpop.f32.mrb[0].mxu0
      %v1302 = vadd.f32 %v1209, %v1301
      %v1303 = vpop.f32.mrb[0].mxu0
      %1304 = vmatprep.mubr.f32.mxu0 0.0
      %1305 = vmatmul.mubr.f32.gmra.mrb[0].mxu0 %v1215
      %v1306 = vpop.f32.mrb[0].mxu0
      %v1307 = vadd.f32 %v1209, %v1306
      %v1308 = vpop.f32.mrb[0].mxu0
      %1309 = vmatprep.mubr.f32.mxu0 0.0
      %1310 = vmatmul.mubr.f32.gmra.mrb[0].mxu0 %v1218
      %v1311 = vpop.f32.mrb[0].mxu0
      %v1312 = vadd.f32 %v1209, %v1311
      %v1313 = vpop.f32.mrb[0].mxu0
      %1314 = vmatprep.mubr.f32.mxu0 0.0
      %1315 = vmatmul.mubr.f32.gmra.mrb[0].mxu0 %v1221
      %v1316 = vpop.f32.mrb[0].mxu0
      %v1317 = vadd.f32 %v1209, %v1316
      %v1318 = vpop.f32.mrb[0].mxu0
      %1319 = vmatprep.mubr.f32.mxu0 0.0
      %1320 = vmatmul.mubr.f32.gmra.mrb[0].mxu0 %v1224
      %v1321 = vpop.f32.mrb[0].mxu0
      %v1322 = vadd.f32 %v1209, %v1321
      %v1323 = vpop.f32.mrb[0].mxu0
      %1324 = vmatprep.mubr.f32.mxu0 0.0
      %1325 = vmatmul.mubr.f32.gmra.mrb[0].mxu0 %v1227
      %v1326 = vpop.f32.mrb[0].mxu0
      %v1327 = vadd.f32 %v1209, %v1326
      %v1328 = vpop.f32.mrb[0].mxu0
      %1329 = vmatprep.mubr.f32.mxu0 0.0
      %1330 = vmatmul.mubr.f32.gmra.mrb[0].mxu0 %v1230
      %v1331 = vpop.f32.mrb[0].mxu0
      %v1332 = vadd.f32 %v1209, %v1331
      %v1333 = vpop.f32.mrb[0].mxu0
      %1334 = vmatprep.mubr.f32.mxu0 0.0
      %1335 = vmatmul.mubr.f32.gmra.mrb[0].mxu0 %v1233
      %v1336 = vpop.f32.mrb[0].mxu0
      %v1337 = vadd.f32 %v1209, %v1336
      %v1338 = vpop.f32.mrb[0].mxu0
      %1339 = vdwg.mxu0
      %v1340 = vmax.f32 %v1302, 0.0
      %v1341 = vmax.f32 %v1307, 0.0
      %v1342 = vmax.f32 %v1312, 0.0
      %v1343 = vmax.f32 %v1317, 0.0
      %v1344 = vmax.f32 %v1322, 0.0
      %v1345 = vmax.f32 %v1327, 0.0
      %v1346 = vmax.f32 %v1332, 0.0
      %v1347 = vmax.f32 %v1337, 0.0
      %1348 = vrot.lane.b32.xlu0 %v1023, 40
      %v1349 = vpop.permute.xlu0 %1348
      %1350 = vrot.lane.b32.xlu0 %v1025, 40
      %v1351 = vpop.permute.xlu0 %1350
      %1352 = vrot.lane.b32.xlu0 %v1027, 40
      %v1353 = vpop.permute.xlu0 %1352
      %1354 = vrot.lane.b32.xlu0 %v1029, 40
      %v1355 = vpop.permute.xlu0 %1354
      %1356 = vrot.lane.b32.xlu0 %v1031, 40
      %v1357 = vpop.permute.xlu0 %1356
      %1358 = vrot.lane.b32.xlu0 %v1033, 40
      %v1359 = vpop.permute.xlu0 %1358
      %1360 = vrot.lane.b32.xlu0 %v1035, 40
      %v1361 = vpop.permute.xlu0 %1360
      %1362 = vrot.lane.b32.xlu0 %v1037, 40
      %v1363 = vpop.permute.xlu0 %1362
      %v1372 = vadd.f32 %v1340, %v1349
      %v1373 = vadd.f32 %v1341, %v1351
      %v1374 = vadd.f32 %v1342, %v1353
      %v1375 = vadd.f32 %v1343, %v1355
      %v1376 = vadd.f32 %v1344, %v1357
      %v1377 = vadd.f32 %v1345, %v1359
      %v1378 = vadd.f32 %v1346, %v1361
      %v1379 = vadd.f32 %v1347, %v1363
      %v1380 = vld [vmem:[%s11] sm:$0xff]
      %v1381 = vld [vmem:[%s11 + $0x8] sm:$0xff]
      %v1382 = vld [vmem:[%s11 + $0x10] sm:$0xff]
      %v1383 = vld [vmem:[%s11 + $0x18] sm:$0xff]
      %v1384 = vld [vmem:[%s13] sm:$0xff]
      %vm1385 = vcmask 64512
      %v1387 = vsel %vm1385, %v1372, 0
      %v1390 = vsel %vm1385, %v1373, 0
      %v1393 = vsel %vm1385, %v1374, 0
      %v1396 = vsel %vm1385, %v1375, 0
      %v1399 = vsel %vm1385, %v1376, 0
      %v1402 = vsel %vm1385, %v1377, 0
      %v1405 = vsel %vm1385, %v1378, 0
      %v1408 = vsel %vm1385, %v1379, 0
      %1410 = vmatprep.subr.mxu0 0.0
      %1411 = vmatpush1.msra.mxu0 %v1384
      %1412 = vmatprep.subr.mxu0 0.0
      %1413 = vmatpush1.msra.mxu0 0.0
      %1414 = vmatprep.subr.mxu0 0.0
      %1415 = vmatpush1.msra.mxu0 0.0
      %1416 = vmatprep.subr.mxu0 0.0
      %1417 = vmatpush1.msra.mxu0 0.0
      %1418 = vmatprep.subr.mxu0 0.0
      %1419 = vmatpush1.msra.mxu0 0.0
      %1420 = vmatprep.subr.mxu0 0.0
      %1421 = vmatpush1.msra.mxu0 0.0
      %1422 = vmatprep.subr.mxu0 0.0
      %1423 = vmatpush1.msra.mxu0 0.0
      %1424 = vmatprep.subr.mxu0 0.0
      %1425 = vmatpush1.msra.mxu0 0.0
      %1426 = vmatprep.subr.mxu0 0.0
      %1427 = vmatpush1.msra.mxu0 0.0
      %1428 = vmatprep.subr.mxu0 0.0
      %1429 = vmatpush1.msra.mxu0 0.0
      %1430 = vmatprep.subr.mxu0 0.0
      %1431 = vmatpush1.msra.mxu0 0.0
      %1432 = vmatprep.subr.mxu0 0.0
      %1433 = vmatpush1.msra.mxu0 0.0
      %1434 = vmatprep.subr.mxu0 0.0
      %1435 = vmatpush1.msra.mxu0 0.0
      %1436 = vmatprep.subr.mxu0 0.0
      %1437 = vmatpush1.msra.mxu0 0.0
      %1438 = vmatprep.subr.mxu0 0.0
      %1439 = vmatpush1.msra.mxu0 0.0
      %1440 = vmatprep.subr.mxu0 0.0
      %1441 = vmatpush1.msra.mxu0 0.0
      %1442 = vmatprep.subr.mxu0 0.0
      %1443 = vmatpush1.msra.mxu0 0.0
      %1444 = vmatprep.subr.mxu0 0.0
      %1445 = vmatpush1.msra.mxu0 0.0
      %1446 = vmatprep.subr.mxu0 0.0
      %1447 = vmatpush1.msra.mxu0 0.0
      %1448 = vmatprep.subr.mxu0 0.0
      %1449 = vmatpush1.msra.mxu0 0.0
      %1450 = vmatprep.subr.mxu0 0.0
      %1451 = vmatpush1.msra.mxu0 0.0
      %1452 = vmatprep.subr.mxu0 0.0
      %1453 = vmatpush1.msra.mxu0 0.0
      %1454 = vmatprep.subr.mxu0 0.0
      %1455 = vmatpush1.msra.mxu0 0.0
      %1456 = vmatprep.subr.mxu0 0.0
      %1457 = vmatpush1.msra.mxu0 0.0
      %1458 = vmatprep.subr.mxu0 0.0
      %1459 = vmatpush1.msra.mxu0 0.0
      %1460 = vmatprep.subr.mxu0 0.0
      %1461 = vmatpush1.msra.mxu0 0.0
      %1462 = vmatprep.subr.mxu0 0.0
      %1463 = vmatpush1.msra.mxu0 0.0
      %1464 = vmatprep.subr.mxu0 0.0
      %1465 = vmatpush1.msra.mxu0 0.0
      %1466 = vmatprep.subr.mxu0 0.0
      %1467 = vmatpush1.msra.mxu0 0.0
      %1468 = vmatprep.subr.mxu0 0.0
      %1469 = vmatpush1.msra.mxu0 0.0
      %1470 = vmatprep.subr.mxu0 0.0
      %1471 = vmatpush1.msra.mxu0 0.0
      %1472 = vmatprep.subr.mxu0 0.0
      %1473 = vmatpush1.msra.mxu0 0.0
      %1474 = vmatprep.mubr.f32.mxu0 0.0
      %1475 = vmatmul.mubr.f32.gmra.mrb[0].mxu0 %v1387
      %v1476 = vpop.f32.mrb[0].mxu0
      %v1477 = vadd.f32 0.0, %v1476
      %v1478 = vpop.f32.mrb[0].mxu0
      %1479 = vmatprep.mubr.f32.mxu0 0.0
      %1480 = vmatmul.mubr.f32.gmra.mrb[0].mxu0 %v1390
      %v1481 = vpop.f32.mrb[0].mxu0
      %v1482 = vadd.f32 0.0, %v1481
      %v1483 = vpop.f32.mrb[0].mxu0
      %1484 = vmatprep.mubr.f32.mxu0 0.0
      %1485 = vmatmul.mubr.f32.gmra.mrb[0].mxu0 %v1393
      %v1486 = vpop.f32.mrb[0].mxu0
      %v1487 = vadd.f32 0.0, %v1486
      %v1488 = vpop.f32.mrb[0].mxu0
      %1489 = vmatprep.mubr.f32.mxu0 0.0
      %1490 = vmatmul.mubr.f32.gmra.mrb[0].mxu0 %v1396
      %v1491 = vpop.f32.mrb[0].mxu0
      %v1492 = vadd.f32 0.0, %v1491
      %v1493 = vpop.f32.mrb[0].mxu0
      %1494 = vmatprep.mubr.f32.mxu0 0.0
      %1495 = vmatmul.mubr.f32.gmra.mrb[0].mxu0 %v1399
      %v1496 = vpop.f32.mrb[0].mxu0
      %v1497 = vadd.f32 0.0, %v1496
      %v1498 = vpop.f32.mrb[0].mxu0
      %1499 = vmatprep.mubr.f32.mxu0 0.0
      %1500 = vmatmul.mubr.f32.gmra.mrb[0].mxu0 %v1402
      %v1501 = vpop.f32.mrb[0].mxu0
      %v1502 = vadd.f32 0.0, %v1501
      %v1503 = vpop.f32.mrb[0].mxu0
      %1504 = vmatprep.mubr.f32.mxu0 0.0
      %1505 = vmatmul.mubr.f32.gmra.mrb[0].mxu0 %v1405
      %v1506 = vpop.f32.mrb[0].mxu0
      %v1507 = vadd.f32 0.0, %v1506
      %v1508 = vpop.f32.mrb[0].mxu0
      %1509 = vmatprep.mubr.f32.mxu0 0.0
      %1510 = vmatmul.mubr.f32.gmra.mrb[0].mxu0 %v1408
      %v1511 = vpop.f32.mrb[0].mxu0
      %v1512 = vadd.f32 0.0, %v1511
      %v1513 = vpop.f32.mrb[0].mxu0
      %1514 = vdwg.mxu0
      %1523 = vrot.lane.b32.xlu0 %v1024, 96
      %v1524 = vpop.permute.xlu0 %1523
      %1525 = vrot.lane.b32.xlu0 %v1026, 96
      %v1526 = vpop.permute.xlu0 %1525
      %1527 = vrot.lane.b32.xlu0 %v1028, 96
      %v1528 = vpop.permute.xlu0 %1527
      %1529 = vrot.lane.b32.xlu0 %v1030, 96
      %v1530 = vpop.permute.xlu0 %1529
      %1531 = vrot.lane.b32.xlu0 %v1032, 96
      %v1532 = vpop.permute.xlu0 %1531
      %1533 = vrot.lane.b32.xlu0 %v1034, 96
      %v1534 = vpop.permute.xlu0 %1533
      %1535 = vrot.lane.b32.xlu0 %v1036, 96
      %v1536 = vpop.permute.xlu0 %1535
      %1537 = vrot.lane.b32.xlu0 %v1038, 96
      %v1538 = vpop.permute.xlu0 %1537
      %vm1539 = vcmask 261120
      %v1540 = vsel %vm1539, %v1524, 0
      %v1542 = vsel %vm1539, %v1526, 0
      %v1544 = vsel %vm1539, %v1528, 0
      %v1546 = vsel %vm1539, %v1530, 0
      %v1548 = vsel %vm1539, %v1532, 0
      %v1550 = vsel %vm1539, %v1534, 0
      %v1552 = vsel %vm1539, %v1536, 0
      %v1554 = vsel %vm1539, %v1538, 0
      %1556 = vmatprep.subr.mxu0 0.0
      %1557 = vmatpush1.msra.mxu0 %v1380
      %1558 = vmatprep.subr.mxu0 0.0
      %1559 = vmatpush1.msra.mxu0 %v1381
      %1560 = vmatprep.subr.mxu0 0.0
      %1561 = vmatpush1.msra.mxu0 %v1382
      %1562 = vmatprep.subr.mxu0 0.0
      %1563 = vmatpush1.msra.mxu0 %v1383
      %1564 = vmatprep.subr.mxu0 0.0
      %1565 = vmatpush1.msra.mxu0 0.0
      %1566 = vmatprep.subr.mxu0 0.0
      %1567 = vmatpush1.msra.mxu0 0.0
      %1568 = vmatprep.subr.mxu0 0.0
      %1569 = vmatpush1.msra.mxu0 0.0
      %1570 = vmatprep.subr.mxu0 0.0
      %1571 = vmatpush1.msra.mxu0 0.0
      %1572 = vmatprep.subr.mxu0 0.0
      %1573 = vmatpush1.msra.mxu0 0.0
      %1574 = vmatprep.subr.mxu0 0.0
      %1575 = vmatpush1.msra.mxu0 0.0
      %1576 = vmatprep.subr.mxu0 0.0
      %1577 = vmatpush1.msra.mxu0 0.0
      %1578 = vmatprep.subr.mxu0 0.0
      %1579 = vmatpush1.msra.mxu0 0.0
      %1580 = vmatprep.subr.mxu0 0.0
      %1581 = vmatpush1.msra.mxu0 0.0
      %1582 = vmatprep.subr.mxu0 0.0
      %1583 = vmatpush1.msra.mxu0 0.0
      %1584 = vmatprep.subr.mxu0 0.0
      %1585 = vmatpush1.msra.mxu0 0.0
      %1586 = vmatprep.subr.mxu0 0.0
      %1587 = vmatpush1.msra.mxu0 0.0
      %1588 = vmatprep.subr.mxu0 0.0
      %1589 = vmatpush1.msra.mxu0 0.0
      %1590 = vmatprep.subr.mxu0 0.0
      %1591 = vmatpush1.msra.mxu0 0.0
      %1592 = vmatprep.subr.mxu0 0.0
      %1593 = vmatpush1.msra.mxu0 0.0
      %1594 = vmatprep.subr.mxu0 0.0
      %1595 = vmatpush1.msra.mxu0 0.0
      %1596 = vmatprep.subr.mxu0 0.0
      %1597 = vmatpush1.msra.mxu0 0.0
      %1598 = vmatprep.subr.mxu0 0.0
      %1599 = vmatpush1.msra.mxu0 0.0
      %1600 = vmatprep.subr.mxu0 0.0
      %1601 = vmatpush1.msra.mxu0 0.0
      %1602 = vmatprep.subr.mxu0 0.0
      %1603 = vmatpush1.msra.mxu0 0.0
      %1604 = vmatprep.subr.mxu0 0.0
      %1605 = vmatpush1.msra.mxu0 0.0
      %1606 = vmatprep.subr.mxu0 0.0
      %1607 = vmatpush1.msra.mxu0 0.0
      %1608 = vmatprep.subr.mxu0 0.0
      %1609 = vmatpush1.msra.mxu0 0.0
      %1610 = vmatprep.subr.mxu0 0.0
      %1611 = vmatpush1.msra.mxu0 0.0
      %1612 = vmatprep.subr.mxu0 0.0
      %1613 = vmatpush1.msra.mxu0 0.0
      %1614 = vmatprep.subr.mxu0 0.0
      %1615 = vmatpush1.msra.mxu0 0.0
      %1616 = vmatprep.subr.mxu0 0.0
      %1617 = vmatpush1.msra.mxu0 0.0
      %1618 = vmatprep.subr.mxu0 0.0
      %1619 = vmatpush1.msra.mxu0 0.0
      %1620 = vmatprep.mubr.f32.mxu0 0.0
      %1621 = vmatmul.mubr.f32.gmra.mrb[0].mxu0 %v1540
      %v1622 = vpop.f32.mrb[0].mxu0
      %v1623 = vadd.f32 %v1477, %v1622
      %v1624 = vpop.f32.mrb[0].mxu0
      %1625 = vmatprep.mubr.f32.mxu0 0.0
      %1626 = vmatmul.mubr.f32.gmra.mrb[0].mxu0 %v1542
      %v1627 = vpop.f32.mrb[0].mxu0
      %v1628 = vadd.f32 %v1482, %v1627
      %v1629 = vpop.f32.mrb[0].mxu0
      %1630 = vmatprep.mubr.f32.mxu0 0.0
      %1631 = vmatmul.mubr.f32.gmra.mrb[0].mxu0 %v1544
      %v1632 = vpop.f32.mrb[0].mxu0
      %v1633 = vadd.f32 %v1487, %v1632
      %v1634 = vpop.f32.mrb[0].mxu0
      %1635 = vmatprep.mubr.f32.mxu0 0.0
      %1636 = vmatmul.mubr.f32.gmra.mrb[0].mxu0 %v1546
      %v1637 = vpop.f32.mrb[0].mxu0
      %v1638 = vadd.f32 %v1492, %v1637
      %v1639 = vpop.f32.mrb[0].mxu0
      %1640 = vmatprep.mubr.f32.mxu0 0.0
      %1641 = vmatmul.mubr.f32.gmra.mrb[0].mxu0 %v1548
      %v1642 = vpop.f32.mrb[0].mxu0
      %v1643 = vadd.f32 %v1497, %v1642
      %v1644 = vpop.f32.mrb[0].mxu0
      %1645 = vmatprep.mubr.f32.mxu0 0.0
      %1646 = vmatmul.mubr.f32.gmra.mrb[0].mxu0 %v1550
      %v1647 = vpop.f32.mrb[0].mxu0
      %v1648 = vadd.f32 %v1502, %v1647
      %v1649 = vpop.f32.mrb[0].mxu0
      %1650 = vmatprep.mubr.f32.mxu0 0.0
      %1651 = vmatmul.mubr.f32.gmra.mrb[0].mxu0 %v1552
      %v1652 = vpop.f32.mrb[0].mxu0
      %v1653 = vadd.f32 %v1507, %v1652
      %v1654 = vpop.f32.mrb[0].mxu0
      %1655 = vmatprep.mubr.f32.mxu0 0.0
      %1656 = vmatmul.mubr.f32.gmra.mrb[0].mxu0 %v1554
      %v1657 = vpop.f32.mrb[0].mxu0
      %v1658 = vadd.f32 %v1512, %v1657
      %v1659 = vpop.f32.mrb[0].mxu0
      %1660 = vdwg.mxu0
      %v1661 = vld [vmem:[%s15] sm:$0x1]
      %v1663 = vlaneseq
      %v1664 = vshrl.u32 %v1663, 7
      %v1665 = vsub.s32 0, %v1664
      %v1666 = vrot.slane %v1661, %v1665
      %v1668 = vadd.f32 %v1623, %v1666
      %v1669 = vadd.f32 %v1628, %v1666
      %v1670 = vadd.f32 %v1633, %v1666
      %v1671 = vadd.f32 %v1638, %v1666
      %v1672 = vadd.f32 %v1643, %v1666
      %v1673 = vadd.f32 %v1648, %v1666
      %v1674 = vadd.f32 %v1653, %v1666
      %v1675 = vadd.f32 %v1658, %v1666
      %v1676 = vmax.f32 %v1668, 0.0
      %v1677 = vmax.f32 %v1669, 0.0
      %v1678 = vmax.f32 %v1670, 0.0
      %v1679 = vmax.f32 %v1671, 0.0
      %v1680 = vmax.f32 %v1672, 0.0
      %v1681 = vmax.f32 %v1673, 0.0
      %v1682 = vmax.f32 %v1674, 0.0
      %v1683 = vmax.f32 %v1675, 0.0
      %v1684 = vld [vmem:[%s17] sm:$0xff]
      %v1685 = vld [vmem:[%s17 + $0x8] sm:$0xff]
      %v1686 = vld [vmem:[%s17 + $0x10] sm:$0xff]
      %v1687 = vld [vmem:[%s17 + $0x18] sm:$0xff]
      %v1688 = vld [vmem:[%s19] sm:$0xff]
      %v1689 = vsel %vm1385, %v1349, 0
      %v1691 = vsel %vm1385, %v1351, 0
      %v1693 = vsel %vm1385, %v1353, 0
      %v1695 = vsel %vm1385, %v1355, 0
      %v1697 = vsel %vm1385, %v1357, 0
      %v1699 = vsel %vm1385, %v1359, 0
      %v1701 = vsel %vm1385, %v1361, 0
      %v1703 = vsel %vm1385, %v1363, 0
      %1705 = vmatprep.subr.mxu0 0.0
      %1706 = vmatpush1.msra.mxu0 %v1688
      %1707 = vmatprep.subr.mxu0 0.0
      %1708 = vmatpush1.msra.mxu0 0.0
      %1709 = vmatprep.subr.mxu0 0.0
      %1710 = vmatpush1.msra.mxu0 0.0
      %1711 = vmatprep.subr.mxu0 0.0
      %1712 = vmatpush1.msra.mxu0 0.0
      %1713 = vmatprep.subr.mxu0 0.0
      %1714 = vmatpush1.msra.mxu0 0.0
      %1715 = vmatprep.subr.mxu0 0.0
      %1716 = vmatpush1.msra.mxu0 0.0
      %1717 = vmatprep.subr.mxu0 0.0
      %1718 = vmatpush1.msra.mxu0 0.0
      %1719 = vmatprep.subr.mxu0 0.0
      %1720 = vmatpush1.msra.mxu0 0.0
      %1721 = vmatprep.subr.mxu0 0.0
      %1722 = vmatpush1.msra.mxu0 0.0
      %1723 = vmatprep.subr.mxu0 0.0
      %1724 = vmatpush1.msra.mxu0 0.0
      %1725 = vmatprep.subr.mxu0 0.0
      %1726 = vmatpush1.msra.mxu0 0.0
      %1727 = vmatprep.subr.mxu0 0.0
      %1728 = vmatpush1.msra.mxu0 0.0
      %1729 = vmatprep.subr.mxu0 0.0
      %1730 = vmatpush1.msra.mxu0 0.0
      %1731 = vmatprep.subr.mxu0 0.0
      %1732 = vmatpush1.msra.mxu0 0.0
      %1733 = vmatprep.subr.mxu0 0.0
      %1734 = vmatpush1.msra.mxu0 0.0
      %1735 = vmatprep.subr.mxu0 0.0
      %1736 = vmatpush1.msra.mxu0 0.0
      %1737 = vmatprep.subr.mxu0 0.0
      %1738 = vmatpush1.msra.mxu0 0.0
      %1739 = vmatprep.subr.mxu0 0.0
      %1740 = vmatpush1.msra.mxu0 0.0
      %1741 = vmatprep.subr.mxu0 0.0
      %1742 = vmatpush1.msra.mxu0 0.0
      %1743 = vmatprep.subr.mxu0 0.0
      %1744 = vmatpush1.msra.mxu0 0.0
      %1745 = vmatprep.subr.mxu0 0.0
      %1746 = vmatpush1.msra.mxu0 0.0
      %1747 = vmatprep.subr.mxu0 0.0
      %1748 = vmatpush1.msra.mxu0 0.0
      %1749 = vmatprep.subr.mxu0 0.0
      %1750 = vmatpush1.msra.mxu0 0.0
      %1751 = vmatprep.subr.mxu0 0.0
      %1752 = vmatpush1.msra.mxu0 0.0
      %1753 = vmatprep.subr.mxu0 0.0
      %1754 = vmatpush1.msra.mxu0 0.0
      %1755 = vmatprep.subr.mxu0 0.0
      %1756 = vmatpush1.msra.mxu0 0.0
      %1757 = vmatprep.subr.mxu0 0.0
      %1758 = vmatpush1.msra.mxu0 0.0
      %1759 = vmatprep.subr.mxu0 0.0
      %1760 = vmatpush1.msra.mxu0 0.0
      %1761 = vmatprep.subr.mxu0 0.0
      %1762 = vmatpush1.msra.mxu0 0.0
      %1763 = vmatprep.subr.mxu0 0.0
      %1764 = vmatpush1.msra.mxu0 0.0
      %1765 = vmatprep.subr.mxu0 0.0
      %1766 = vmatpush1.msra.mxu0 0.0
      %1767 = vmatprep.subr.mxu0 0.0
      %1768 = vmatpush1.msra.mxu0 0.0
      %1769 = vmatprep.mubr.f32.mxu0 0.0
      %1770 = vmatmul.mubr.f32.gmra.mrb[0].mxu0 %v1689
      %v1771 = vpop.f32.mrb[0].mxu0
      %v1772 = vadd.f32 0.0, %v1771
      %v1773 = vpop.f32.mrb[0].mxu0
      %1774 = vmatprep.mubr.f32.mxu0 0.0
      %1775 = vmatmul.mubr.f32.gmra.mrb[0].mxu0 %v1691
      %v1776 = vpop.f32.mrb[0].mxu0
      %v1777 = vadd.f32 0.0, %v1776
      %v1778 = vpop.f32.mrb[0].mxu0
      %1779 = vmatprep.mubr.f32.mxu0 0.0
      %1780 = vmatmul.mubr.f32.gmra.mrb[0].mxu0 %v1693
      %v1781 = vpop.f32.mrb[0].mxu0
      %v1782 = vadd.f32 0.0, %v1781
      %v1783 = vpop.f32.mrb[0].mxu0
      %1784 = vmatprep.mubr.f32.mxu0 0.0
      %1785 = vmatmul.mubr.f32.gmra.mrb[0].mxu0 %v1695
      %v1786 = vpop.f32.mrb[0].mxu0
      %v1787 = vadd.f32 0.0, %v1786
      %v1788 = vpop.f32.mrb[0].mxu0
      %1789 = vmatprep.mubr.f32.mxu0 0.0
      %1790 = vmatmul.mubr.f32.gmra.mrb[0].mxu0 %v1697
      %v1791 = vpop.f32.mrb[0].mxu0
      %v1792 = vadd.f32 0.0, %v1791
      %v1793 = vpop.f32.mrb[0].mxu0
      %1794 = vmatprep.mubr.f32.mxu0 0.0
      %1795 = vmatmul.mubr.f32.gmra.mrb[0].mxu0 %v1699
      %v1796 = vpop.f32.mrb[0].mxu0
      %v1797 = vadd.f32 0.0, %v1796
      %v1798 = vpop.f32.mrb[0].mxu0
      %1799 = vmatprep.mubr.f32.mxu0 0.0
      %1800 = vmatmul.mubr.f32.gmra.mrb[0].mxu0 %v1701
      %v1801 = vpop.f32.mrb[0].mxu0
      %v1802 = vadd.f32 0.0, %v1801
      %v1803 = vpop.f32.mrb[0].mxu0
      %1804 = vmatprep.mubr.f32.mxu0 0.0
      %1805 = vmatmul.mubr.f32.gmra.mrb[0].mxu0 %v1703
      %v1806 = vpop.f32.mrb[0].mxu0
      %v1807 = vadd.f32 0.0, %v1806
      %v1808 = vpop.f32.mrb[0].mxu0
      %1809 = vdwg.mxu0
      %v1810 = vsel %vm1539, %v1024, 0
      %v1812 = vsel %vm1539, %v1026, 0
      %v1814 = vsel %vm1539, %v1028, 0
      %v1816 = vsel %vm1539, %v1030, 0
      %v1818 = vsel %vm1539, %v1032, 0
      %v1820 = vsel %vm1539, %v1034, 0
      %v1822 = vsel %vm1539, %v1036, 0
      %v1824 = vsel %vm1539, %v1038, 0
      %1826 = vmatprep.subr.mxu0 0.0
      %1827 = vmatpush1.msra.mxu0 %v1684
      %1828 = vmatprep.subr.mxu0 0.0
      %1829 = vmatpush1.msra.mxu0 %v1685
      %1830 = vmatprep.subr.mxu0 0.0
      %1831 = vmatpush1.msra.mxu0 %v1686
      %1832 = vmatprep.subr.mxu0 0.0
      %1833 = vmatpush1.msra.mxu0 %v1687
      %1834 = vmatprep.subr.mxu0 0.0
      %1835 = vmatpush1.msra.mxu0 0.0
      %1836 = vmatprep.subr.mxu0 0.0
      %1837 = vmatpush1.msra.mxu0 0.0
      %1838 = vmatprep.subr.mxu0 0.0
      %1839 = vmatpush1.msra.mxu0 0.0
      %1840 = vmatprep.subr.mxu0 0.0
      %1841 = vmatpush1.msra.mxu0 0.0
      %1842 = vmatprep.subr.mxu0 0.0
      %1843 = vmatpush1.msra.mxu0 0.0
      %1844 = vmatprep.subr.mxu0 0.0
      %1845 = vmatpush1.msra.mxu0 0.0
      %1846 = vmatprep.subr.mxu0 0.0
      %1847 = vmatpush1.msra.mxu0 0.0
      %1848 = vmatprep.subr.mxu0 0.0
      %1849 = vmatpush1.msra.mxu0 0.0
      %1850 = vmatprep.subr.mxu0 0.0
      %1851 = vmatpush1.msra.mxu0 0.0
      %1852 = vmatprep.subr.mxu0 0.0
      %1853 = vmatpush1.msra.mxu0 0.0
      %1854 = vmatprep.subr.mxu0 0.0
      %1855 = vmatpush1.msra.mxu0 0.0
      %1856 = vmatprep.subr.mxu0 0.0
      %1857 = vmatpush1.msra.mxu0 0.0
      %1858 = vmatprep.subr.mxu0 0.0
      %1859 = vmatpush1.msra.mxu0 0.0
      %1860 = vmatprep.subr.mxu0 0.0
      %1861 = vmatpush1.msra.mxu0 0.0
      %1862 = vmatprep.subr.mxu0 0.0
      %1863 = vmatpush1.msra.mxu0 0.0
      %1864 = vmatprep.subr.mxu0 0.0
      %1865 = vmatpush1.msra.mxu0 0.0
      %1866 = vmatprep.subr.mxu0 0.0
      %1867 = vmatpush1.msra.mxu0 0.0
      %1868 = vmatprep.subr.mxu0 0.0
      %1869 = vmatpush1.msra.mxu0 0.0
      %1870 = vmatprep.subr.mxu0 0.0
      %1871 = vmatpush1.msra.mxu0 0.0
      %1872 = vmatprep.subr.mxu0 0.0
      %1873 = vmatpush1.msra.mxu0 0.0
      %1874 = vmatprep.subr.mxu0 0.0
      %1875 = vmatpush1.msra.mxu0 0.0
      %1876 = vmatprep.subr.mxu0 0.0
      %1877 = vmatpush1.msra.mxu0 0.0
      %1878 = vmatprep.subr.mxu0 0.0
      %1879 = vmatpush1.msra.mxu0 0.0
      %1880 = vmatprep.subr.mxu0 0.0
      %1881 = vmatpush1.msra.mxu0 0.0
      %1882 = vmatprep.subr.mxu0 0.0
      %1883 = vmatpush1.msra.mxu0 0.0
      %1884 = vmatprep.subr.mxu0 0.0
      %1885 = vmatpush1.msra.mxu0 0.0
      %1886 = vmatprep.subr.mxu0 0.0
      %1887 = vmatpush1.msra.mxu0 0.0
      %1888 = vmatprep.subr.mxu0 0.0
      %1889 = vmatpush1.msra.mxu0 0.0
      %1890 = vmatprep.mubr.f32.mxu0 0.0
      %1891 = vmatmul.mubr.f32.gmra.mrb[0].mxu0 %v1810
      %v1892 = vpop.f32.mrb[0].mxu0
      %v1893 = vadd.f32 %v1772, %v1892
      %v1894 = vpop.f32.mrb[0].mxu0
      %1895 = vmatprep.mubr.f32.mxu0 0.0
      %1896 = vmatmul.mubr.f32.gmra.mrb[0].mxu0 %v1812
      %v1897 = vpop.f32.mrb[0].mxu0
      %v1898 = vadd.f32 %v1777, %v1897
      %v1899 = vpop.f32.mrb[0].mxu0
      %1900 = vmatprep.mubr.f32.mxu0 0.0
      %1901 = vmatmul.mubr.f32.gmra.mrb[0].mxu0 %v1814
      %v1902 = vpop.f32.mrb[0].mxu0
      %v1903 = vadd.f32 %v1782, %v1902
      %v1904 = vpop.f32.mrb[0].mxu0
      %1905 = vmatprep.mubr.f32.mxu0 0.0
      %1906 = vmatmul.mubr.f32.gmra.mrb[0].mxu0 %v1816
      %v1907 = vpop.f32.mrb[0].mxu0
      %v1908 = vadd.f32 %v1787, %v1907
      %v1909 = vpop.f32.mrb[0].mxu0
      %1910 = vmatprep.mubr.f32.mxu0 0.0
      %1911 = vmatmul.mubr.f32.gmra.mrb[0].mxu0 %v1818
      %v1912 = vpop.f32.mrb[0].mxu0
      %v1913 = vadd.f32 %v1792, %v1912
      %v1914 = vpop.f32.mrb[0].mxu0
      %1915 = vmatprep.mubr.f32.mxu0 0.0
      %1916 = vmatmul.mubr.f32.gmra.mrb[0].mxu0 %v1820
      %v1917 = vpop.f32.mrb[0].mxu0
      %v1918 = vadd.f32 %v1797, %v1917
      %v1919 = vpop.f32.mrb[0].mxu0
      %1920 = vmatprep.mubr.f32.mxu0 0.0
      %1921 = vmatmul.mubr.f32.gmra.mrb[0].mxu0 %v1822
      %v1922 = vpop.f32.mrb[0].mxu0
      %v1923 = vadd.f32 %v1802, %v1922
      %v1924 = vpop.f32.mrb[0].mxu0
      %1925 = vmatprep.mubr.f32.mxu0 0.0
      %1926 = vmatmul.mubr.f32.gmra.mrb[0].mxu0 %v1824
      %v1927 = vpop.f32.mrb[0].mxu0
      %v1928 = vadd.f32 %v1807, %v1927
      %v1929 = vpop.f32.mrb[0].mxu0
      %1930 = vdwg.mxu0
      %v1931 = vld [vmem:[%s21] sm:$0x1]
      %v1933 = vlaneseq
      %v1934 = vshrl.u32 %v1933, 7
      %v1935 = vsub.s32 0, %v1934
      %v1936 = vrot.slane %v1931, %v1935
      %v1938 = vadd.f32 %v1893, %v1936
      %v1939 = vadd.f32 %v1898, %v1936
      %v1940 = vadd.f32 %v1903, %v1936
      %v1941 = vadd.f32 %v1908, %v1936
      %v1942 = vadd.f32 %v1913, %v1936
      %v1943 = vadd.f32 %v1918, %v1936
      %v1944 = vadd.f32 %v1923, %v1936
      %v1945 = vadd.f32 %v1928, %v1936
      %v1946 = vmax.f32 %v1938, 0.0
      %v1947 = vmax.f32 %v1939, 0.0
      %v1948 = vmax.f32 %v1940, 0.0
      %v1949 = vmax.f32 %v1941, 0.0
      %v1950 = vmax.f32 %v1942, 0.0
      %v1951 = vmax.f32 %v1943, 0.0
      %v1952 = vmax.f32 %v1944, 0.0
      %v1953 = vmax.f32 %v1945, 0.0
      %v1954 = vld [vmem:[%s23] sm:$0xff]
      %v1955 = vld [vmem:[%s23 + $0x8] sm:$0xff]
      %v1956 = vld [vmem:[%s23 + $0x10] sm:$0xff]
      %v1957 = vld [vmem:[%s25] sm:$0x1]
      %v1959 = vlaneseq
      %v1960 = vshrl.u32 %v1959, 7
      %v1961 = vsub.s32 0, %v1960
      %v1962 = vrot.slane %v1957, %v1961
      %vm1964 = vcmask 195584
      %v1966 = vsel %vm1964, %v1946, 0
      %v1969 = vsel %vm1964, %v1947, 0
      %v1972 = vsel %vm1964, %v1948, 0
      %v1975 = vsel %vm1964, %v1949, 0
      %v1978 = vsel %vm1964, %v1950, 0
      %v1981 = vsel %vm1964, %v1951, 0
      %v1984 = vsel %vm1964, %v1952, 0
      %v1987 = vsel %vm1964, %v1953, 0
      %1989 = vmatprep.subr.mxu0 0.0
      %1990 = vmatpush1.msra.mxu0 %v1954
      %1991 = vmatprep.subr.mxu0 0.0
      %1992 = vmatpush1.msra.mxu0 %v1955
      %1993 = vmatprep.subr.mxu0 0.0
      %1994 = vmatpush1.msra.mxu0 %v1956
      %1995 = vmatprep.subr.mxu0 0.0
      %1996 = vmatpush1.msra.mxu0 0.0
      %1997 = vmatprep.subr.mxu0 0.0
      %1998 = vmatpush1.msra.mxu0 0.0
      %1999 = vmatprep.subr.mxu0 0.0
      %2000 = vmatpush1.msra.mxu0 0.0
      %2001 = vmatprep.subr.mxu0 0.0
      %2002 = vmatpush1.msra.mxu0 0.0
      %2003 = vmatprep.subr.mxu0 0.0
      %2004 = vmatpush1.msra.mxu0 0.0
      %2005 = vmatprep.subr.mxu0 0.0
      %2006 = vmatpush1.msra.mxu0 0.0
      %2007 = vmatprep.subr.mxu0 0.0
      %2008 = vmatpush1.msra.mxu0 0.0
      %2009 = vmatprep.subr.mxu0 0.0
      %2010 = vmatpush1.msra.mxu0 0.0
      %2011 = vmatprep.subr.mxu0 0.0
      %2012 = vmatpush1.msra.mxu0 0.0
      %2013 = vmatprep.subr.mxu0 0.0
      %2014 = vmatpush1.msra.mxu0 0.0
      %2015 = vmatprep.subr.mxu0 0.0
      %2016 = vmatpush1.msra.mxu0 0.0
      %2017 = vmatprep.subr.mxu0 0.0
      %2018 = vmatpush1.msra.mxu0 0.0
      %2019 = vmatprep.subr.mxu0 0.0
      %2020 = vmatpush1.msra.mxu0 0.0
      %2021 = vmatprep.subr.mxu0 0.0
      %2022 = vmatpush1.msra.mxu0 0.0
      %2023 = vmatprep.subr.mxu0 0.0
      %2024 = vmatpush1.msra.mxu0 0.0
      %2025 = vmatprep.subr.mxu0 0.0
      %2026 = vmatpush1.msra.mxu0 0.0
      %2027 = vmatprep.subr.mxu0 0.0
      %2028 = vmatpush1.msra.mxu0 0.0
      %2029 = vmatprep.subr.mxu0 0.0
      %2030 = vmatpush1.msra.mxu0 0.0
      %2031 = vmatprep.subr.mxu0 0.0
      %2032 = vmatpush1.msra.mxu0 0.0
      %2033 = vmatprep.subr.mxu0 0.0
      %2034 = vmatpush1.msra.mxu0 0.0
      %2035 = vmatprep.subr.mxu0 0.0
      %2036 = vmatpush1.msra.mxu0 0.0
      %2037 = vmatprep.subr.mxu0 0.0
      %2038 = vmatpush1.msra.mxu0 0.0
      %2039 = vmatprep.subr.mxu0 0.0
      %2040 = vmatpush1.msra.mxu0 0.0
      %2041 = vmatprep.subr.mxu0 0.0
      %2042 = vmatpush1.msra.mxu0 0.0
      %2043 = vmatprep.subr.mxu0 0.0
      %2044 = vmatpush1.msra.mxu0 0.0
      %2045 = vmatprep.subr.mxu0 0.0
      %2046 = vmatpush1.msra.mxu0 0.0
      %2047 = vmatprep.subr.mxu0 0.0
      %2048 = vmatpush1.msra.mxu0 0.0
      %2049 = vmatprep.subr.mxu0 0.0
      %2050 = vmatpush1.msra.mxu0 0.0
      %2051 = vmatprep.subr.mxu0 0.0
      %2052 = vmatpush1.msra.mxu0 0.0
      %2053 = vmatprep.mubr.f32.mxu0 0.0
      %2054 = vmatmul.mubr.f32.gmra.mrb[0].mxu0 %v1966
      %v2055 = vpop.f32.mrb[0].mxu0
      %v2056 = vadd.f32 %v1962, %v2055
      %v2057 = vpop.f32.mrb[0].mxu0
      %2058 = vmatprep.mubr.f32.mxu0 0.0
      %2059 = vmatmul.mubr.f32.gmra.mrb[0].mxu0 %v1969
      %v2060 = vpop.f32.mrb[0].mxu0
      %v2061 = vadd.f32 %v1962, %v2060
      %v2062 = vpop.f32.mrb[0].mxu0
      %2063 = vmatprep.mubr.f32.mxu0 0.0
      %2064 = vmatmul.mubr.f32.gmra.mrb[0].mxu0 %v1972
      %v2065 = vpop.f32.mrb[0].mxu0
      %v2066 = vadd.f32 %v1962, %v2065
      %v2067 = vpop.f32.mrb[0].mxu0
      %2068 = vmatprep.mubr.f32.mxu0 0.0
      %2069 = vmatmul.mubr.f32.gmra.mrb[0].mxu0 %v1975
      %v2070 = vpop.f32.mrb[0].mxu0
      %v2071 = vadd.f32 %v1962, %v2070
      %v2072 = vpop.f32.mrb[0].mxu0
      %2073 = vmatprep.mubr.f32.mxu0 0.0
      %2074 = vmatmul.mubr.f32.gmra.mrb[0].mxu0 %v1978
      %v2075 = vpop.f32.mrb[0].mxu0
      %v2076 = vadd.f32 %v1962, %v2075
      %v2077 = vpop.f32.mrb[0].mxu0
      %2078 = vmatprep.mubr.f32.mxu0 0.0
      %2079 = vmatmul.mubr.f32.gmra.mrb[0].mxu0 %v1981
      %v2080 = vpop.f32.mrb[0].mxu0
      %v2081 = vadd.f32 %v1962, %v2080
      %v2082 = vpop.f32.mrb[0].mxu0
      %2083 = vmatprep.mubr.f32.mxu0 0.0
      %2084 = vmatmul.mubr.f32.gmra.mrb[0].mxu0 %v1984
      %v2085 = vpop.f32.mrb[0].mxu0
      %v2086 = vadd.f32 %v1962, %v2085
      %v2087 = vpop.f32.mrb[0].mxu0
      %2088 = vmatprep.mubr.f32.mxu0 0.0
      %2089 = vmatmul.mubr.f32.gmra.mrb[0].mxu0 %v1987
      %v2090 = vpop.f32.mrb[0].mxu0
      %v2091 = vadd.f32 %v1962, %v2090
      %v2092 = vpop.f32.mrb[0].mxu0
      %2093 = vdwg.mxu0
      %v2094 = vmax.f32 %v2056, 0.0
      %v2095 = vmax.f32 %v2061, 0.0
      %v2096 = vmax.f32 %v2066, 0.0
      %v2097 = vmax.f32 %v2071, 0.0
      %v2098 = vmax.f32 %v2076, 0.0
      %v2099 = vmax.f32 %v2081, 0.0
      %v2100 = vmax.f32 %v2086, 0.0
      %v2101 = vmax.f32 %v2091, 0.0
      %v2102 = vld [vmem:[%s27] sm:$0xff]
      %v2103 = vld [vmem:[%s27 + $0x8] sm:$0xff]
      %v2104 = vld [vmem:[%s27 + $0x10] sm:$0xff]
      %v2105 = vld [vmem:[%s27 + $0x18] sm:$0xff]
      %v2106 = vld [vmem:[%s29] sm:$0x1]
      %v2108 = vlaneseq
      %v2109 = vshrl.u32 %v2108, 7
      %v2110 = vsub.s32 0, %v2109
      %v2111 = vrot.slane %v2106, %v2110
      %2113 = vrot.lane.b32.xlu0 %v1023, 120
      %v2114 = vpop.permute.xlu0 %2113
      %2115 = vrot.lane.b32.xlu0 %v1025, 120
      %v2116 = vpop.permute.xlu0 %2115
      %2117 = vrot.lane.b32.xlu0 %v1027, 120
      %v2118 = vpop.permute.xlu0 %2117
      %2119 = vrot.lane.b32.xlu0 %v1029, 120
      %v2120 = vpop.permute.xlu0 %2119
      %2121 = vrot.lane.b32.xlu0 %v1031, 120
      %v2122 = vpop.permute.xlu0 %2121
      %2123 = vrot.lane.b32.xlu0 %v1033, 120
      %v2124 = vpop.permute.xlu0 %2123
      %2125 = vrot.lane.b32.xlu0 %v1035, 120
      %v2126 = vpop.permute.xlu0 %2125
      %2127 = vrot.lane.b32.xlu0 %v1037, 120
      %v2128 = vpop.permute.xlu0 %2127
      %v2129 = vsel %vm1539, %v2114, 0
      %v2131 = vsel %vm1539, %v2116, 0
      %v2133 = vsel %vm1539, %v2118, 0
      %v2135 = vsel %vm1539, %v2120, 0
      %v2137 = vsel %vm1539, %v2122, 0
      %v2139 = vsel %vm1539, %v2124, 0
      %v2141 = vsel %vm1539, %v2126, 0
      %v2143 = vsel %vm1539, %v2128, 0
      %2145 = vmatprep.subr.mxu0 0.0
      %2146 = vmatpush1.msra.mxu0 %v2102
      %2147 = vmatprep.subr.mxu0 0.0
      %2148 = vmatpush1.msra.mxu0 %v2103
      %2149 = vmatprep.subr.mxu0 0.0
      %2150 = vmatpush1.msra.mxu0 %v2104
      %2151 = vmatprep.subr.mxu0 0.0
      %2152 = vmatpush1.msra.mxu0 %v2105
      %2153 = vmatprep.subr.mxu0 0.0
      %2154 = vmatpush1.msra.mxu0 0.0
      %2155 = vmatprep.subr.mxu0 0.0
      %2156 = vmatpush1.msra.mxu0 0.0
      %2157 = vmatprep.subr.mxu0 0.0
      %2158 = vmatpush1.msra.mxu0 0.0
      %2159 = vmatprep.subr.mxu0 0.0
      %2160 = vmatpush1.msra.mxu0 0.0
      %2161 = vmatprep.subr.mxu0 0.0
      %2162 = vmatpush1.msra.mxu0 0.0
      %2163 = vmatprep.subr.mxu0 0.0
      %2164 = vmatpush1.msra.mxu0 0.0
      %2165 = vmatprep.subr.mxu0 0.0
      %2166 = vmatpush1.msra.mxu0 0.0
      %2167 = vmatprep.subr.mxu0 0.0
      %2168 = vmatpush1.msra.mxu0 0.0
      %2169 = vmatprep.subr.mxu0 0.0
      %2170 = vmatpush1.msra.mxu0 0.0
      %2171 = vmatprep.subr.mxu0 0.0
      %2172 = vmatpush1.msra.mxu0 0.0
      %2173 = vmatprep.subr.mxu0 0.0
      %2174 = vmatpush1.msra.mxu0 0.0
      %2175 = vmatprep.subr.mxu0 0.0
      %2176 = vmatpush1.msra.mxu0 0.0
      %2177 = vmatprep.subr.mxu0 0.0
      %2178 = vmatpush1.msra.mxu0 0.0
      %2179 = vmatprep.subr.mxu0 0.0
      %2180 = vmatpush1.msra.mxu0 0.0
      %2181 = vmatprep.subr.mxu0 0.0
      %2182 = vmatpush1.msra.mxu0 0.0
      %2183 = vmatprep.subr.mxu0 0.0
      %2184 = vmatpush1.msra.mxu0 0.0
      %2185 = vmatprep.subr.mxu0 0.0
      %2186 = vmatpush1.msra.mxu0 0.0
      %2187 = vmatprep.subr.mxu0 0.0
      %2188 = vmatpush1.msra.mxu0 0.0
      %2189 = vmatprep.subr.mxu0 0.0
      %2190 = vmatpush1.msra.mxu0 0.0
      %2191 = vmatprep.subr.mxu0 0.0
      %2192 = vmatpush1.msra.mxu0 0.0
      %2193 = vmatprep.subr.mxu0 0.0
      %2194 = vmatpush1.msra.mxu0 0.0
      %2195 = vmatprep.subr.mxu0 0.0
      %2196 = vmatpush1.msra.mxu0 0.0
      %2197 = vmatprep.subr.mxu0 0.0
      %2198 = vmatpush1.msra.mxu0 0.0
      %2199 = vmatprep.subr.mxu0 0.0
      %2200 = vmatpush1.msra.mxu0 0.0
      %2201 = vmatprep.subr.mxu0 0.0
      %2202 = vmatpush1.msra.mxu0 0.0
      %2203 = vmatprep.subr.mxu0 0.0
      %2204 = vmatpush1.msra.mxu0 0.0
      %2205 = vmatprep.subr.mxu0 0.0
      %2206 = vmatpush1.msra.mxu0 0.0
      %2207 = vmatprep.subr.mxu0 0.0
      %2208 = vmatpush1.msra.mxu0 0.0
      %2209 = vmatprep.mubr.f32.mxu0 0.0
      %2210 = vmatmul.mubr.f32.gmra.mrb[0].mxu0 %v2129
      %v2211 = vpop.f32.mrb[0].mxu0
      %v2212 = vadd.f32 %v2111, %v2211
      %v2213 = vpop.f32.mrb[0].mxu0
      %2214 = vmatprep.mubr.f32.mxu0 0.0
      %2215 = vmatmul.mubr.f32.gmra.mrb[0].mxu0 %v2131
      %v2216 = vpop.f32.mrb[0].mxu0
      %v2217 = vadd.f32 %v2111, %v2216
      %v2218 = vpop.f32.mrb[0].mxu0
      %2219 = vmatprep.mubr.f32.mxu0 0.0
      %2220 = vmatmul.mubr.f32.gmra.mrb[0].mxu0 %v2133
      %v2221 = vpop.f32.mrb[0].mxu0
      %v2222 = vadd.f32 %v2111, %v2221
      %v2223 = vpop.f32.mrb[0].mxu0
      %2224 = vmatprep.mubr.f32.mxu0 0.0
      %2225 = vmatmul.mubr.f32.gmra.mrb[0].mxu0 %v2135
      %v2226 = vpop.f32.mrb[0].mxu0
      %v2227 = vadd.f32 %v2111, %v2226
      %v2228 = vpop.f32.mrb[0].mxu0
      %2229 = vmatprep.mubr.f32.mxu0 0.0
      %2230 = vmatmul.mubr.f32.gmra.mrb[0].mxu0 %v2137
      %v2231 = vpop.f32.mrb[0].mxu0
      %v2232 = vadd.f32 %v2111, %v2231
      %v2233 = vpop.f32.mrb[0].mxu0
      %2234 = vmatprep.mubr.f32.mxu0 0.0
      %2235 = vmatmul.mubr.f32.gmra.mrb[0].mxu0 %v2139
      %v2236 = vpop.f32.mrb[0].mxu0
      %v2237 = vadd.f32 %v2111, %v2236
      %v2238 = vpop.f32.mrb[0].mxu0
      %2239 = vmatprep.mubr.f32.mxu0 0.0
      %2240 = vmatmul.mubr.f32.gmra.mrb[0].mxu0 %v2141
      %v2241 = vpop.f32.mrb[0].mxu0
      %v2242 = vadd.f32 %v2111, %v2241
      %v2243 = vpop.f32.mrb[0].mxu0
      %2244 = vmatprep.mubr.f32.mxu0 0.0
      %2245 = vmatmul.mubr.f32.gmra.mrb[0].mxu0 %v2143
      %v2246 = vpop.f32.mrb[0].mxu0
      %v2247 = vadd.f32 %v2111, %v2246
      %v2248 = vpop.f32.mrb[0].mxu0
      %2249 = vdwg.mxu0
      %v2250 = vmax.f32 %v2212, 0.0
      %v2251 = vmax.f32 %v2217, 0.0
      %v2252 = vmax.f32 %v2222, 0.0
      %v2253 = vmax.f32 %v2227, 0.0
      %v2254 = vmax.f32 %v2232, 0.0
      %v2255 = vmax.f32 %v2237, 0.0
      %v2256 = vmax.f32 %v2242, 0.0
      %v2257 = vmax.f32 %v2247, 0.0
      %v2258 = vld [vmem:[%s31] sm:$0xff]
      %v2259 = vld [vmem:[%s31 + $0x8] sm:$0xff]
      %v2260 = vld [vmem:[%s33] sm:$0x1]
      %v2262 = vlaneseq
      %v2263 = vshrl.u32 %v2262, 7
      %v2264 = vsub.s32 0, %v2263
      %v2265 = vrot.slane %v2260, %v2264
      %v2268 = vsel %vm1072, %v2250, 0
      %v2271 = vsel %vm1072, %v2251, 0
      %v2274 = vsel %vm1072, %v2252, 0
      %v2277 = vsel %vm1072, %v2253, 0
      %v2280 = vsel %vm1072, %v2254, 0
      %v2283 = vsel %vm1072, %v2255, 0
      %v2286 = vsel %vm1072, %v2256, 0
      %v2289 = vsel %vm1072, %v2257, 0
      %2291 = vmatprep.subr.mxu0 0.0
      %2292 = vmatpush1.msra.mxu0 %v2258
      %2293 = vmatprep.subr.mxu0 0.0
      %2294 = vmatpush1.msra.mxu0 %v2259
      %2295 = vmatprep.subr.mxu0 0.0
      %2296 = vmatpush1.msra.mxu0 0.0
      %2297 = vmatprep.subr.mxu0 0.0
      %2298 = vmatpush1.msra.mxu0 0.0
      %2299 = vmatprep.subr.mxu0 0.0
      %2300 = vmatpush1.msra.mxu0 0.0
      %2301 = vmatprep.subr.mxu0 0.0
      %2302 = vmatpush1.msra.mxu0 0.0
      %2303 = vmatprep.subr.mxu0 0.0
      %2304 = vmatpush1.msra.mxu0 0.0
      %2305 = vmatprep.subr.mxu0 0.0
      %2306 = vmatpush1.msra.mxu0 0.0
      %2307 = vmatprep.subr.mxu0 0.0
      %2308 = vmatpush1.msra.mxu0 0.0
      %2309 = vmatprep.subr.mxu0 0.0
      %2310 = vmatpush1.msra.mxu0 0.0
      %2311 = vmatprep.subr.mxu0 0.0
      %2312 = vmatpush1.msra.mxu0 0.0
      %2313 = vmatprep.subr.mxu0 0.0
      %2314 = vmatpush1.msra.mxu0 0.0
      %2315 = vmatprep.subr.mxu0 0.0
      %2316 = vmatpush1.msra.mxu0 0.0
      %2317 = vmatprep.subr.mxu0 0.0
      %2318 = vmatpush1.msra.mxu0 0.0
      %2319 = vmatprep.subr.mxu0 0.0
      %2320 = vmatpush1.msra.mxu0 0.0
      %2321 = vmatprep.subr.mxu0 0.0
      %2322 = vmatpush1.msra.mxu0 0.0
      %2323 = vmatprep.subr.mxu0 0.0
      %2324 = vmatpush1.msra.mxu0 0.0
      %2325 = vmatprep.subr.mxu0 0.0
      %2326 = vmatpush1.msra.mxu0 0.0
      %2327 = vmatprep.subr.mxu0 0.0
      %2328 = vmatpush1.msra.mxu0 0.0
      %2329 = vmatprep.subr.mxu0 0.0
      %2330 = vmatpush1.msra.mxu0 0.0
      %2331 = vmatprep.subr.mxu0 0.0
      %2332 = vmatpush1.msra.mxu0 0.0
      %2333 = vmatprep.subr.mxu0 0.0
      %2334 = vmatpush1.msra.mxu0 0.0
      %2335 = vmatprep.subr.mxu0 0.0
      %2336 = vmatpush1.msra.mxu0 0.0
      %2337 = vmatprep.subr.mxu0 0.0
      %2338 = vmatpush1.msra.mxu0 0.0
      %2339 = vmatprep.subr.mxu0 0.0
      %2340 = vmatpush1.msra.mxu0 0.0
      %2341 = vmatprep.subr.mxu0 0.0
      %2342 = vmatpush1.msra.mxu0 0.0
      %2343 = vmatprep.subr.mxu0 0.0
      %2344 = vmatpush1.msra.mxu0 0.0
      %2345 = vmatprep.subr.mxu0 0.0
      %2346 = vmatpush1.msra.mxu0 0.0
      %2347 = vmatprep.subr.mxu0 0.0
      %2348 = vmatpush1.msra.mxu0 0.0
      %2349 = vmatprep.subr.mxu0 0.0
      %2350 = vmatpush1.msra.mxu0 0.0
      %2351 = vmatprep.subr.mxu0 0.0
      %2352 = vmatpush1.msra.mxu0 0.0
      %2353 = vmatprep.subr.mxu0 0.0
      %2354 = vmatpush1.msra.mxu0 0.0
      %2355 = vmatprep.mubr.f32.mxu0 0.0
      %2356 = vmatmul.mubr.f32.gmra.mrb[0].mxu0 %v2268
      %v2357 = vpop.f32.mrb[0].mxu0
      %v2358 = vadd.f32 %v2265, %v2357
      %v2359 = vpop.f32.mrb[0].mxu0
      %2360 = vmatprep.mubr.f32.mxu0 0.0
      %2361 = vmatmul.mubr.f32.gmra.mrb[0].mxu0 %v2271
      %v2362 = vpop.f32.mrb[0].mxu0
      %v2363 = vadd.f32 %v2265, %v2362
      %v2364 = vpop.f32.mrb[0].mxu0
      %2365 = vmatprep.mubr.f32.mxu0 0.0
      %2366 = vmatmul.mubr.f32.gmra.mrb[0].mxu0 %v2274
      %v2367 = vpop.f32.mrb[0].mxu0
      %v2368 = vadd.f32 %v2265, %v2367
      %v2369 = vpop.f32.mrb[0].mxu0
      %2370 = vmatprep.mubr.f32.mxu0 0.0
      %2371 = vmatmul.mubr.f32.gmra.mrb[0].mxu0 %v2277
      %v2372 = vpop.f32.mrb[0].mxu0
      %v2373 = vadd.f32 %v2265, %v2372
      %v2374 = vpop.f32.mrb[0].mxu0
      %2375 = vmatprep.mubr.f32.mxu0 0.0
      %2376 = vmatmul.mubr.f32.gmra.mrb[0].mxu0 %v2280
      %v2377 = vpop.f32.mrb[0].mxu0
      %v2378 = vadd.f32 %v2265, %v2377
      %v2379 = vpop.f32.mrb[0].mxu0
      %2380 = vmatprep.mubr.f32.mxu0 0.0
      %2381 = vmatmul.mubr.f32.gmra.mrb[0].mxu0 %v2283
      %v2382 = vpop.f32.mrb[0].mxu0
      %v2383 = vadd.f32 %v2265, %v2382
      %v2384 = vpop.f32.mrb[0].mxu0
      %2385 = vmatprep.mubr.f32.mxu0 0.0
      %2386 = vmatmul.mubr.f32.gmra.mrb[0].mxu0 %v2286
      %v2387 = vpop.f32.mrb[0].mxu0
      %v2388 = vadd.f32 %v2265, %v2387
      %v2389 = vpop.f32.mrb[0].mxu0
      %2390 = vmatprep.mubr.f32.mxu0 0.0
      %2391 = vmatmul.mubr.f32.gmra.mrb[0].mxu0 %v2289
      %v2392 = vpop.f32.mrb[0].mxu0
      %v2393 = vadd.f32 %v2265, %v2392
      %v2394 = vpop.f32.mrb[0].mxu0
      %2395 = vdwg.mxu0
      %v2396 = vmax.f32 %v2358, 0.0
      %v2397 = vmax.f32 %v2363, 0.0
      %v2398 = vmax.f32 %v2368, 0.0
      %v2399 = vmax.f32 %v2373, 0.0
      %v2400 = vmax.f32 %v2378, 0.0
      %v2401 = vmax.f32 %v2383, 0.0
      %v2402 = vmax.f32 %v2388, 0.0
      %v2403 = vmax.f32 %v2393, 0.0
      %2412 = vrot.lane.b32.xlu0 %v2396, 64
      %v2413 = vpop.permute.xlu0 %2412
      %2414 = vrot.lane.b32.xlu0 %v2397, 64
      %v2415 = vpop.permute.xlu0 %2414
      %2416 = vrot.lane.b32.xlu0 %v2398, 64
      %v2417 = vpop.permute.xlu0 %2416
      %2418 = vrot.lane.b32.xlu0 %v2399, 64
      %v2419 = vpop.permute.xlu0 %2418
      %2420 = vrot.lane.b32.xlu0 %v2400, 64
      %v2421 = vpop.permute.xlu0 %2420
      %2422 = vrot.lane.b32.xlu0 %v2401, 64
      %v2423 = vpop.permute.xlu0 %2422
      %2424 = vrot.lane.b32.xlu0 %v2402, 64
      %v2425 = vpop.permute.xlu0 %2424
      %2426 = vrot.lane.b32.xlu0 %v2403, 64
      %v2427 = vpop.permute.xlu0 %2426
      %v2436 = vadd.f32 %v1023, %v2413
      %v2437 = vadd.f32 %v1025, %v2415
      %v2438 = vadd.f32 %v1027, %v2417
      %v2439 = vadd.f32 %v1029, %v2419
      %v2440 = vadd.f32 %v1031, %v2421
      %v2441 = vadd.f32 %v1033, %v2423
      %v2442 = vadd.f32 %v1035, %v2425
      %v2443 = vadd.f32 %v1037, %v2427
      %2452 = vrot.lane.b32.xlu0 %v2094, 56
      %v2453 = vpop.permute.xlu0 %2452
      %2454 = vrot.lane.b32.xlu0 %v2095, 56
      %v2455 = vpop.permute.xlu0 %2454
      %2456 = vrot.lane.b32.xlu0 %v2096, 56
      %v2457 = vpop.permute.xlu0 %2456
      %2458 = vrot.lane.b32.xlu0 %v2097, 56
      %v2459 = vpop.permute.xlu0 %2458
      %2460 = vrot.lane.b32.xlu0 %v2098, 56
      %v2461 = vpop.permute.xlu0 %2460
      %2462 = vrot.lane.b32.xlu0 %v2099, 56
      %v2463 = vpop.permute.xlu0 %2462
      %2464 = vrot.lane.b32.xlu0 %v2100, 56
      %v2465 = vpop.permute.xlu0 %2464
      %2466 = vrot.lane.b32.xlu0 %v2101, 56
      %v2467 = vpop.permute.xlu0 %2466
      %v2476 = vadd.f32 %v2436, %v2453
      %v2477 = vadd.f32 %v2437, %v2455
      %v2478 = vadd.f32 %v2438, %v2457
      %v2479 = vadd.f32 %v2439, %v2459
      %v2480 = vadd.f32 %v2440, %v2461
      %v2481 = vadd.f32 %v2441, %v2463
      %v2482 = vadd.f32 %v2442, %v2465
      %v2483 = vadd.f32 %v2443, %v2467
      %v2484 = vld [vmem:[%s35] sm:$0xff]
      %v2485 = vld [vmem:[%s35 + $0x8] sm:$0xff]
      %v2486 = vld [vmem:[%s37] sm:$0x1]
      %v2488 = vlaneseq
      %v2489 = vshrl.u32 %v2488, 7
      %v2490 = vsub.s32 0, %v2489
      %v2491 = vrot.slane %v2486, %v2490
      %2493 = vrot.lane.b32.xlu0 %v1023, 88
      %v2494 = vpop.permute.xlu0 %2493
      %2495 = vrot.lane.b32.xlu0 %v1025, 88
      %v2496 = vpop.permute.xlu0 %2495
      %2497 = vrot.lane.b32.xlu0 %v1027, 88
      %v2498 = vpop.permute.xlu0 %2497
      %2499 = vrot.lane.b32.xlu0 %v1029, 88
      %v2500 = vpop.permute.xlu0 %2499
      %2501 = vrot.lane.b32.xlu0 %v1031, 88
      %v2502 = vpop.permute.xlu0 %2501
      %2503 = vrot.lane.b32.xlu0 %v1033, 88
      %v2504 = vpop.permute.xlu0 %2503
      %2505 = vrot.lane.b32.xlu0 %v1035, 88
      %v2506 = vpop.permute.xlu0 %2505
      %2507 = vrot.lane.b32.xlu0 %v1037, 88
      %v2508 = vpop.permute.xlu0 %2507
      %v2509 = vsel %vm1072, %v2494, 0
      %v2511 = vsel %vm1072, %v2496, 0
      %v2513 = vsel %vm1072, %v2498, 0
      %v2515 = vsel %vm1072, %v2500, 0
      %v2517 = vsel %vm1072, %v2502, 0
      %v2519 = vsel %vm1072, %v2504, 0
      %v2521 = vsel %vm1072, %v2506, 0
      %v2523 = vsel %vm1072, %v2508, 0
      %2525 = vmatprep.subr.mxu0 0.0
      %2526 = vmatpush1.msra.mxu0 %v2484
      %2527 = vmatprep.subr.mxu0 0.0
      %2528 = vmatpush1.msra.mxu0 %v2485
      %2529 = vmatprep.subr.mxu0 0.0
      %2530 = vmatpush1.msra.mxu0 0.0
      %2531 = vmatprep.subr.mxu0 0.0
      %2532 = vmatpush1.msra.mxu0 0.0
      %2533 = vmatprep.subr.mxu0 0.0
      %2534 = vmatpush1.msra.mxu0 0.0
      %2535 = vmatprep.subr.mxu0 0.0
      %2536 = vmatpush1.msra.mxu0 0.0
      %2537 = vmatprep.subr.mxu0 0.0
      %2538 = vmatpush1.msra.mxu0 0.0
      %2539 = vmatprep.subr.mxu0 0.0
      %2540 = vmatpush1.msra.mxu0 0.0
      %2541 = vmatprep.subr.mxu0 0.0
      %2542 = vmatpush1.msra.mxu0 0.0
      %2543 = vmatprep.subr.mxu0 0.0
      %2544 = vmatpush1.msra.mxu0 0.0
      %2545 = vmatprep.subr.mxu0 0.0
      %2546 = vmatpush1.msra.mxu0 0.0
      %2547 = vmatprep.subr.mxu0 0.0
      %2548 = vmatpush1.msra.mxu0 0.0
      %2549 = vmatprep.subr.mxu0 0.0
      %2550 = vmatpush1.msra.mxu0 0.0
      %2551 = vmatprep.subr.mxu0 0.0
      %2552 = vmatpush1.msra.mxu0 0.0
      %2553 = vmatprep.subr.mxu0 0.0
      %2554 = vmatpush1.msra.mxu0 0.0
      %2555 = vmatprep.subr.mxu0 0.0
      %2556 = vmatpush1.msra.mxu0 0.0
      %2557 = vmatprep.subr.mxu0 0.0
      %2558 = vmatpush1.msra.mxu0 0.0
      %2559 = vmatprep.subr.mxu0 0.0
      %2560 = vmatpush1.msra.mxu0 0.0
      %2561 = vmatprep.subr.mxu0 0.0
      %2562 = vmatpush1.msra.mxu0 0.0
      %2563 = vmatprep.subr.mxu0 0.0
      %2564 = vmatpush1.msra.mxu0 0.0
      %2565 = vmatprep.subr.mxu0 0.0
      %2566 = vmatpush1.msra.mxu0 0.0
      %2567 = vmatprep.subr.mxu0 0.0
      %2568 = vmatpush1.msra.mxu0 0.0
      %2569 = vmatprep.subr.mxu0 0.0
      %2570 = vmatpush1.msra.mxu0 0.0
      %2571 = vmatprep.subr.mxu0 0.0
      %2572 = vmatpush1.msra.mxu0 0.0
      %2573 = vmatprep.subr.mxu0 0.0
      %2574 = vmatpush1.msra.mxu0 0.0
      %2575 = vmatprep.subr.mxu0 0.0
      %2576 = vmatpush1.msra.mxu0 0.0
      %2577 = vmatprep.subr.mxu0 0.0
      %2578 = vmatpush1.msra.mxu0 0.0
      %2579 = vmatprep.subr.mxu0 0.0
      %2580 = vmatpush1.msra.mxu0 0.0
      %2581 = vmatprep.subr.mxu0 0.0
      %2582 = vmatpush1.msra.mxu0 0.0
      %2583 = vmatprep.subr.mxu0 0.0
      %2584 = vmatpush1.msra.mxu0 0.0
      %2585 = vmatprep.subr.mxu0 0.0
      %2586 = vmatpush1.msra.mxu0 0.0
      %2587 = vmatprep.subr.mxu0 0.0
      %2588 = vmatpush1.msra.mxu0 0.0
      %2589 = vmatprep.mubr.f32.mxu0 0.0
      %2590 = vmatmul.mubr.f32.gmra.mrb[0].mxu0 %v2509
      %v2591 = vpop.f32.mrb[0].mxu0
      %v2592 = vadd.f32 %v2491, %v2591
      %v2593 = vpop.f32.mrb[0].mxu0
      %2594 = vmatprep.mubr.f32.mxu0 0.0
      %2595 = vmatmul.mubr.f32.gmra.mrb[0].mxu0 %v2511
      %v2596 = vpop.f32.mrb[0].mxu0
      %v2597 = vadd.f32 %v2491, %v2596
      %v2598 = vpop.f32.mrb[0].mxu0
      %2599 = vmatprep.mubr.f32.mxu0 0.0
      %2600 = vmatmul.mubr.f32.gmra.mrb[0].mxu0 %v2513
      %v2601 = vpop.f32.mrb[0].mxu0
      %v2602 = vadd.f32 %v2491, %v2601
      %v2603 = vpop.f32.mrb[0].mxu0
      %2604 = vmatprep.mubr.f32.mxu0 0.0
      %2605 = vmatmul.mubr.f32.gmra.mrb[0].mxu0 %v2515
      %v2606 = vpop.f32.mrb[0].mxu0
      %v2607 = vadd.f32 %v2491, %v2606
      %v2608 = vpop.f32.mrb[0].mxu0
      %2609 = vmatprep.mubr.f32.mxu0 0.0
      %2610 = vmatmul.mubr.f32.gmra.mrb[0].mxu0 %v2517
      %v2611 = vpop.f32.mrb[0].mxu0
      %v2612 = vadd.f32 %v2491, %v2611
      %v2613 = vpop.f32.mrb[0].mxu0
      %2614 = vmatprep.mubr.f32.mxu0 0.0
      %2615 = vmatmul.mubr.f32.gmra.mrb[0].mxu0 %v2519
      %v2616 = vpop.f32.mrb[0].mxu0
      %v2617 = vadd.f32 %v2491, %v2616
      %v2618 = vpop.f32.mrb[0].mxu0
      %2619 = vmatprep.mubr.f32.mxu0 0.0
      %2620 = vmatmul.mubr.f32.gmra.mrb[0].mxu0 %v2521
      %v2621 = vpop.f32.mrb[0].mxu0
      %v2622 = vadd.f32 %v2491, %v2621
      %v2623 = vpop.f32.mrb[0].mxu0
      %2624 = vmatprep.mubr.f32.mxu0 0.0
      %2625 = vmatmul.mubr.f32.gmra.mrb[0].mxu0 %v2523
      %v2626 = vpop.f32.mrb[0].mxu0
      %v2627 = vadd.f32 %v2491, %v2626
      %v2628 = vpop.f32.mrb[0].mxu0
      %2629 = vdwg.mxu0
      %v2630 = vmax.f32 %v2592, 0.0
      %v2631 = vmax.f32 %v2597, 0.0
      %v2632 = vmax.f32 %v2602, 0.0
      %v2633 = vmax.f32 %v2607, 0.0
      %v2634 = vmax.f32 %v2612, 0.0
      %v2635 = vmax.f32 %v2617, 0.0
      %v2636 = vmax.f32 %v2622, 0.0
      %v2637 = vmax.f32 %v2627, 0.0
      %v2638 = vld [vmem:[%s39] sm:$0xff]
      %v2639 = vld [vmem:[%s39 + $0x8] sm:$0xff]
      %v2640 = vld [vmem:[%s41] sm:$0x1]
      %v2642 = vlaneseq
      %v2643 = vshrl.u32 %v2642, 7
      %v2644 = vsub.s32 0, %v2643
      %v2645 = vrot.slane %v2640, %v2644
      %v2648 = vsel %vm1072, %v2630, 0
      %v2651 = vsel %vm1072, %v2631, 0
      %v2654 = vsel %vm1072, %v2632, 0
      %v2657 = vsel %vm1072, %v2633, 0
      %v2660 = vsel %vm1072, %v2634, 0
      %v2663 = vsel %vm1072, %v2635, 0
      %v2666 = vsel %vm1072, %v2636, 0
      %v2669 = vsel %vm1072, %v2637, 0
      %2671 = vmatprep.subr.mxu0 0.0
      %2672 = vmatpush1.msra.mxu0 %v2638
      %2673 = vmatprep.subr.mxu0 0.0
      %2674 = vmatpush1.msra.mxu0 %v2639
      %2675 = vmatprep.subr.mxu0 0.0
      %2676 = vmatpush1.msra.mxu0 0.0
      %2677 = vmatprep.subr.mxu0 0.0
      %2678 = vmatpush1.msra.mxu0 0.0
      %2679 = vmatprep.subr.mxu0 0.0
      %2680 = vmatpush1.msra.mxu0 0.0
      %2681 = vmatprep.subr.mxu0 0.0
      %2682 = vmatpush1.msra.mxu0 0.0
      %2683 = vmatprep.subr.mxu0 0.0
      %2684 = vmatpush1.msra.mxu0 0.0
      %2685 = vmatprep.subr.mxu0 0.0
      %2686 = vmatpush1.msra.mxu0 0.0
      %2687 = vmatprep.subr.mxu0 0.0
      %2688 = vmatpush1.msra.mxu0 0.0
      %2689 = vmatprep.subr.mxu0 0.0
      %2690 = vmatpush1.msra.mxu0 0.0
      %2691 = vmatprep.subr.mxu0 0.0
      %2692 = vmatpush1.msra.mxu0 0.0
      %2693 = vmatprep.subr.mxu0 0.0
      %2694 = vmatpush1.msra.mxu0 0.0
      %2695 = vmatprep.subr.mxu0 0.0
      %2696 = vmatpush1.msra.mxu0 0.0
      %2697 = vmatprep.subr.mxu0 0.0
      %2698 = vmatpush1.msra.mxu0 0.0
      %2699 = vmatprep.subr.mxu0 0.0
      %2700 = vmatpush1.msra.mxu0 0.0
      %2701 = vmatprep.subr.mxu0 0.0
      %2702 = vmatpush1.msra.mxu0 0.0
      %2703 = vmatprep.subr.mxu0 0.0
      %2704 = vmatpush1.msra.mxu0 0.0
      %2705 = vmatprep.subr.mxu0 0.0
      %2706 = vmatpush1.msra.mxu0 0.0
      %2707 = vmatprep.subr.mxu0 0.0
      %2708 = vmatpush1.msra.mxu0 0.0
      %2709 = vmatprep.subr.mxu0 0.0
      %2710 = vmatpush1.msra.mxu0 0.0
      %2711 = vmatprep.subr.mxu0 0.0
      %2712 = vmatpush1.msra.mxu0 0.0
      %2713 = vmatprep.subr.mxu0 0.0
      %2714 = vmatpush1.msra.mxu0 0.0
      %2715 = vmatprep.subr.mxu0 0.0
      %2716 = vmatpush1.msra.mxu0 0.0
      %2717 = vmatprep.subr.mxu0 0.0
      %2718 = vmatpush1.msra.mxu0 0.0
      %2719 = vmatprep.subr.mxu0 0.0
      %2720 = vmatpush1.msra.mxu0 0.0
      %2721 = vmatprep.subr.mxu0 0.0
      %2722 = vmatpush1.msra.mxu0 0.0
      %2723 = vmatprep.subr.mxu0 0.0
      %2724 = vmatpush1.msra.mxu0 0.0
      %2725 = vmatprep.subr.mxu0 0.0
      %2726 = vmatpush1.msra.mxu0 0.0
      %2727 = vmatprep.subr.mxu0 0.0
      %2728 = vmatpush1.msra.mxu0 0.0
      %2729 = vmatprep.subr.mxu0 0.0
      %2730 = vmatpush1.msra.mxu0 0.0
      %2731 = vmatprep.subr.mxu0 0.0
      %2732 = vmatpush1.msra.mxu0 0.0
      %2733 = vmatprep.subr.mxu0 0.0
      %2734 = vmatpush1.msra.mxu0 0.0
      %2735 = vmatprep.mubr.f32.mxu0 0.0
      %2736 = vmatmul.mubr.f32.gmra.mrb[0].mxu0 %v2648
      %v2737 = vpop.f32.mrb[0].mxu0
      %v2738 = vadd.f32 %v2645, %v2737
      %v2739 = vpop.f32.mrb[0].mxu0
      %2740 = vmatprep.mubr.f32.mxu0 0.0
      %2741 = vmatmul.mubr.f32.gmra.mrb[0].mxu0 %v2651
      %v2742 = vpop.f32.mrb[0].mxu0
      %v2743 = vadd.f32 %v2645, %v2742
      %v2744 = vpop.f32.mrb[0].mxu0
      %2745 = vmatprep.mubr.f32.mxu0 0.0
      %2746 = vmatmul.mubr.f32.gmra.mrb[0].mxu0 %v2654
      %v2747 = vpop.f32.mrb[0].mxu0
      %v2748 = vadd.f32 %v2645, %v2747
      %v2749 = vpop.f32.mrb[0].mxu0
      %2750 = vmatprep.mubr.f32.mxu0 0.0
      %2751 = vmatmul.mubr.f32.gmra.mrb[0].mxu0 %v2657
      %v2752 = vpop.f32.mrb[0].mxu0
      %v2753 = vadd.f32 %v2645, %v2752
      %v2754 = vpop.f32.mrb[0].mxu0
      %2755 = vmatprep.mubr.f32.mxu0 0.0
      %2756 = vmatmul.mubr.f32.gmra.mrb[0].mxu0 %v2660
      %v2757 = vpop.f32.mrb[0].mxu0
      %v2758 = vadd.f32 %v2645, %v2757
      %v2759 = vpop.f32.mrb[0].mxu0
      %2760 = vmatprep.mubr.f32.mxu0 0.0
      %2761 = vmatmul.mubr.f32.gmra.mrb[0].mxu0 %v2663
      %v2762 = vpop.f32.mrb[0].mxu0
      %v2763 = vadd.f32 %v2645, %v2762
      %v2764 = vpop.f32.mrb[0].mxu0
      %2765 = vmatprep.mubr.f32.mxu0 0.0
      %2766 = vmatmul.mubr.f32.gmra.mrb[0].mxu0 %v2666
      %v2767 = vpop.f32.mrb[0].mxu0
      %v2768 = vadd.f32 %v2645, %v2767
      %v2769 = vpop.f32.mrb[0].mxu0
      %2770 = vmatprep.mubr.f32.mxu0 0.0
      %2771 = vmatmul.mubr.f32.gmra.mrb[0].mxu0 %v2669
      %v2772 = vpop.f32.mrb[0].mxu0
      %v2773 = vadd.f32 %v2645, %v2772
      %v2774 = vpop.f32.mrb[0].mxu0
      %2775 = vdwg.mxu0
      %v2776 = vmax.f32 %v2738, 0.0
      %v2777 = vmax.f32 %v2743, 0.0
      %v2778 = vmax.f32 %v2748, 0.0
      %v2779 = vmax.f32 %v2753, 0.0
      %v2780 = vmax.f32 %v2758, 0.0
      %v2781 = vmax.f32 %v2763, 0.0
      %v2782 = vmax.f32 %v2768, 0.0
      %v2783 = vmax.f32 %v2773, 0.0
      %2792 = vrot.lane.b32.xlu0 %v2776, 72
      %v2793 = vpop.permute.xlu0 %2792
      %2794 = vrot.lane.b32.xlu0 %v2777, 72
      %v2795 = vpop.permute.xlu0 %2794
      %2796 = vrot.lane.b32.xlu0 %v2778, 72
      %v2797 = vpop.permute.xlu0 %2796
      %2798 = vrot.lane.b32.xlu0 %v2779, 72
      %v2799 = vpop.permute.xlu0 %2798
      %2800 = vrot.lane.b32.xlu0 %v2780, 72
      %v2801 = vpop.permute.xlu0 %2800
      %2802 = vrot.lane.b32.xlu0 %v2781, 72
      %v2803 = vpop.permute.xlu0 %2802
      %2804 = vrot.lane.b32.xlu0 %v2782, 72
      %v2805 = vpop.permute.xlu0 %2804
      %2806 = vrot.lane.b32.xlu0 %v2783, 72
      %v2807 = vpop.permute.xlu0 %2806
      %v2816 = vadd.f32 %v1023, %v2793
      %v2817 = vadd.f32 %v1025, %v2795
      %v2818 = vadd.f32 %v1027, %v2797
      %v2819 = vadd.f32 %v1029, %v2799
      %v2820 = vadd.f32 %v1031, %v2801
      %v2821 = vadd.f32 %v1033, %v2803
      %v2822 = vadd.f32 %v1035, %v2805
      %v2823 = vadd.f32 %v1037, %v2807
      %v2824 = vadd.f32 %v2816, %v2453
      %v2825 = vadd.f32 %v2817, %v2455
      %v2826 = vadd.f32 %v2818, %v2457
      %v2827 = vadd.f32 %v2819, %v2459
      %v2828 = vadd.f32 %v2820, %v2461
      %v2829 = vadd.f32 %v2821, %v2463
      %v2830 = vadd.f32 %v2822, %v2465
      %v2831 = vadd.f32 %v2823, %v2467
      %v2832 = vld [vmem:[%s43] sm:$0xff]
      %v2833 = vld [vmem:[%s43 + $0x8] sm:$0xff]
      %v2834 = vld [vmem:[%s43 + $0x10] sm:$0xff]
      %v2835 = vld [vmem:[%s43 + $0x18] sm:$0xff]
      %v2836 = vld [vmem:[%s45] sm:$0xff]
      %2845 = vrot.lane.b32.xlu0 %v2476, 64
      %v2846 = vpop.permute.xlu0 %2845
      %2847 = vrot.lane.b32.xlu0 %v2477, 64
      %v2848 = vpop.permute.xlu0 %2847
      %2849 = vrot.lane.b32.xlu0 %v2478, 64
      %v2850 = vpop.permute.xlu0 %2849
      %2851 = vrot.lane.b32.xlu0 %v2479, 64
      %v2852 = vpop.permute.xlu0 %2851
      %2853 = vrot.lane.b32.xlu0 %v2480, 64
      %v2854 = vpop.permute.xlu0 %2853
      %2855 = vrot.lane.b32.xlu0 %v2481, 64
      %v2856 = vpop.permute.xlu0 %2855
      %2857 = vrot.lane.b32.xlu0 %v2482, 64
      %v2858 = vpop.permute.xlu0 %2857
      %2859 = vrot.lane.b32.xlu0 %v2483, 64
      %v2860 = vpop.permute.xlu0 %2859
      %v2861 = vsel %vm1385, %v2846, 0
      %v2863 = vsel %vm1385, %v2848, 0
      %v2865 = vsel %vm1385, %v2850, 0
      %v2867 = vsel %vm1385, %v2852, 0
      %v2869 = vsel %vm1385, %v2854, 0
      %v2871 = vsel %vm1385, %v2856, 0
      %v2873 = vsel %vm1385, %v2858, 0
      %v2875 = vsel %vm1385, %v2860, 0
      %2877 = vmatprep.subr.mxu0 0.0
      %2878 = vmatpush1.msra.mxu0 %v2836
      %2879 = vmatprep.subr.mxu0 0.0
      %2880 = vmatpush1.msra.mxu0 0.0
      %2881 = vmatprep.subr.mxu0 0.0
      %2882 = vmatpush1.msra.mxu0 0.0
      %2883 = vmatprep.subr.mxu0 0.0
      %2884 = vmatpush1.msra.mxu0 0.0
      %2885 = vmatprep.subr.mxu0 0.0
      %2886 = vmatpush1.msra.mxu0 0.0
      %2887 = vmatprep.subr.mxu0 0.0
      %2888 = vmatpush1.msra.mxu0 0.0
      %2889 = vmatprep.subr.mxu0 0.0
      %2890 = vmatpush1.msra.mxu0 0.0
      %2891 = vmatprep.subr.mxu0 0.0
      %2892 = vmatpush1.msra.mxu0 0.0
      %2893 = vmatprep.subr.mxu0 0.0
      %2894 = vmatpush1.msra.mxu0 0.0
      %2895 = vmatprep.subr.mxu0 0.0
      %2896 = vmatpush1.msra.mxu0 0.0
      %2897 = vmatprep.subr.mxu0 0.0
      %2898 = vmatpush1.msra.mxu0 0.0
      %2899 = vmatprep.subr.mxu0 0.0
      %2900 = vmatpush1.msra.mxu0 0.0
      %2901 = vmatprep.subr.mxu0 0.0
      %2902 = vmatpush1.msra.mxu0 0.0
      %2903 = vmatprep.subr.mxu0 0.0
      %2904 = vmatpush1.msra.mxu0 0.0
      %2905 = vmatprep.subr.mxu0 0.0
      %2906 = vmatpush1.msra.mxu0 0.0
      %2907 = vmatprep.subr.mxu0 0.0
      %2908 = vmatpush1.msra.mxu0 0.0
      %2909 = vmatprep.subr.mxu0 0.0
      %2910 = vmatpush1.msra.mxu0 0.0
      %2911 = vmatprep.subr.mxu0 0.0
      %2912 = vmatpush1.msra.mxu0 0.0
      %2913 = vmatprep.subr.mxu0 0.0
      %2914 = vmatpush1.msra.mxu0 0.0
      %2915 = vmatprep.subr.mxu0 0.0
      %2916 = vmatpush1.msra.mxu0 0.0
      %2917 = vmatprep.subr.mxu0 0.0
      %2918 = vmatpush1.msra.mxu0 0.0
      %2919 = vmatprep.subr.mxu0 0.0
      %2920 = vmatpush1.msra.mxu0 0.0
      %2921 = vmatprep.subr.mxu0 0.0
      %2922 = vmatpush1.msra.mxu0 0.0
      %2923 = vmatprep.subr.mxu0 0.0
      %2924 = vmatpush1.msra.mxu0 0.0
      %2925 = vmatprep.subr.mxu0 0.0
      %2926 = vmatpush1.msra.mxu0 0.0
      %2927 = vmatprep.subr.mxu0 0.0
      %2928 = vmatpush1.msra.mxu0 0.0
      %2929 = vmatprep.subr.mxu0 0.0
      %2930 = vmatpush1.msra.mxu0 0.0
      %2931 = vmatprep.subr.mxu0 0.0
      %2932 = vmatpush1.msra.mxu0 0.0
      %2933 = vmatprep.subr.mxu0 0.0
      %2934 = vmatpush1.msra.mxu0 0.0
      %2935 = vmatprep.subr.mxu0 0.0
      %2936 = vmatpush1.msra.mxu0 0.0
      %2937 = vmatprep.subr.mxu0 0.0
      %2938 = vmatpush1.msra.mxu0 0.0
      %2939 = vmatprep.subr.mxu0 0.0
      %2940 = vmatpush1.msra.mxu0 0.0
      %2941 = vmatprep.mubr.f32.mxu0 0.0
      %2942 = vmatmul.mubr.f32.gmra.mrb[0].mxu0 %v2861
      %v2943 = vpop.f32.mrb[0].mxu0
      %v2944 = vadd.f32 0.0, %v2943
      %v2945 = vpop.f32.mrb[0].mxu0
      %2946 = vmatprep.mubr.f32.mxu0 0.0
      %2947 = vmatmul.mubr.f32.gmra.mrb[0].mxu0 %v2863
      %v2948 = vpop.f32.mrb[0].mxu0
      %v2949 = vadd.f32 0.0, %v2948
      %v2950 = vpop.f32.mrb[0].mxu0
      %2951 = vmatprep.mubr.f32.mxu0 0.0
      %2952 = vmatmul.mubr.f32.gmra.mrb[0].mxu0 %v2865
      %v2953 = vpop.f32.mrb[0].mxu0
      %v2954 = vadd.f32 0.0, %v2953
      %v2955 = vpop.f32.mrb[0].mxu0
      %2956 = vmatprep.mubr.f32.mxu0 0.0
      %2957 = vmatmul.mubr.f32.gmra.mrb[0].mxu0 %v2867
      %v2958 = vpop.f32.mrb[0].mxu0
      %v2959 = vadd.f32 0.0, %v2958
      %v2960 = vpop.f32.mrb[0].mxu0
      %2961 = vmatprep.mubr.f32.mxu0 0.0
      %2962 = vmatmul.mubr.f32.gmra.mrb[0].mxu0 %v2869
      %v2963 = vpop.f32.mrb[0].mxu0
      %v2964 = vadd.f32 0.0, %v2963
      %v2965 = vpop.f32.mrb[0].mxu0
      %2966 = vmatprep.mubr.f32.mxu0 0.0
      %2967 = vmatmul.mubr.f32.gmra.mrb[0].mxu0 %v2871
      %v2968 = vpop.f32.mrb[0].mxu0
      %v2969 = vadd.f32 0.0, %v2968
      %v2970 = vpop.f32.mrb[0].mxu0
      %2971 = vmatprep.mubr.f32.mxu0 0.0
      %2972 = vmatmul.mubr.f32.gmra.mrb[0].mxu0 %v2873
      %v2973 = vpop.f32.mrb[0].mxu0
      %v2974 = vadd.f32 0.0, %v2973
      %v2975 = vpop.f32.mrb[0].mxu0
      %2976 = vmatprep.mubr.f32.mxu0 0.0
      %2977 = vmatmul.mubr.f32.gmra.mrb[0].mxu0 %v2875
      %v2978 = vpop.f32.mrb[0].mxu0
      %v2979 = vadd.f32 0.0, %v2978
      %v2980 = vpop.f32.mrb[0].mxu0
      %2981 = vdwg.mxu0
      %2982 = vmatprep.subr.mxu0 0.0
      %2983 = vmatpush1.msra.mxu0 %v2832
      %2984 = vmatprep.subr.mxu0 0.0
      %2985 = vmatpush1.msra.mxu0 %v2833
      %2986 = vmatprep.subr.mxu0 0.0
      %2987 = vmatpush1.msra.mxu0 %v2834
      %2988 = vmatprep.subr.mxu0 0.0
      %2989 = vmatpush1.msra.mxu0 %v2835
      %2990 = vmatprep.subr.mxu0 0.0
      %2991 = vmatpush1.msra.mxu0 0.0
      %2992 = vmatprep.subr.mxu0 0.0
      %2993 = vmatpush1.msra.mxu0 0.0
      %2994 = vmatprep.subr.mxu0 0.0
      %2995 = vmatpush1.msra.mxu0 0.0
      %2996 = vmatprep.subr.mxu0 0.0
      %2997 = vmatpush1.msra.mxu0 0.0
      %2998 = vmatprep.subr.mxu0 0.0
      %2999 = vmatpush1.msra.mxu0 0.0
      %3000 = vmatprep.subr.mxu0 0.0
      %3001 = vmatpush1.msra.mxu0 0.0
      %3002 = vmatprep.subr.mxu0 0.0
      %3003 = vmatpush1.msra.mxu0 0.0
      %3004 = vmatprep.subr.mxu0 0.0
      %3005 = vmatpush1.msra.mxu0 0.0
      %3006 = vmatprep.subr.mxu0 0.0
      %3007 = vmatpush1.msra.mxu0 0.0
      %3008 = vmatprep.subr.mxu0 0.0
      %3009 = vmatpush1.msra.mxu0 0.0
      %3010 = vmatprep.subr.mxu0 0.0
      %3011 = vmatpush1.msra.mxu0 0.0
      %3012 = vmatprep.subr.mxu0 0.0
      %3013 = vmatpush1.msra.mxu0 0.0
      %3014 = vmatprep.subr.mxu0 0.0
      %3015 = vmatpush1.msra.mxu0 0.0
      %3016 = vmatprep.subr.mxu0 0.0
      %3017 = vmatpush1.msra.mxu0 0.0
      %3018 = vmatprep.subr.mxu0 0.0
      %3019 = vmatpush1.msra.mxu0 0.0
      %3020 = vmatprep.subr.mxu0 0.0
      %3021 = vmatpush1.msra.mxu0 0.0
      %3022 = vmatprep.subr.mxu0 0.0
      %3023 = vmatpush1.msra.mxu0 0.0
      %3024 = vmatprep.subr.mxu0 0.0
      %3025 = vmatpush1.msra.mxu0 0.0
      %3026 = vmatprep.subr.mxu0 0.0
      %3027 = vmatpush1.msra.mxu0 0.0
      %3028 = vmatprep.subr.mxu0 0.0
      %3029 = vmatpush1.msra.mxu0 0.0
      %3030 = vmatprep.subr.mxu0 0.0
      %3031 = vmatpush1.msra.mxu0 0.0
      %3032 = vmatprep.subr.mxu0 0.0
      %3033 = vmatpush1.msra.mxu0 0.0
      %3034 = vmatprep.subr.mxu0 0.0
      %3035 = vmatpush1.msra.mxu0 0.0
      %3036 = vmatprep.subr.mxu0 0.0
      %3037 = vmatpush1.msra.mxu0 0.0
      %3038 = vmatprep.subr.mxu0 0.0
      %3039 = vmatpush1.msra.mxu0 0.0
      %3040 = vmatprep.subr.mxu0 0.0
      %3041 = vmatpush1.msra.mxu0 0.0
      %3042 = vmatprep.subr.mxu0 0.0
      %3043 = vmatpush1.msra.mxu0 0.0
      %3044 = vmatprep.subr.mxu0 0.0
      %3045 = vmatpush1.msra.mxu0 0.0
      %3046 = vmatprep.mubr.f32.mxu0 0.0
      %3047 = vmatmul.mubr.f32.gmra.mrb[0].mxu0 %v1810
      %v3048 = vpop.f32.mrb[0].mxu0
      %v3049 = vadd.f32 %v2944, %v3048
      %v3050 = vpop.f32.mrb[0].mxu0
      %3051 = vmatprep.mubr.f32.mxu0 0.0
      %3052 = vmatmul.mubr.f32.gmra.mrb[0].mxu0 %v1812
      %v3053 = vpop.f32.mrb[0].mxu0
      %v3054 = vadd.f32 %v2949, %v3053
      %v3055 = vpop.f32.mrb[0].mxu0
      %3056 = vmatprep.mubr.f32.mxu0 0.0
      %3057 = vmatmul.mubr.f32.gmra.mrb[0].mxu0 %v1814
      %v3058 = vpop.f32.mrb[0].mxu0
      %v3059 = vadd.f32 %v2954, %v3058
      %v3060 = vpop.f32.mrb[0].mxu0
      %3061 = vmatprep.mubr.f32.mxu0 0.0
      %3062 = vmatmul.mubr.f32.gmra.mrb[0].mxu0 %v1816
      %v3063 = vpop.f32.mrb[0].mxu0
      %v3064 = vadd.f32 %v2959, %v3063
      %v3065 = vpop.f32.mrb[0].mxu0
      %3066 = vmatprep.mubr.f32.mxu0 0.0
      %3067 = vmatmul.mubr.f32.gmra.mrb[0].mxu0 %v1818
      %v3068 = vpop.f32.mrb[0].mxu0
      %v3069 = vadd.f32 %v2964, %v3068
      %v3070 = vpop.f32.mrb[0].mxu0
      %3071 = vmatprep.mubr.f32.mxu0 0.0
      %3072 = vmatmul.mubr.f32.gmra.mrb[0].mxu0 %v1820
      %v3073 = vpop.f32.mrb[0].mxu0
      %v3074 = vadd.f32 %v2969, %v3073
      %v3075 = vpop.f32.mrb[0].mxu0
      %3076 = vmatprep.mubr.f32.mxu0 0.0
      %3077 = vmatmul.mubr.f32.gmra.mrb[0].mxu0 %v1822
      %v3078 = vpop.f32.mrb[0].mxu0
      %v3079 = vadd.f32 %v2974, %v3078
      %v3080 = vpop.f32.mrb[0].mxu0
      %3081 = vmatprep.mubr.f32.mxu0 0.0
      %3082 = vmatmul.mubr.f32.gmra.mrb[0].mxu0 %v1824
      %v3083 = vpop.f32.mrb[0].mxu0
      %v3084 = vadd.f32 %v2979, %v3083
      %v3085 = vpop.f32.mrb[0].mxu0
      %3086 = vdwg.mxu0
      %v3087 = vld [vmem:[%s47] sm:$0xff]
      %3096 = vrot.lane.b32.xlu0 %v2824, 56
      %v3097 = vpop.permute.xlu0 %3096
      %3098 = vrot.lane.b32.xlu0 %v2825, 56
      %v3099 = vpop.permute.xlu0 %3098
      %3100 = vrot.lane.b32.xlu0 %v2826, 56
      %v3101 = vpop.permute.xlu0 %3100
      %3102 = vrot.lane.b32.xlu0 %v2827, 56
      %v3103 = vpop.permute.xlu0 %3102
      %3104 = vrot.lane.b32.xlu0 %v2828, 56
      %v3105 = vpop.permute.xlu0 %3104
      %3106 = vrot.lane.b32.xlu0 %v2829, 56
      %v3107 = vpop.permute.xlu0 %3106
      %3108 = vrot.lane.b32.xlu0 %v2830, 56
      %v3109 = vpop.permute.xlu0 %3108
      %3110 = vrot.lane.b32.xlu0 %v2831, 56
      %v3111 = vpop.permute.xlu0 %3110
      %v3112 = vsel %vm1385, %v3097, 0
      %v3114 = vsel %vm1385, %v3099, 0
      %v3116 = vsel %vm1385, %v3101, 0
      %v3118 = vsel %vm1385, %v3103, 0
      %v3120 = vsel %vm1385, %v3105, 0
      %v3122 = vsel %vm1385, %v3107, 0
      %v3124 = vsel %vm1385, %v3109, 0
      %v3126 = vsel %vm1385, %v3111, 0
      %3128 = vmatprep.subr.mxu0 0.0
      %3129 = vmatpush1.msra.mxu0 %v3087
      %3130 = vmatprep.subr.mxu0 0.0
      %3131 = vmatpush1.msra.mxu0 0.0
      %3132 = vmatprep.subr.mxu0 0.0
      %3133 = vmatpush1.msra.mxu0 0.0
      %3134 = vmatprep.subr.mxu0 0.0
      %3135 = vmatpush1.msra.mxu0 0.0
      %3136 = vmatprep.subr.mxu0 0.0
      %3137 = vmatpush1.msra.mxu0 0.0
      %3138 = vmatprep.subr.mxu0 0.0
      %3139 = vmatpush1.msra.mxu0 0.0
      %3140 = vmatprep.subr.mxu0 0.0
      %3141 = vmatpush1.msra.mxu0 0.0
      %3142 = vmatprep.subr.mxu0 0.0
      %3143 = vmatpush1.msra.mxu0 0.0
      %3144 = vmatprep.subr.mxu0 0.0
      %3145 = vmatpush1.msra.mxu0 0.0
      %3146 = vmatprep.subr.mxu0 0.0
      %3147 = vmatpush1.msra.mxu0 0.0
      %3148 = vmatprep.subr.mxu0 0.0
      %3149 = vmatpush1.msra.mxu0 0.0
      %3150 = vmatprep.subr.mxu0 0.0
      %3151 = vmatpush1.msra.mxu0 0.0
      %3152 = vmatprep.subr.mxu0 0.0
      %3153 = vmatpush1.msra.mxu0 0.0
      %3154 = vmatprep.subr.mxu0 0.0
      %3155 = vmatpush1.msra.mxu0 0.0
      %3156 = vmatprep.subr.mxu0 0.0
      %3157 = vmatpush1.msra.mxu0 0.0
      %3158 = vmatprep.subr.mxu0 0.0
      %3159 = vmatpush1.msra.mxu0 0.0
      %3160 = vmatprep.subr.mxu0 0.0
      %3161 = vmatpush1.msra.mxu0 0.0
      %3162 = vmatprep.subr.mxu0 0.0
      %3163 = vmatpush1.msra.mxu0 0.0
      %3164 = vmatprep.subr.mxu0 0.0
      %3165 = vmatpush1.msra.mxu0 0.0
      %3166 = vmatprep.subr.mxu0 0.0
      %3167 = vmatpush1.msra.mxu0 0.0
      %3168 = vmatprep.subr.mxu0 0.0
      %3169 = vmatpush1.msra.mxu0 0.0
      %3170 = vmatprep.subr.mxu0 0.0
      %3171 = vmatpush1.msra.mxu0 0.0
      %3172 = vmatprep.subr.mxu0 0.0
      %3173 = vmatpush1.msra.mxu0 0.0
      %3174 = vmatprep.subr.mxu0 0.0
      %3175 = vmatpush1.msra.mxu0 0.0
      %3176 = vmatprep.subr.mxu0 0.0
      %3177 = vmatpush1.msra.mxu0 0.0
      %3178 = vmatprep.subr.mxu0 0.0
      %3179 = vmatpush1.msra.mxu0 0.0
      %3180 = vmatprep.subr.mxu0 0.0
      %3181 = vmatpush1.msra.mxu0 0.0
      %3182 = vmatprep.subr.mxu0 0.0
      %3183 = vmatpush1.msra.mxu0 0.0
      %3184 = vmatprep.subr.mxu0 0.0
      %3185 = vmatpush1.msra.mxu0 0.0
      %3186 = vmatprep.subr.mxu0 0.0
      %3187 = vmatpush1.msra.mxu0 0.0
      %3188 = vmatprep.subr.mxu0 0.0
      %3189 = vmatpush1.msra.mxu0 0.0
      %3190 = vmatprep.subr.mxu0 0.0
      %3191 = vmatpush1.msra.mxu0 0.0
      %3192 = vmatprep.mubr.f32.mxu0 0.0
      %3193 = vmatmul.mubr.f32.gmra.mrb[0].mxu0 %v3112
      %v3194 = vpop.f32.mrb[0].mxu0
      %v3195 = vadd.f32 0.0, %v3194
      %v3196 = vpop.f32.mrb[0].mxu0
      %3197 = vmatprep.mubr.f32.mxu0 0.0
      %3198 = vmatmul.mubr.f32.gmra.mrb[0].mxu0 %v3114
      %v3199 = vpop.f32.mrb[0].mxu0
      %v3200 = vadd.f32 0.0, %v3199
      %v3201 = vpop.f32.mrb[0].mxu0
      %3202 = vmatprep.mubr.f32.mxu0 0.0
      %3203 = vmatmul.mubr.f32.gmra.mrb[0].mxu0 %v3116
      %v3204 = vpop.f32.mrb[0].mxu0
      %v3205 = vadd.f32 0.0, %v3204
      %v3206 = vpop.f32.mrb[0].mxu0
      %3207 = vmatprep.mubr.f32.mxu0 0.0
      %3208 = vmatmul.mubr.f32.gmra.mrb[0].mxu0 %v3118
      %v3209 = vpop.f32.mrb[0].mxu0
      %v3210 = vadd.f32 0.0, %v3209
      %v3211 = vpop.f32.mrb[0].mxu0
      %3212 = vmatprep.mubr.f32.mxu0 0.0
      %3213 = vmatmul.mubr.f32.gmra.mrb[0].mxu0 %v3120
      %v3214 = vpop.f32.mrb[0].mxu0
      %v3215 = vadd.f32 0.0, %v3214
      %v3216 = vpop.f32.mrb[0].mxu0
      %3217 = vmatprep.mubr.f32.mxu0 0.0
      %3218 = vmatmul.mubr.f32.gmra.mrb[0].mxu0 %v3122
      %v3219 = vpop.f32.mrb[0].mxu0
      %v3220 = vadd.f32 0.0, %v3219
      %v3221 = vpop.f32.mrb[0].mxu0
      %3222 = vmatprep.mubr.f32.mxu0 0.0
      %3223 = vmatmul.mubr.f32.gmra.mrb[0].mxu0 %v3124
      %v3224 = vpop.f32.mrb[0].mxu0
      %v3225 = vadd.f32 0.0, %v3224
      %v3226 = vpop.f32.mrb[0].mxu0
      %3227 = vmatprep.mubr.f32.mxu0 0.0
      %3228 = vmatmul.mubr.f32.gmra.mrb[0].mxu0 %v3126
      %v3229 = vpop.f32.mrb[0].mxu0
      %v3230 = vadd.f32 0.0, %v3229
      %v3231 = vpop.f32.mrb[0].mxu0
      %3232 = vdwg.mxu0
      %v3233 = vadd.f32 %v3049, %v3195
      %v3234 = vadd.f32 %v3054, %v3200
      %v3235 = vadd.f32 %v3059, %v3205
      %v3236 = vadd.f32 %v3064, %v3210
      %v3237 = vadd.f32 %v3069, %v3215
      %v3238 = vadd.f32 %v3074, %v3220
      %v3239 = vadd.f32 %v3079, %v3225
      %v3240 = vadd.f32 %v3084, %v3230
      %v3241 = vld [vmem:[%s49] sm:$0x1]
      %v3243 = vlaneseq
      %v3244 = vshrl.u32 %v3243, 7
      %v3245 = vsub.s32 0, %v3244
      %v3246 = vrot.slane %v3241, %v3245
      %v3248 = vadd.f32 %v3233, %v3246
      %v3249 = vadd.f32 %v3234, %v3246
      %v3250 = vadd.f32 %v3235, %v3246
      %v3251 = vadd.f32 %v3236, %v3246
      %v3252 = vadd.f32 %v3237, %v3246
      %v3253 = vadd.f32 %v3238, %v3246
      %v3254 = vadd.f32 %v3239, %v3246
      %v3255 = vadd.f32 %v3240, %v3246
      %v3256 = vmax.f32 %v3248, 0.0
      %v3257 = vmax.f32 %v3249, 0.0
      %v3258 = vmax.f32 %v3250, 0.0
      %v3259 = vmax.f32 %v3251, 0.0
      %v3260 = vmax.f32 %v3252, 0.0
      %v3261 = vmax.f32 %v3253, 0.0
      %v3262 = vmax.f32 %v3254, 0.0
      %v3263 = vmax.f32 %v3255, 0.0
      %v3264 = vld [vmem:[%s51] sm:$0xff]
      %v3265 = vld [vmem:[%s51 + $0x8] sm:$0xff]
      %v3266 = vld [vmem:[%s51 + $0x10] sm:$0xff]
      %v3267 = vld [vmem:[%s51 + $0x18] sm:$0xff]
      %v3268 = vld [vmem:[%s53] sm:$0xff]
      %v3269 = vld [vmem:[%s53 + $0x8] sm:$0xff]
      %3270 = vmatprep.subr.mxu0 0.0
      %3271 = vmatpush1.msra.mxu0 %v3268
      %3272 = vmatprep.subr.mxu0 0.0
      %3273 = vmatpush1.msra.mxu0 %v3269
      %3274 = vmatprep.subr.mxu0 0.0
      %3275 = vmatpush1.msra.mxu0 0.0
      %3276 = vmatprep.subr.mxu0 0.0
      %3277 = vmatpush1.msra.mxu0 0.0
      %3278 = vmatprep.subr.mxu0 0.0
      %3279 = vmatpush1.msra.mxu0 0.0
      %3280 = vmatprep.subr.mxu0 0.0
      %3281 = vmatpush1.msra.mxu0 0.0
      %3282 = vmatprep.subr.mxu0 0.0
      %3283 = vmatpush1.msra.mxu0 0.0
      %3284 = vmatprep.subr.mxu0 0.0
      %3285 = vmatpush1.msra.mxu0 0.0
      %3286 = vmatprep.subr.mxu0 0.0
      %3287 = vmatpush1.msra.mxu0 0.0
      %3288 = vmatprep.subr.mxu0 0.0
      %3289 = vmatpush1.msra.mxu0 0.0
      %3290 = vmatprep.subr.mxu0 0.0
      %3291 = vmatpush1.msra.mxu0 0.0
      %3292 = vmatprep.subr.mxu0 0.0
      %3293 = vmatpush1.msra.mxu0 0.0
      %3294 = vmatprep.subr.mxu0 0.0
      %3295 = vmatpush1.msra.mxu0 0.0
      %3296 = vmatprep.subr.mxu0 0.0
      %3297 = vmatpush1.msra.mxu0 0.0
      %3298 = vmatprep.subr.mxu0 0.0
      %3299 = vmatpush1.msra.mxu0 0.0
      %3300 = vmatprep.subr.mxu0 0.0
      %3301 = vmatpush1.msra.mxu0 0.0
      %3302 = vmatprep.subr.mxu0 0.0
      %3303 = vmatpush1.msra.mxu0 0.0
      %3304 = vmatprep.subr.mxu0 0.0
      %3305 = vmatpush1.msra.mxu0 0.0
      %3306 = vmatprep.subr.mxu0 0.0
      %3307 = vmatpush1.msra.mxu0 0.0
      %3308 = vmatprep.subr.mxu0 0.0
      %3309 = vmatpush1.msra.mxu0 0.0
      %3310 = vmatprep.subr.mxu0 0.0
      %3311 = vmatpush1.msra.mxu0 0.0
      %3312 = vmatprep.subr.mxu0 0.0
      %3313 = vmatpush1.msra.mxu0 0.0
      %3314 = vmatprep.subr.mxu0 0.0
      %3315 = vmatpush1.msra.mxu0 0.0
      %3316 = vmatprep.subr.mxu0 0.0
      %3317 = vmatpush1.msra.mxu0 0.0
      %3318 = vmatprep.subr.mxu0 0.0
      %3319 = vmatpush1.msra.mxu0 0.0
      %3320 = vmatprep.subr.mxu0 0.0
      %3321 = vmatpush1.msra.mxu0 0.0
      %3322 = vmatprep.subr.mxu0 0.0
      %3323 = vmatpush1.msra.mxu0 0.0
      %3324 = vmatprep.subr.mxu0 0.0
      %3325 = vmatpush1.msra.mxu0 0.0
      %3326 = vmatprep.subr.mxu0 0.0
      %3327 = vmatpush1.msra.mxu0 0.0
      %3328 = vmatprep.subr.mxu0 0.0
      %3329 = vmatpush1.msra.mxu0 0.0
      %3330 = vmatprep.subr.mxu0 0.0
      %3331 = vmatpush1.msra.mxu0 0.0
      %3332 = vmatprep.subr.mxu0 0.0
      %3333 = vmatpush1.msra.mxu0 0.0
      %3334 = vmatprep.mubr.f32.mxu0 0.0
      %3335 = vmatmul.mubr.f32.gmra.mrb[0].mxu0 %v1073
      %v3336 = vpop.f32.mrb[0].mxu0
      %v3337 = vadd.f32 0.0, %v3336
      %v3338 = vpop.f32.mrb[0].mxu0
      %3339 = vmatprep.mubr.f32.mxu0 0.0
      %3340 = vmatmul.mubr.f32.gmra.mrb[0].mxu0 %v1075
      %v3341 = vpop.f32.mrb[0].mxu0
      %v3342 = vadd.f32 0.0, %v3341
      %v3343 = vpop.f32.mrb[0].mxu0
      %3344 = vmatprep.mubr.f32.mxu0 0.0
      %3345 = vmatmul.mubr.f32.gmra.mrb[0].mxu0 %v1077
      %v3346 = vpop.f32.mrb[0].mxu0
      %v3347 = vadd.f32 0.0, %v3346
      %v3348 = vpop.f32.mrb[0].mxu0
      %3349 = vmatprep.mubr.f32.mxu0 0.0
      %3350 = vmatmul.mubr.f32.gmra.mrb[0].mxu0 %v1079
      %v3351 = vpop.f32.mrb[0].mxu0
      %v3352 = vadd.f32 0.0, %v3351
      %v3353 = vpop.f32.mrb[0].mxu0
      %3354 = vmatprep.mubr.f32.mxu0 0.0
      %3355 = vmatmul.mubr.f32.gmra.mrb[0].mxu0 %v1081
      %v3356 = vpop.f32.mrb[0].mxu0
      %v3357 = vadd.f32 0.0, %v3356
      %v3358 = vpop.f32.mrb[0].mxu0
      %3359 = vmatprep.mubr.f32.mxu0 0.0
      %3360 = vmatmul.mubr.f32.gmra.mrb[0].mxu0 %v1083
      %v3361 = vpop.f32.mrb[0].mxu0
      %v3362 = vadd.f32 0.0, %v3361
      %v3363 = vpop.f32.mrb[0].mxu0
      %3364 = vmatprep.mubr.f32.mxu0 0.0
      %3365 = vmatmul.mubr.f32.gmra.mrb[0].mxu0 %v1085
      %v3366 = vpop.f32.mrb[0].mxu0
      %v3367 = vadd.f32 0.0, %v3366
      %v3368 = vpop.f32.mrb[0].mxu0
      %3369 = vmatprep.mubr.f32.mxu0 0.0
      %3370 = vmatmul.mubr.f32.gmra.mrb[0].mxu0 %v1087
      %v3371 = vpop.f32.mrb[0].mxu0
      %v3372 = vadd.f32 0.0, %v3371
      %v3373 = vpop.f32.mrb[0].mxu0
      %3374 = vdwg.mxu0
      %3375 = vrot.lane.b32.xlu0 %v1023, 32
      %v3376 = vpop.permute.xlu0 %3375
      %3377 = vrot.lane.b32.xlu0 %v1025, 32
      %v3378 = vpop.permute.xlu0 %3377
      %3379 = vrot.lane.b32.xlu0 %v1027, 32
      %v3380 = vpop.permute.xlu0 %3379
      %3381 = vrot.lane.b32.xlu0 %v1029, 32
      %v3382 = vpop.permute.xlu0 %3381
      %3383 = vrot.lane.b32.xlu0 %v1031, 32
      %v3384 = vpop.permute.xlu0 %3383
      %3385 = vrot.lane.b32.xlu0 %v1033, 32
      %v3386 = vpop.permute.xlu0 %3385
      %3387 = vrot.lane.b32.xlu0 %v1035, 32
      %v3388 = vpop.permute.xlu0 %3387
      %3389 = vrot.lane.b32.xlu0 %v1037, 32
      %v3390 = vpop.permute.xlu0 %3389
      %v3391 = vsel %vm1539, %v3376, 0
      %v3393 = vsel %vm1539, %v3378, 0
      %v3395 = vsel %vm1539, %v3380, 0
      %v3397 = vsel %vm1539, %v3382, 0
      %v3399 = vsel %vm1539, %v3384, 0
      %v3401 = vsel %vm1539, %v3386, 0
      %v3403 = vsel %vm1539, %v3388, 0
      %v3405 = vsel %vm1539, %v3390, 0
      %3407 = vmatprep.subr.mxu0 0.0
      %3408 = vmatpush1.msra.mxu0 %v3264
      %3409 = vmatprep.subr.mxu0 0.0
      %3410 = vmatpush1.msra.mxu0 %v3265
      %3411 = vmatprep.subr.mxu0 0.0
      %3412 = vmatpush1.msra.mxu0 %v3266
      %3413 = vmatprep.subr.mxu0 0.0
      %3414 = vmatpush1.msra.mxu0 %v3267
      %3415 = vmatprep.subr.mxu0 0.0
      %3416 = vmatpush1.msra.mxu0 0.0
      %3417 = vmatprep.subr.mxu0 0.0
      %3418 = vmatpush1.msra.mxu0 0.0
      %3419 = vmatprep.subr.mxu0 0.0
      %3420 = vmatpush1.msra.mxu0 0.0
      %3421 = vmatprep.subr.mxu0 0.0
      %3422 = vmatpush1.msra.mxu0 0.0
      %3423 = vmatprep.subr.mxu0 0.0
      %3424 = vmatpush1.msra.mxu0 0.0
      %3425 = vmatprep.subr.mxu0 0.0
      %3426 = vmatpush1.msra.mxu0 0.0
      %3427 = vmatprep.subr.mxu0 0.0
      %3428 = vmatpush1.msra.mxu0 0.0
      %3429 = vmatprep.subr.mxu0 0.0
      %3430 = vmatpush1.msra.mxu0 0.0
      %3431 = vmatprep.subr.mxu0 0.0
      %3432 = vmatpush1.msra.mxu0 0.0
      %3433 = vmatprep.subr.mxu0 0.0
      %3434 = vmatpush1.msra.mxu0 0.0
      %3435 = vmatprep.subr.mxu0 0.0
      %3436 = vmatpush1.msra.mxu0 0.0
      %3437 = vmatprep.subr.mxu0 0.0
      %3438 = vmatpush1.msra.mxu0 0.0
      %3439 = vmatprep.subr.mxu0 0.0
      %3440 = vmatpush1.msra.mxu0 0.0
      %3441 = vmatprep.subr.mxu0 0.0
      %3442 = vmatpush1.msra.mxu0 0.0
      %3443 = vmatprep.subr.mxu0 0.0
      %3444 = vmatpush1.msra.mxu0 0.0
      %3445 = vmatprep.subr.mxu0 0.0
      %3446 = vmatpush1.msra.mxu0 0.0
      %3447 = vmatprep.subr.mxu0 0.0
      %3448 = vmatpush1.msra.mxu0 0.0
      %3449 = vmatprep.subr.mxu0 0.0
      %3450 = vmatpush1.msra.mxu0 0.0
      %3451 = vmatprep.subr.mxu0 0.0
      %3452 = vmatpush1.msra.mxu0 0.0
      %3453 = vmatprep.subr.mxu0 0.0
      %3454 = vmatpush1.msra.mxu0 0.0
      %3455 = vmatprep.subr.mxu0 0.0
      %3456 = vmatpush1.msra.mxu0 0.0
      %3457 = vmatprep.subr.mxu0 0.0
      %3458 = vmatpush1.msra.mxu0 0.0
      %3459 = vmatprep.subr.mxu0 0.0
      %3460 = vmatpush1.msra.mxu0 0.0
      %3461 = vmatprep.subr.mxu0 0.0
      %3462 = vmatpush1.msra.mxu0 0.0
      %3463 = vmatprep.subr.mxu0 0.0
      %3464 = vmatpush1.msra.mxu0 0.0
      %3465 = vmatprep.subr.mxu0 0.0
      %3466 = vmatpush1.msra.mxu0 0.0
      %3467 = vmatprep.subr.mxu0 0.0
      %3468 = vmatpush1.msra.mxu0 0.0
      %3469 = vmatprep.subr.mxu0 0.0
      %3470 = vmatpush1.msra.mxu0 0.0
      %3471 = vmatprep.mubr.f32.mxu0 0.0
      %3472 = vmatmul.mubr.f32.gmra.mrb[0].mxu0 %v3391
      %v3473 = vpop.f32.mrb[0].mxu0
      %v3474 = vadd.f32 %v3337, %v3473
      %v3475 = vpop.f32.mrb[0].mxu0
      %3476 = vmatprep.mubr.f32.mxu0 0.0
      %3477 = vmatmul.mubr.f32.gmra.mrb[0].mxu0 %v3393
      %v3478 = vpop.f32.mrb[0].mxu0
      %v3479 = vadd.f32 %v3342, %v3478
      %v3480 = vpop.f32.mrb[0].mxu0
      %3481 = vmatprep.mubr.f32.mxu0 0.0
      %3482 = vmatmul.mubr.f32.gmra.mrb[0].mxu0 %v3395
      %v3483 = vpop.f32.mrb[0].mxu0
      %v3484 = vadd.f32 %v3347, %v3483
      %v3485 = vpop.f32.mrb[0].mxu0
      %3486 = vmatprep.mubr.f32.mxu0 0.0
      %3487 = vmatmul.mubr.f32.gmra.mrb[0].mxu0 %v3397
      %v3488 = vpop.f32.mrb[0].mxu0
      %v3489 = vadd.f32 %v3352, %v3488
      %v3490 = vpop.f32.mrb[0].mxu0
      %3491 = vmatprep.mubr.f32.mxu0 0.0
      %3492 = vmatmul.mubr.f32.gmra.mrb[0].mxu0 %v3399
      %v3493 = vpop.f32.mrb[0].mxu0
      %v3494 = vadd.f32 %v3357, %v3493
      %v3495 = vpop.f32.mrb[0].mxu0
      %3496 = vmatprep.mubr.f32.mxu0 0.0
      %3497 = vmatmul.mubr.f32.gmra.mrb[0].mxu0 %v3401
      %v3498 = vpop.f32.mrb[0].mxu0
      %v3499 = vadd.f32 %v3362, %v3498
      %v3500 = vpop.f32.mrb[0].mxu0
      %3501 = vmatprep.mubr.f32.mxu0 0.0
      %3502 = vmatmul.mubr.f32.gmra.mrb[0].mxu0 %v3403
      %v3503 = vpop.f32.mrb[0].mxu0
      %v3504 = vadd.f32 %v3367, %v3503
      %v3505 = vpop.f32.mrb[0].mxu0
      %3506 = vmatprep.mubr.f32.mxu0 0.0
      %3507 = vmatmul.mubr.f32.gmra.mrb[0].mxu0 %v3405
      %v3508 = vpop.f32.mrb[0].mxu0
      %v3509 = vadd.f32 %v3372, %v3508
      %v3510 = vpop.f32.mrb[0].mxu0
      %3511 = vdwg.mxu0
      %v3512 = vld [vmem:[%s55] sm:$0x1]
      %v3514 = vlaneseq
      %v3515 = vshrl.u32 %v3514, 7
      %v3516 = vsub.s32 0, %v3515
      %v3517 = vrot.slane %v3512, %v3516
      %v3519 = vadd.f32 %v3474, %v3517
      %v3520 = vadd.f32 %v3479, %v3517
      %v3521 = vadd.f32 %v3484, %v3517
      %v3522 = vadd.f32 %v3489, %v3517
      %v3523 = vadd.f32 %v3494, %v3517
      %v3524 = vadd.f32 %v3499, %v3517
      %v3525 = vadd.f32 %v3504, %v3517
      %v3526 = vadd.f32 %v3509, %v3517
      %v3527 = vmax.f32 %v3519, 0.0
      %v3528 = vmax.f32 %v3520, 0.0
      %v3529 = vmax.f32 %v3521, 0.0
      %v3530 = vmax.f32 %v3522, 0.0
      %v3531 = vmax.f32 %v3523, 0.0
      %v3532 = vmax.f32 %v3524, 0.0
      %v3533 = vmax.f32 %v3525, 0.0
      %v3534 = vmax.f32 %v3526, 0.0
      %v3535 = vld [vmem:[%s57] sm:$0xff]
      %v3536 = vld [vmem:[%s57 + $0x8] sm:$0xff]
      %v3537 = vld [vmem:[%s57 + $0x10] sm:$0xff]
      %v3538 = vld [vmem:[%s57 + $0x18] sm:$0xff]
      %v3539 = vld [vmem:[%s57 + $0x20] sm:$0xff]
      %v3540 = vld [vmem:[%s57 + $0x28] sm:$0xff]
      %v3541 = vld [vmem:[%s57 + $0x30] sm:$0xff]
      %v3542 = vld [vmem:[%s59] sm:$0x1]
      %v3544 = vlaneseq
      %v3545 = vshrl.u32 %v3544, 7
      %v3546 = vsub.s32 0, %v3545
      %v3547 = vrot.slane %v3542, %v3546
      %vm3549 = vcmask 457728
      %v3551 = vsel %vm3549, %v3527, 0
      %v3554 = vsel %vm3549, %v3528, 0
      %v3557 = vsel %vm3549, %v3529, 0
      %v3560 = vsel %vm3549, %v3530, 0
      %v3563 = vsel %vm3549, %v3531, 0
      %v3566 = vsel %vm3549, %v3532, 0
      %v3569 = vsel %vm3549, %v3533, 0
      %v3572 = vsel %vm3549, %v3534, 0
      %3574 = vmatprep.subr.mxu0 0.0
      %3575 = vmatpush1.msra.mxu0 %v3535
      %3576 = vmatprep.subr.mxu0 0.0
      %3577 = vmatpush1.msra.mxu0 %v3536
      %3578 = vmatprep.subr.mxu0 0.0
      %3579 = vmatpush1.msra.mxu0 %v3537
      %3580 = vmatprep.subr.mxu0 0.0
      %3581 = vmatpush1.msra.mxu0 %v3538
      %3582 = vmatprep.subr.mxu0 0.0
      %3583 = vmatpush1.msra.mxu0 %v3539
      %3584 = vmatprep.subr.mxu0 0.0
      %3585 = vmatpush1.msra.mxu0 %v3540
      %3586 = vmatprep.subr.mxu0 0.0
      %3587 = vmatpush1.msra.mxu0 %v3541
      %3588 = vmatprep.subr.mxu0 0.0
      %3589 = vmatpush1.msra.mxu0 0.0
      %3590 = vmatprep.subr.mxu0 0.0
      %3591 = vmatpush1.msra.mxu0 0.0
      %3592 = vmatprep.subr.mxu0 0.0
      %3593 = vmatpush1.msra.mxu0 0.0
      %3594 = vmatprep.subr.mxu0 0.0
      %3595 = vmatpush1.msra.mxu0 0.0
      %3596 = vmatprep.subr.mxu0 0.0
      %3597 = vmatpush1.msra.mxu0 0.0
      %3598 = vmatprep.subr.mxu0 0.0
      %3599 = vmatpush1.msra.mxu0 0.0
      %3600 = vmatprep.subr.mxu0 0.0
      %3601 = vmatpush1.msra.mxu0 0.0
      %3602 = vmatprep.subr.mxu0 0.0
      %3603 = vmatpush1.msra.mxu0 0.0
      %3604 = vmatprep.subr.mxu0 0.0
      %3605 = vmatpush1.msra.mxu0 0.0
      %3606 = vmatprep.subr.mxu0 0.0
      %3607 = vmatpush1.msra.mxu0 0.0
      %3608 = vmatprep.subr.mxu0 0.0
      %3609 = vmatpush1.msra.mxu0 0.0
      %3610 = vmatprep.subr.mxu0 0.0
      %3611 = vmatpush1.msra.mxu0 0.0
      %3612 = vmatprep.subr.mxu0 0.0
      %3613 = vmatpush1.msra.mxu0 0.0
      %3614 = vmatprep.subr.mxu0 0.0
      %3615 = vmatpush1.msra.mxu0 0.0
      %3616 = vmatprep.subr.mxu0 0.0
      %3617 = vmatpush1.msra.mxu0 0.0
      %3618 = vmatprep.subr.mxu0 0.0
      %3619 = vmatpush1.msra.mxu0 0.0
      %3620 = vmatprep.subr.mxu0 0.0
      %3621 = vmatpush1.msra.mxu0 0.0
      %3622 = vmatprep.subr.mxu0 0.0
      %3623 = vmatpush1.msra.mxu0 0.0
      %3624 = vmatprep.subr.mxu0 0.0
      %3625 = vmatpush1.msra.mxu0 0.0
      %3626 = vmatprep.subr.mxu0 0.0
      %3627 = vmatpush1.msra.mxu0 0.0
      %3628 = vmatprep.subr.mxu0 0.0
      %3629 = vmatpush1.msra.mxu0 0.0
      %3630 = vmatprep.subr.mxu0 0.0
      %3631 = vmatpush1.msra.mxu0 0.0
      %3632 = vmatprep.subr.mxu0 0.0
      %3633 = vmatpush1.msra.mxu0 0.0
      %3634 = vmatprep.subr.mxu0 0.0
      %3635 = vmatpush1.msra.mxu0 0.0
      %3636 = vmatprep.subr.mxu0 0.0
      %3637 = vmatpush1.msra.mxu0 0.0
      %3638 = vmatprep.mubr.f32.mxu0 0.0
      %3639 = vmatmul.mubr.f32.gmra.mrb[0].mxu0 %v3551
      %v3640 = vpop.f32.mrb[0].mxu0
      %v3641 = vadd.f32 %v3547, %v3640
      %v3642 = vpop.f32.mrb[0].mxu0
      %3643 = vmatprep.mubr.f32.mxu0 0.0
      %3644 = vmatmul.mubr.f32.gmra.mrb[0].mxu0 %v3554
      %v3645 = vpop.f32.mrb[0].mxu0
      %v3646 = vadd.f32 %v3547, %v3645
      %v3647 = vpop.f32.mrb[0].mxu0
      %3648 = vmatprep.mubr.f32.mxu0 0.0
      %3649 = vmatmul.mubr.f32.gmra.mrb[0].mxu0 %v3557
      %v3650 = vpop.f32.mrb[0].mxu0
      %v3651 = vadd.f32 %v3547, %v3650
      %v3652 = vpop.f32.mrb[0].mxu0
      %3653 = vmatprep.mubr.f32.mxu0 0.0
      %3654 = vmatmul.mubr.f32.gmra.mrb[0].mxu0 %v3560
      %v3655 = vpop.f32.mrb[0].mxu0
      %v3656 = vadd.f32 %v3547, %v3655
      %v3657 = vpop.f32.mrb[0].mxu0
      %3658 = vmatprep.mubr.f32.mxu0 0.0
      %3659 = vmatmul.mubr.f32.gmra.mrb[0].mxu0 %v3563
      %v3660 = vpop.f32.mrb[0].mxu0
      %v3661 = vadd.f32 %v3547, %v3660
      %v3662 = vpop.f32.mrb[0].mxu0
      %3663 = vmatprep.mubr.f32.mxu0 0.0
      %3664 = vmatmul.mubr.f32.gmra.mrb[0].mxu0 %v3566
      %v3665 = vpop.f32.mrb[0].mxu0
      %v3666 = vadd.f32 %v3547, %v3665
      %v3667 = vpop.f32.mrb[0].mxu0
      %3668 = vmatprep.mubr.f32.mxu0 0.0
      %3669 = vmatmul.mubr.f32.gmra.mrb[0].mxu0 %v3569
      %v3670 = vpop.f32.mrb[0].mxu0
      %v3671 = vadd.f32 %v3547, %v3670
      %v3672 = vpop.f32.mrb[0].mxu0
      %3673 = vmatprep.mubr.f32.mxu0 0.0
      %3674 = vmatmul.mubr.f32.gmra.mrb[0].mxu0 %v3572
      %v3675 = vpop.f32.mrb[0].mxu0
      %v3676 = vadd.f32 %v3547, %v3675
      %v3677 = vpop.f32.mrb[0].mxu0
      %3678 = vdwg.mxu0
      %v3679 = vmax.f32 %v3641, 0.0
      %v3680 = vmax.f32 %v3646, 0.0
      %v3681 = vmax.f32 %v3651, 0.0
      %v3682 = vmax.f32 %v3656, 0.0
      %v3683 = vmax.f32 %v3661, 0.0
      %v3684 = vmax.f32 %v3666, 0.0
      %v3685 = vmax.f32 %v3671, 0.0
      %v3686 = vmax.f32 %v3676, 0.0
      %v3687 = vadd.f32 %v1023, %v3679
      %v3688 = vadd.f32 %v1025, %v3680
      %v3689 = vadd.f32 %v1027, %v3681
      %v3690 = vadd.f32 %v1029, %v3682
      %v3691 = vadd.f32 %v1031, %v3683
      %v3692 = vadd.f32 %v1033, %v3684
      %v3693 = vadd.f32 %v1035, %v3685
      %v3694 = vadd.f32 %v1037, %v3686
      %v3695 = vld [vmem:[%s61] sm:$0xff]
      %v3696 = vld [vmem:[%s61 + $0x8] sm:$0xff]
      %v3697 = vld [vmem:[%s61 + $0x10] sm:$0xff]
      %v3698 = vld [vmem:[%s61 + $0x18] sm:$0xff]
      %v3699 = vld [vmem:[%s63] sm:$0xff]
      %v3700 = vld [vmem:[%s63 + $0x8] sm:$0xff]
      %v3701 = vld [vmem:[%s63 + $0x10] sm:$0xff]
      %v3702 = vld [vmem:[%s63 + $0x18] sm:$0xff]
      %v3703 = vld [vmem:[%s63 + $0x20] sm:$0xff]
      %v3704 = vld [vmem:[%s63 + $0x28] sm:$0xff]
      %3713 = vrot.lane.b32.xlu0 %v3687, 120
      %v3714 = vpop.permute.xlu0 %3713
      %3715 = vrot.lane.b32.xlu0 %v3688, 120
      %v3716 = vpop.permute.xlu0 %3715
      %3717 = vrot.lane.b32.xlu0 %v3689, 120
      %v3718 = vpop.permute.xlu0 %3717
      %3719 = vrot.lane.b32.xlu0 %v3690, 120
      %v3720 = vpop.permute.xlu0 %3719
      %3721 = vrot.lane.b32.xlu0 %v3691, 120
      %v3722 = vpop.permute.xlu0 %3721
      %3723 = vrot.lane.b32.xlu0 %v3692, 120
      %v3724 = vpop.permute.xlu0 %3723
      %3725 = vrot.lane.b32.xlu0 %v3693, 120
      %v3726 = vpop.permute.xlu0 %3725
      %3727 = vrot.lane.b32.xlu0 %v3694, 120
      %v3728 = vpop.permute.xlu0 %3727
      %vm3729 = vcmask 392192
      %v3730 = vsel %vm3729, %v3714, 0
      %v3732 = vsel %vm3729, %v3716, 0
      %v3734 = vsel %vm3729, %v3718, 0
      %v3736 = vsel %vm3729, %v3720, 0
      %v3738 = vsel %vm3729, %v3722, 0
      %v3740 = vsel %vm3729, %v3724, 0
      %v3742 = vsel %vm3729, %v3726, 0
      %v3744 = vsel %vm3729, %v3728, 0
      %3746 = vmatprep.subr.mxu0 0.0
      %3747 = vmatpush1.msra.mxu0 %v3699
      %3748 = vmatprep.subr.mxu0 0.0
      %3749 = vmatpush1.msra.mxu0 %v3700
      %3750 = vmatprep.subr.mxu0 0.0
      %3751 = vmatpush1.msra.mxu0 %v3701
      %3752 = vmatprep.subr.mxu0 0.0
      %3753 = vmatpush1.msra.mxu0 %v3702
      %3754 = vmatprep.subr.mxu0 0.0
      %3755 = vmatpush1.msra.mxu0 %v3703
      %3756 = vmatprep.subr.mxu0 0.0
      %3757 = vmatpush1.msra.mxu0 %v3704
      %3758 = vmatprep.subr.mxu0 0.0
      %3759 = vmatpush1.msra.mxu0 0.0
      %3760 = vmatprep.subr.mxu0 0.0
      %3761 = vmatpush1.msra.mxu0 0.0
      %3762 = vmatprep.subr.mxu0 0.0
      %3763 = vmatpush1.msra.mxu0 0.0
      %3764 = vmatprep.subr.mxu0 0.0
      %3765 = vmatpush1.msra.mxu0 0.0
      %3766 = vmatprep.subr.mxu0 0.0
      %3767 = vmatpush1.msra.mxu0 0.0
      %3768 = vmatprep.subr.mxu0 0.0
      %3769 = vmatpush1.msra.mxu0 0.0
      %3770 = vmatprep.subr.mxu0 0.0
      %3771 = vmatpush1.msra.mxu0 0.0
      %3772 = vmatprep.subr.mxu0 0.0
      %3773 = vmatpush1.msra.mxu0 0.0
      %3774 = vmatprep.subr.mxu0 0.0
      %3775 = vmatpush1.msra.mxu0 0.0
      %3776 = vmatprep.subr.mxu0 0.0
      %3777 = vmatpush1.msra.mxu0 0.0
      %3778 = vmatprep.subr.mxu0 0.0
      %3779 = vmatpush1.msra.mxu0 0.0
      %3780 = vmatprep.subr.mxu0 0.0
      %3781 = vmatpush1.msra.mxu0 0.0
      %3782 = vmatprep.subr.mxu0 0.0
      %3783 = vmatpush1.msra.mxu0 0.0
      %3784 = vmatprep.subr.mxu0 0.0
      %3785 = vmatpush1.msra.mxu0 0.0
      %3786 = vmatprep.subr.mxu0 0.0
      %3787 = vmatpush1.msra.mxu0 0.0
      %3788 = vmatprep.subr.mxu0 0.0
      %3789 = vmatpush1.msra.mxu0 0.0
      %3790 = vmatprep.subr.mxu0 0.0
      %3791 = vmatpush1.msra.mxu0 0.0
      %3792 = vmatprep.subr.mxu0 0.0
      %3793 = vmatpush1.msra.mxu0 0.0
      %3794 = vmatprep.subr.mxu0 0.0
      %3795 = vmatpush1.msra.mxu0 0.0
      %3796 = vmatprep.subr.mxu0 0.0
      %3797 = vmatpush1.msra.mxu0 0.0
      %3798 = vmatprep.subr.mxu0 0.0
      %3799 = vmatpush1.msra.mxu0 0.0
      %3800 = vmatprep.subr.mxu0 0.0
      %3801 = vmatpush1.msra.mxu0 0.0
      %3802 = vmatprep.subr.mxu0 0.0
      %3803 = vmatpush1.msra.mxu0 0.0
      %3804 = vmatprep.subr.mxu0 0.0
      %3805 = vmatpush1.msra.mxu0 0.0
      %3806 = vmatprep.subr.mxu0 0.0
      %3807 = vmatpush1.msra.mxu0 0.0
      %3808 = vmatprep.subr.mxu0 0.0
      %3809 = vmatpush1.msra.mxu0 0.0
      %3810 = vmatprep.mubr.f32.mxu0 0.0
      %3811 = vmatmul.mubr.f32.gmra.mrb[0].mxu0 %v3730
      %v3812 = vpop.f32.mrb[0].mxu0
      %v3813 = vadd.f32 0.0, %v3812
      %v3814 = vpop.f32.mrb[0].mxu0
      %3815 = vmatprep.mubr.f32.mxu0 0.0
      %3816 = vmatmul.mubr.f32.gmra.mrb[0].mxu0 %v3732
      %v3817 = vpop.f32.mrb[0].mxu0
      %v3818 = vadd.f32 0.0, %v3817
      %v3819 = vpop.f32.mrb[0].mxu0
      %3820 = vmatprep.mubr.f32.mxu0 0.0
      %3821 = vmatmul.mubr.f32.gmra.mrb[0].mxu0 %v3734
      %v3822 = vpop.f32.mrb[0].mxu0
      %v3823 = vadd.f32 0.0, %v3822
      %v3824 = vpop.f32.mrb[0].mxu0
      %3825 = vmatprep.mubr.f32.mxu0 0.0
      %3826 = vmatmul.mubr.f32.gmra.mrb[0].mxu0 %v3736
      %v3827 = vpop.f32.mrb[0].mxu0
      %v3828 = vadd.f32 0.0, %v3827
      %v3829 = vpop.f32.mrb[0].mxu0
      %3830 = vmatprep.mubr.f32.mxu0 0.0
      %3831 = vmatmul.mubr.f32.gmra.mrb[0].mxu0 %v3738
      %v3832 = vpop.f32.mrb[0].mxu0
      %v3833 = vadd.f32 0.0, %v3832
      %v3834 = vpop.f32.mrb[0].mxu0
      %3835 = vmatprep.mubr.f32.mxu0 0.0
      %3836 = vmatmul.mubr.f32.gmra.mrb[0].mxu0 %v3740
      %v3837 = vpop.f32.mrb[0].mxu0
      %v3838 = vadd.f32 0.0, %v3837
      %v3839 = vpop.f32.mrb[0].mxu0
      %3840 = vmatprep.mubr.f32.mxu0 0.0
      %3841 = vmatmul.mubr.f32.gmra.mrb[0].mxu0 %v3742
      %v3842 = vpop.f32.mrb[0].mxu0
      %v3843 = vadd.f32 0.0, %v3842
      %v3844 = vpop.f32.mrb[0].mxu0
      %3845 = vmatprep.mubr.f32.mxu0 0.0
      %3846 = vmatmul.mubr.f32.gmra.mrb[0].mxu0 %v3744
      %v3847 = vpop.f32.mrb[0].mxu0
      %v3848 = vadd.f32 0.0, %v3847
      %v3849 = vpop.f32.mrb[0].mxu0
      %3850 = vdwg.mxu0
      %3851 = vmatprep.subr.mxu0 0.0
      %3852 = vmatpush1.msra.mxu0 %v3695
      %3853 = vmatprep.subr.mxu0 0.0
      %3854 = vmatpush1.msra.mxu0 %v3696
      %3855 = vmatprep.subr.mxu0 0.0
      %3856 = vmatpush1.msra.mxu0 %v3697
      %3857 = vmatprep.subr.mxu0 0.0
      %3858 = vmatpush1.msra.mxu0 %v3698
      %3859 = vmatprep.subr.mxu0 0.0
      %3860 = vmatpush1.msra.mxu0 0.0
      %3861 = vmatprep.subr.mxu0 0.0
      %3862 = vmatpush1.msra.mxu0 0.0
      %3863 = vmatprep.subr.mxu0 0.0
      %3864 = vmatpush1.msra.mxu0 0.0
      %3865 = vmatprep.subr.mxu0 0.0
      %3866 = vmatpush1.msra.mxu0 0.0
      %3867 = vmatprep.subr.mxu0 0.0
      %3868 = vmatpush1.msra.mxu0 0.0
      %3869 = vmatprep.subr.mxu0 0.0
      %3870 = vmatpush1.msra.mxu0 0.0
      %3871 = vmatprep.subr.mxu0 0.0
      %3872 = vmatpush1.msra.mxu0 0.0
      %3873 = vmatprep.subr.mxu0 0.0
      %3874 = vmatpush1.msra.mxu0 0.0
      %3875 = vmatprep.subr.mxu0 0.0
      %3876 = vmatpush1.msra.mxu0 0.0
      %3877 = vmatprep.subr.mxu0 0.0
      %3878 = vmatpush1.msra.mxu0 0.0
      %3879 = vmatprep.subr.mxu0 0.0
      %3880 = vmatpush1.msra.mxu0 0.0
      %3881 = vmatprep.subr.mxu0 0.0
      %3882 = vmatpush1.msra.mxu0 0.0
      %3883 = vmatprep.subr.mxu0 0.0
      %3884 = vmatpush1.msra.mxu0 0.0
      %3885 = vmatprep.subr.mxu0 0.0
      %3886 = vmatpush1.msra.mxu0 0.0
      %3887 = vmatprep.subr.mxu0 0.0
      %3888 = vmatpush1.msra.mxu0 0.0
      %3889 = vmatprep.subr.mxu0 0.0
      %3890 = vmatpush1.msra.mxu0 0.0
      %3891 = vmatprep.subr.mxu0 0.0
      %3892 = vmatpush1.msra.mxu0 0.0
      %3893 = vmatprep.subr.mxu0 0.0
      %3894 = vmatpush1.msra.mxu0 0.0
      %3895 = vmatprep.subr.mxu0 0.0
      %3896 = vmatpush1.msra.mxu0 0.0
      %3897 = vmatprep.subr.mxu0 0.0
      %3898 = vmatpush1.msra.mxu0 0.0
      %3899 = vmatprep.subr.mxu0 0.0
      %3900 = vmatpush1.msra.mxu0 0.0
      %3901 = vmatprep.subr.mxu0 0.0
      %3902 = vmatpush1.msra.mxu0 0.0
      %3903 = vmatprep.subr.mxu0 0.0
      %3904 = vmatpush1.msra.mxu0 0.0
      %3905 = vmatprep.subr.mxu0 0.0
      %3906 = vmatpush1.msra.mxu0 0.0
      %3907 = vmatprep.subr.mxu0 0.0
      %3908 = vmatpush1.msra.mxu0 0.0
      %3909 = vmatprep.subr.mxu0 0.0
      %3910 = vmatpush1.msra.mxu0 0.0
      %3911 = vmatprep.subr.mxu0 0.0
      %3912 = vmatpush1.msra.mxu0 0.0
      %3913 = vmatprep.subr.mxu0 0.0
      %3914 = vmatpush1.msra.mxu0 0.0
      %3915 = vmatprep.mubr.f32.mxu0 0.0
      %3916 = vmatmul.mubr.f32.gmra.mrb[0].mxu0 %v3391
      %v3917 = vpop.f32.mrb[0].mxu0
      %v3918 = vadd.f32 %v3813, %v3917
      %v3919 = vpop.f32.mrb[0].mxu0
      %3920 = vmatprep.mubr.f32.mxu0 0.0
      %3921 = vmatmul.mubr.f32.gmra.mrb[0].mxu0 %v3393
      %v3922 = vpop.f32.mrb[0].mxu0
      %v3923 = vadd.f32 %v3818, %v3922
      %v3924 = vpop.f32.mrb[0].mxu0
      %3925 = vmatprep.mubr.f32.mxu0 0.0
      %3926 = vmatmul.mubr.f32.gmra.mrb[0].mxu0 %v3395
      %v3927 = vpop.f32.mrb[0].mxu0
      %v3928 = vadd.f32 %v3823, %v3927
      %v3929 = vpop.f32.mrb[0].mxu0
      %3930 = vmatprep.mubr.f32.mxu0 0.0
      %3931 = vmatmul.mubr.f32.gmra.mrb[0].mxu0 %v3397
      %v3932 = vpop.f32.mrb[0].mxu0
      %v3933 = vadd.f32 %v3828, %v3932
      %v3934 = vpop.f32.mrb[0].mxu0
      %3935 = vmatprep.mubr.f32.mxu0 0.0
      %3936 = vmatmul.mubr.f32.gmra.mrb[0].mxu0 %v3399
      %v3937 = vpop.f32.mrb[0].mxu0
      %v3938 = vadd.f32 %v3833, %v3937
      %v3939 = vpop.f32.mrb[0].mxu0
      %3940 = vmatprep.mubr.f32.mxu0 0.0
      %3941 = vmatmul.mubr.f32.gmra.mrb[0].mxu0 %v3401
      %v3942 = vpop.f32.mrb[0].mxu0
      %v3943 = vadd.f32 %v3838, %v3942
      %v3944 = vpop.f32.mrb[0].mxu0
      %3945 = vmatprep.mubr.f32.mxu0 0.0
      %3946 = vmatmul.mubr.f32.gmra.mrb[0].mxu0 %v3403
      %v3947 = vpop.f32.mrb[0].mxu0
      %v3948 = vadd.f32 %v3843, %v3947
      %v3949 = vpop.f32.mrb[0].mxu0
      %3950 = vmatprep.mubr.f32.mxu0 0.0
      %3951 = vmatmul.mubr.f32.gmra.mrb[0].mxu0 %v3405
      %v3952 = vpop.f32.mrb[0].mxu0
      %v3953 = vadd.f32 %v3848, %v3952
      %v3954 = vpop.f32.mrb[0].mxu0
      %3955 = vdwg.mxu0
      %v3956 = vld [vmem:[%s65] sm:$0x1]
      %v3958 = vlaneseq
      %v3959 = vshrl.u32 %v3958, 7
      %v3960 = vsub.s32 0, %v3959
      %v3961 = vrot.slane %v3956, %v3960
      %v3963 = vadd.f32 %v3918, %v3961
      %v3964 = vadd.f32 %v3923, %v3961
      %v3965 = vadd.f32 %v3928, %v3961
      %v3966 = vadd.f32 %v3933, %v3961
      %v3967 = vadd.f32 %v3938, %v3961
      %v3968 = vadd.f32 %v3943, %v3961
      %v3969 = vadd.f32 %v3948, %v3961
      %v3970 = vadd.f32 %v3953, %v3961
      %v3971 = vmax.f32 %v3963, 0.0
      %v3972 = vmax.f32 %v3964, 0.0
      %v3973 = vmax.f32 %v3965, 0.0
      %v3974 = vmax.f32 %v3966, 0.0
      %v3975 = vmax.f32 %v3967, 0.0
      %v3976 = vmax.f32 %v3968, 0.0
      %v3977 = vmax.f32 %v3969, 0.0
      %v3978 = vmax.f32 %v3970, 0.0
      %3987 = vrot.lane.b32.xlu0 %v3256, 56
      %v3988 = vpop.permute.xlu0 %3987
      %3989 = vrot.lane.b32.xlu0 %v3257, 56
      %v3990 = vpop.permute.xlu0 %3989
      %3991 = vrot.lane.b32.xlu0 %v3258, 56
      %v3992 = vpop.permute.xlu0 %3991
      %3993 = vrot.lane.b32.xlu0 %v3259, 56
      %v3994 = vpop.permute.xlu0 %3993
      %3995 = vrot.lane.b32.xlu0 %v3260, 56
      %v3996 = vpop.permute.xlu0 %3995
      %3997 = vrot.lane.b32.xlu0 %v3261, 56
      %v3998 = vpop.permute.xlu0 %3997
      %3999 = vrot.lane.b32.xlu0 %v3262, 56
      %v4000 = vpop.permute.xlu0 %3999
      %4001 = vrot.lane.b32.xlu0 %v3263, 56
      %v4002 = vpop.permute.xlu0 %4001
      %4019 = vrot.lane.b32.xlu0 %v1676, 80
      %v4020 = vpop.permute.xlu0 %4019
      %4021 = vrot.lane.b32.xlu0 %v1677, 80
      %v4022 = vpop.permute.xlu0 %4021
      %4023 = vrot.lane.b32.xlu0 %v1678, 80
      %v4024 = vpop.permute.xlu0 %4023
      %4025 = vrot.lane.b32.xlu0 %v1679, 80
      %v4026 = vpop.permute.xlu0 %4025
      %4027 = vrot.lane.b32.xlu0 %v1680, 80
      %v4028 = vpop.permute.xlu0 %4027
      %4029 = vrot.lane.b32.xlu0 %v1681, 80
      %v4030 = vpop.permute.xlu0 %4029
      %4031 = vrot.lane.b32.xlu0 %v1682, 80
      %v4032 = vpop.permute.xlu0 %4031
      %4033 = vrot.lane.b32.xlu0 %v1683, 80
      %v4034 = vpop.permute.xlu0 %4033
      %4043 = vrot.lane.b32.xlu0 %v2094, 96
      %v4044 = vpop.permute.xlu0 %4043
      %4045 = vrot.lane.b32.xlu0 %v2095, 96
      %v4046 = vpop.permute.xlu0 %4045
      %4047 = vrot.lane.b32.xlu0 %v2096, 96
      %v4048 = vpop.permute.xlu0 %4047
      %4049 = vrot.lane.b32.xlu0 %v2097, 96
      %v4050 = vpop.permute.xlu0 %4049
      %4051 = vrot.lane.b32.xlu0 %v2098, 96
      %v4052 = vpop.permute.xlu0 %4051
      %4053 = vrot.lane.b32.xlu0 %v2099, 96
      %v4054 = vpop.permute.xlu0 %4053
      %4055 = vrot.lane.b32.xlu0 %v2100, 96
      %v4056 = vpop.permute.xlu0 %4055
      %4057 = vrot.lane.b32.xlu0 %v2101, 96
      %v4058 = vpop.permute.xlu0 %4057
      %4075 = vrot.lane.b32.xlu0 %v3679, 120
      %v4076 = vpop.permute.xlu0 %4075
      %4077 = vrot.lane.b32.xlu0 %v3680, 120
      %v4078 = vpop.permute.xlu0 %4077
      %4079 = vrot.lane.b32.xlu0 %v3681, 120
      %v4080 = vpop.permute.xlu0 %4079
      %4081 = vrot.lane.b32.xlu0 %v3682, 120
      %v4082 = vpop.permute.xlu0 %4081
      %4083 = vrot.lane.b32.xlu0 %v3683, 120
      %v4084 = vpop.permute.xlu0 %4083
      %4085 = vrot.lane.b32.xlu0 %v3684, 120
      %v4086 = vpop.permute.xlu0 %4085
      %4087 = vrot.lane.b32.xlu0 %v3685, 120
      %v4088 = vpop.permute.xlu0 %4087
      %4089 = vrot.lane.b32.xlu0 %v3686, 120
      %v4090 = vpop.permute.xlu0 %4089
      %v4099 = vsel %vm3549, %v3971, %v3988
      %v4100 = vsel %vm3549, %v3972, %v3990
      %v4101 = vsel %vm3549, %v3973, %v3992
      %v4102 = vsel %vm3549, %v3974, %v3994
      %v4103 = vsel %vm3549, %v3975, %v3996
      %v4104 = vsel %vm3549, %v3976, %v3998
      %v4105 = vsel %vm3549, %v3977, %v4000
      %v4106 = vsel %vm3549, %v3978, %v4002
      %vm4107 = vcmask 654336
      %v4108 = vsel %vm4107, %v4099, %v4020
      %v4109 = vsel %vm4107, %v4100, %v4022
      %v4110 = vsel %vm4107, %v4101, %v4024
      %v4111 = vsel %vm4107, %v4102, %v4026
      %v4112 = vsel %vm4107, %v4103, %v4028
      %v4113 = vsel %vm4107, %v4104, %v4030
      %v4114 = vsel %vm4107, %v4105, %v4032
      %v4115 = vsel %vm4107, %v4106, %v4034
      %vm4116 = vcmask 785408
      %v4117 = vsel %vm4116, %v4108, %v4044
      %v4118 = vsel %vm4116, %v4109, %v4046
      %v4119 = vsel %vm4116, %v4110, %v4048
      %v4120 = vsel %vm4116, %v4111, %v4050
      %v4121 = vsel %vm4116, %v4112, %v4052
      %v4122 = vsel %vm4116, %v4113, %v4054
      %v4123 = vsel %vm4116, %v4114, %v4056
      %v4124 = vsel %vm4116, %v4115, %v4058
      %vm4125 = vcmask 982016
      %v4126 = vsel %vm4125, %v4117, %v4076
      %v4127 = vsel %vm4125, %v4118, %v4078
      %v4128 = vsel %vm4125, %v4119, %v4080
      %v4129 = vsel %vm4125, %v4120, %v4082
      %v4130 = vsel %vm4125, %v4121, %v4084
      %v4131 = vsel %vm4125, %v4122, %v4086
      %v4132 = vsel %vm4125, %v4123, %v4088
      %v4133 = vsel %vm4125, %v4124, %v4090
      %4134 = vst [vmem:[%s1021] sm:$0xff] %v4126
      %4135 = vst.msk [vmem:[%s1021 + $0x8] sm:$0xff] %vm3729, %v4076
      %4136 = vst [vmem:[%s1021 + $0x10] sm:$0xff] %v4127
      %4137 = vst.msk [vmem:[%s1021 + $0x18] sm:$0xff] %vm3729, %v4078
      %4138 = vst [vmem:[%s1021 + $0x20] sm:$0xff] %v4128
      %4139 = vst.msk [vmem:[%s1021 + $0x28] sm:$0xff] %vm3729, %v4080
      %4140 = vst [vmem:[%s1021 + $0x30] sm:$0xff] %v4129
      %4141 = vst.msk [vmem:[%s1021 + $0x38] sm:$0xff] %vm3729, %v4082
      %4142 = vst [vmem:[%s1021 + $0x40] sm:$0xff] %v4130
      %4143 = vst.msk [vmem:[%s1021 + $0x48] sm:$0xff] %vm3729, %v4084
      %4144 = vst [vmem:[%s1021 + $0x50] sm:$0xff] %v4131
      %4145 = vst.msk [vmem:[%s1021 + $0x58] sm:$0xff] %vm3729, %v4086
      %4146 = vst [vmem:[%s1021 + $0x60] sm:$0xff] %v4132
      %4147 = vst.msk [vmem:[%s1021 + $0x68] sm:$0xff] %vm3729, %v4088
      %4148 = vst [vmem:[%s1021 + $0x70] sm:$0xff] %v4133
      %4149 = vst.msk [vmem:[%s1021 + $0x78] sm:$0xff] %vm3729, %v4090
      %s4150 = smul.u32 8, %s78
      %p4151 = scmp.lt.s32.totalorder %s4150, 15
      %s4152 = scalar_select %p4151, %s4150, 15
      %s4153 = smul.addr %s4152, 2
      %s4154 = smul.addr %s4153, 8
      %s4155 = scalar_lea.vmem %s67, %s4154
      // Predicated region
      $region153: #{gnn_forward_packed.1} parent=151 // pred_check
        %p4156 = pneg %p794
      $region154: #{gnn_forward_packed.1} parent=151 // pred_check_branch
        %4158 = sbr.rel (%p4156) target = $region156
      $region155: #{gnn_forward_packed.1} parent=151 // pred_region
        %s4159 = smul.u32 8, %s78
      $region156: #{gnn_forward_packed.1} parent=151 // pred_fallthru
        _
    $region152: #{gnn_forward_packed.1} parent=5 // pred_fallthru
      _
    %p4160 = scmp.le.s32.totalorder 2, %s73
    // Predicated region
    $region157: #{gnn_forward_packed.1} parent=5 // pred_check
      %p4161 = pneg %p4160
    $region158: #{gnn_forward_packed.1} parent=5 // pred_check_branch
      %4163 = sbr.rel (%p4161) target = $region160
    $region159: #{gnn_forward_packed.1} parent=5 // pred_region
      %s4164 = ssub.s32 %s73, 2
      // Predicated region
      $region161: #{gnn_forward_packed.1} parent=159 // pred_check
        %p4165 = pneg %p800
      $region162: #{gnn_forward_packed.1} parent=159 // pred_check_branch
        %4167 = sbr.rel (%p4165) target = $region164
      $region163: #{gnn_forward_packed.1} parent=159 // pred_region
        %s4168 = smul.u32 8, %s79
        %p4169 = scmp.lt.s32.totalorder %s4168, 15
        %s4170 = scalar_select %p4169, %s4168, 15
        %s4171 = smul.addr %s4170, 2
        %s4172 = smul.addr %s4171, 8
        %s4173 = scalar_lea.vmem %s67, %s4172
      $region164: #{gnn_forward_packed.1} parent=159 // pred_fallthru
        _
    $region160: #{gnn_forward_packed.1} parent=5 // pred_fallthru
      _
  $region6: #{gnn_forward_packed.1} parent=0 // loop_footer
    %s77 = sadd.s32 1, %s73
  $region7: #{gnn_forward_packed.1} parent=0 // loop_footer_branch
    %72 = sbr.rel target = $region3
  $region8: #{gnn_forward_packed.1} parent=0 // loop_exit
    _

</llo_original>
